<compile_context>
chip_gen: v6e
topology: v6e:2x2x1
jax: 0.10.0
libtpu: 0.0.40
codegen_flags: <defaults>
</compile_context>

<pallas_src>
import jax
import jax.numpy as jnp
from jax.experimental import pallas as pl
from jax.experimental.pallas import tpu as pltpu

KSIZE = 7
PAD = 3


def _pick_c_tile(C, HW, itemsize):
    """Channel tile: divides C, multiple of 8 (or all of C), ~<=2 MiB per x tile."""
    budget_rows = max(8, (2 * 1024 * 1024) // max(1, HW * itemsize))
    if C <= budget_rows:
        return C  # whole channel axis in one tile
    start = max(8, min(256, (budget_rows // 8) * 8))
    for tc in range(start, 7, -8):
        if C % tc == 0:
            return tc
    # TODO(synk): odd C with no multiple-of-8 divisor falls back to an untiled
    # channel axis; add in-kernel row masking if such shapes ever matter.
    return C


def _pick_batch_tile(N, TC, HW, itemsize):
    """Fold batch elements into one gate block so each grid step moves ~1-2 MiB."""
    block_bytes = max(1, TC * HW * itemsize)
    nb = max(1, min(N, (2 * 1024 * 1024) // block_bytes))
    while N % nb:
        nb -= 1
    return nb


def _make_reduce_kernel(C, H, W, TC):
    HW = H * W
    CH = TC if TC < 8 else 8           # sublane-sized channel chunks
    NFULL = TC // CH
    REM = TC - NFULL * CH
    Hp = H + 2 * PAD
    Wp = W + 2 * PAD

    def kernel(w_ref, b_ref, x_ref, m_ref, mx_ref, sm_ref, pad_ref):
        # w_ref : (98,) f32 SMEM   w[c, ky, kx] = w_ref[c*49 + ky*7 + kx]
        # b_ref : (1,)  f32 SMEM
        # x_ref : (TC, HW) current channel tile of one batch element
        # m_ref : (1, HW)  f32 mask output (resident across the C-tile axis)
        # mx_ref/sm_ref : (1, HW) f32 running max / sum scratch
        # pad_ref : (2, H+6, W+6) f32 zero-padded pooled maps (conv input)
        ct = pl.program_id(1)

        @pl.when(ct == 0)
        def _init():
            mx_ref[...] = jnp.full(mx_ref.shape, -jnp.inf, jnp.float32)
            sm_ref[...] = jnp.zeros(sm_ref.shape, jnp.float32)

        # ---- fused max+sum channel reduction: one load per 8-row chunk ------
        def accum(start, rows):
            chunk = x_ref[pl.ds(start, rows), :].astype(jnp.float32)   # (rows, HW)
            mx_ref[...] = jnp.maximum(mx_ref[...],
                                      jnp.max(chunk, axis=0, keepdims=True))
            sm_ref[...] = sm_ref[...] + jnp.sum(chunk, axis=0, keepdims=True)

        @pl.loop(0, NFULL)
        def _(i):
            accum(pl.multiple_of(i * CH, CH), CH)

        if REM:                       # static tail chunk (TC not multiple of 8)
            accum(NFULL * CH, REM)

        # ---- last C-tile: conv + sigmoid -> spatial mask --------------------
        @pl.when(ct == pl.num_programs(1) - 1)
        def _finalize():
            inv_c = jnp.float32(1.0 / C)

            # Zero only the 3-wide halo; the interior is fully overwritten by
            # the scatter below (cheaper than zeroing the whole scratch).
            zrows = jnp.zeros((2, PAD, Wp), jnp.float32)
            pad_ref[:, 0:PAD, :] = zrows
            pad_ref[:, PAD + H:Hp, :] = zrows
            zcols = jnp.zeros((2, Hp, PAD), jnp.float32)
            pad_ref[:, :, 0:PAD] = zcols
            pad_ref[:, :, PAD + W:Wp] = zcols

            # Scatter pooled maps (max, mean) into the padded conv input.
            # TODO(synk): for H >= 112 switch to a lane-padded (H, 128k) layout
            # so these row writes become unmasked full-lane stores.
            for h in range(H):
                pad_ref[0, PAD + h:PAD + h + 1, PAD:PAD + W] = \
                    mx_ref[0:1, h * W:(h + 1) * W]
                pad_ref[1, PAD + h:PAD + h + 1, PAD:PAD + W] = \
                    sm_ref[0:1, h * W:(h + 1) * W] * inv_c

            # 7x7 conv, 2 in-ch -> 1 out-ch, 'same' padding=3.
            # 14 band loads (one per (c, ky)); kx taps are in-register lane
            # slices.  Only 2 live accumulators (one per input channel) — the
            # conv is off the critical path and VALU-throughput bound, so more
            # accumulators would only add vreg pressure.
            acc = None
            for c in range(2):
                acc_c = None
                for ky in range(KSIZE):
                    band = pad_ref[c, ky:ky + H, :]            # (H, W + 2*PAD)
                    for kx in range(KSIZE):
                        wv = w_ref[c * KSIZE * KSIZE + ky * KSIZE + kx]
                        term = wv * band[:, kx:kx + W]
                        acc_c = term if acc_c is None else acc_c + term
                acc = acc_c if acc is None else acc + acc_c
            ms2d = jax.nn.sigmoid(acc + b_ref[0])              # (H, W)

            for h in range(H):
                m_ref[0:1, h * W:(h + 1) * W] = ms2d[h:h + 1, :]

    return kernel


def _gate_kernel(m_ref, x_ref, o_ref):
    # m_ref : (NB, 1, HW) f32 mask block; x_ref/o_ref : (NB, TC, HW) native dtype.
    # Cast the mask once and multiply at the input's native dtype (no f32 upcast
    # of x).  Single broadcast per grid step (no per-chunk loop).
    m = m_ref[...].astype(o_ref.dtype)
    o_ref[...] = x_ref[...] * m


def spatial_attention(x, conv_w, conv_b):
    """x: (N, C, H, W); conv_w: (1, 2, 7, 7); conv_b: (1,)."""
    N, C, H, W = x.shape
    HW = H * W
    itemsize = jnp.dtype(x.dtype).itemsize

    x_flat = x.reshape(N, C, HW)                       # lane-dense last dim
    w_flat = conv_w.reshape(-1).astype(jnp.float32)    # (98,)
    b = conv_b.reshape(-1).astype(jnp.float32)         # (1,)

    TC = _pick_c_tile(C, HW, itemsize)
    assert C % TC == 0
    CT = C // TC

    # ---- phase 0: channel reduction + 7x7 conv + sigmoid -> mask (N, 1, HW) --
    mask = pl.pallas_call(
        _make_reduce_kernel(C, H, W, TC),
        out_shape=jax.ShapeDtypeStruct((N, 1, HW), jnp.float32),
        grid_spec=pltpu.PrefetchScalarGridSpec(
            num_scalar_prefetch=0,
            grid=(N, CT),
            in_specs=[
                pl.BlockSpec(memory_space=pltpu.SMEM),                  # conv weights
                pl.BlockSpec(memory_space=pltpu.SMEM),                  # conv bias
                pl.BlockSpec((None, TC, HW), lambda n, ct: (n, ct, 0)),  # x C-tile
            ],
            out_specs=pl.BlockSpec((None, 1, HW), lambda n, ct: (n, 0, 0)),
            scratch_shapes=[
                pltpu.VMEM((1, HW), jnp.float32),                        # running max
                pltpu.VMEM((1, HW), jnp.float32),                        # running sum
                pltpu.VMEM((2, H + 2 * PAD, W + 2 * PAD), jnp.float32),  # padded pooled maps
            ],
        ),
        compiler_params=pltpu.CompilerParams(
            dimension_semantics=("parallel", "arbitrary"),
        ),
    )(w_flat, b, x_flat)

    # ---- phase 1: gate every channel tile against the resident mask ---------
    NB = _pick_batch_tile(N, TC, HW, itemsize)
    out_flat = pl.pallas_call(
        _gate_kernel,
        out_shape=jax.ShapeDtypeStruct((N, C, HW), x.dtype),
        grid_spec=pltpu.PrefetchScalarGridSpec(
            num_scalar_prefetch=0,
            grid=(N // NB, CT),
            in_specs=[
                pl.BlockSpec((NB, 1, HW), lambda nb, ct: (nb, 0, 0)),    # mask
                pl.BlockSpec((NB, TC, HW), lambda nb, ct: (nb, ct, 0)),  # x
            ],
            out_specs=pl.BlockSpec((NB, TC, HW), lambda nb, ct: (nb, ct, 0)),
        ),
        compiler_params=pltpu.CompilerParams(
            dimension_semantics=("parallel", "parallel"),   # both TCs busy on v7x
        ),
    )(mask, x_flat)

    # TODO(synk): for shapes where the whole (C, HW) slab fits in a few MiB, a
    # single fused kernel (read-once/write-once) saves the extra x read of this
    # two-phase split; likewise an HW-row-tiled variant with a 3-row pooled-map
    # halo would keep 2-pass traffic at very large C.
    return out_flat.reshape(N, C, H, W)


def reference(x, conv_w, conv_b):
    """Pure-JAX reference mirroring the PyTorch forward."""
    max_pool = jnp.max(x, axis=1, keepdims=True)
    avg_pool = jnp.mean(x, axis=1, keepdims=True)
    x_cat = jnp.concatenate([max_pool, avg_pool], axis=1)        # (N, 2, H, W)
    conv = jax.lax.conv_general_dilated(
        x_cat, conv_w, window_strides=(1, 1),
        padding=[(PAD, PAD), (PAD, PAD)],
        dimension_numbers=("NCHW", "OIHW", "NCHW"),
    ) + conv_b.reshape(1, 1, 1, 1)
    ms = jax.nn.sigmoid(conv)
    return ms * x


if __name__ == "__main__":
    key = jax.random.PRNGKey(0)
    kx_, kw_, kb_ = jax.random.split(key, 3)

    N, C, H, W = 2, 4, 16, 16
    x = jax.random.normal(kx_, (N, C, H, W), dtype=jnp.float32)

    # Deterministic synthetic parameters (nn.Conv2d(2, 1, 7, padding=3) shapes).
    conv_w = jax.random.normal(kw_, (1, 2, KSIZE, KSIZE), dtype=jnp.float32) * 0.1
    conv_b = jax.random.normal(kb_, (1,), dtype=jnp.float32) * 0.1

    out = jax.block_until_ready(spatial_attention(x, conv_w, conv_b))
    ref = jax.block_until_ready(reference(x, conv_w, conv_b))

    assert out.shape == (N, C, H, W) and out.dtype == jnp.float32
    assert jnp.allclose(out, ref, rtol=1e-4, atol=1e-5), \
        f"max abs err {jnp.max(jnp.abs(out - ref))}"
    print("KERNEL_OK")
</pallas_src>

<mosaic_0001>
module attributes {stable_mosaic.version = 11 : i64} {
  func.func @kernel(%arg0: i32, %arg1: i32, %arg2: memref<98xf32, #tpu.memory_space<smem>>, %arg3: memref<1xf32, #tpu.memory_space<smem>>, %arg4: memref<1x4x256xf32, #tpu.memory_space<vmem>>, %arg5: memref<1x1x256xf32, #tpu.memory_space<vmem>>, %arg6: memref<1x256xf32, #tpu.memory_space<vmem>>, %arg7: memref<1x256xf32, #tpu.memory_space<vmem>>, %arg8: memref<2x22x22xf32, #tpu.memory_space<vmem>>) attributes {dimension_semantics = [#tpu.dimension_semantics<parallel>, #tpu.dimension_semantics<arbitrary>], iteration_bounds = array<i64: 2, 1>, scalar_prefetch = 0 : i64, scratch_operands = 3 : i64, tpu.core_type = #tpu.core_type<tc>, window_params = [{transform_indices = @transform_0, window_bounds = array<i64: 98>}, {transform_indices = @transform_1, window_bounds = array<i64: 1>}, {transform_indices = @transform_2, window_bounds = array<i64: 1, 4, 256>}, {transform_indices = @transform_3, window_bounds = array<i64: 1, 1, 256>}]} {
    %c0_i32 = arith.constant 0 : i32
    %0 = arith.cmpi eq, %arg1, %c0_i32 : i32
    %1 = arith.extui %0 : i1 to i32
    %c0_i32_0 = arith.constant 0 : i32
    %2 = arith.cmpi ne, %1, %c0_i32_0 : i32
    scf.if %2 {
      %cst_16 = arith.constant 0xFF800000 : f32
      %23 = vector.broadcast %cst_16 : f32 to vector<1x256xf32>
      %c0_17 = arith.constant 0 : index
      %c0_18 = arith.constant 0 : index
      %24 = vector.load %arg6[%c0_17, %c0_18] : memref<1x256xf32, #tpu.memory_space<vmem>>, vector<1x256xf32>
      tpu.vector_store %arg6[%c0_17, %c0_18], %23 {strides = array<i32>} : memref<1x256xf32, #tpu.memory_space<vmem>>, vector<1x256xf32>,
      %cst_19 = arith.constant 0.000000e+00 : f32
      %25 = vector.broadcast %cst_19 : f32 to vector<1x256xf32>
      %c0_20 = arith.constant 0 : index
      %c0_21 = arith.constant 0 : index
      %26 = vector.load %arg7[%c0_20, %c0_21] : memref<1x256xf32, #tpu.memory_space<vmem>>, vector<1x256xf32>
      tpu.vector_store %arg7[%c0_20, %c0_21], %25 {strides = array<i32>} : memref<1x256xf32, #tpu.memory_space<vmem>>, vector<1x256xf32>,
    } else {
    }
    %c0_i32_1 = arith.constant 0 : i32
    %c1_i32 = arith.constant 1 : i32
    %3 = arith.muli %c0_i32_1, %c1_i32 : i32
    %c0_i32_2 = arith.constant 0 : i32
    %4 = arith.addi %c0_i32_2, %3 : i32
    %c4_i32 = arith.constant 4 : i32
    %5 = arith.muli %4, %c4_i32 : i32
    %6 = tpu.assume_multiple %5, 4 : i32
    %c0 = arith.constant 0 : index
    %7 = arith.index_cast %6 : i32 to index
    %c0_3 = arith.constant 0 : index
    %8 = vector.load %arg4[%c0, %7, %c0_3] : memref<1x4x256xf32, #tpu.memory_space<vmem>>, vector<1x4x256xf32>
    %9 = vector.shape_cast %8 : vector<1x4x256xf32> to vector<4x256xf32>
    %c0_4 = arith.constant 0 : index
    %c0_5 = arith.constant 0 : index
    %10 = vector.load %arg6[%c0_4, %c0_5] : memref<1x256xf32, #tpu.memory_space<vmem>>, vector<1x256xf32>
    %cst = arith.constant dense<0xFF800000> : vector<256xf32>
    %11 = vector.multi_reduction <maximumf>, %9, %cst [0] : vector<4x256xf32> to vector<256xf32>
    %12 = vector.shape_cast %11 : vector<256xf32> to vector<1x256xf32>
    %13 = arith.maximumf %10, %12 : vector<1x256xf32>
    %c0_6 = arith.constant 0 : index
    %c0_7 = arith.constant 0 : index
    %14 = vector.load %arg6[%c0_6, %c0_7] : memref<1x256xf32, #tpu.memory_space<vmem>>, vector<1x256xf32>
    tpu.vector_store %arg6[%c0_6, %c0_7], %13 {strides = array<i32>} : memref<1x256xf32, #tpu.memory_space<vmem>>, vector<1x256xf32>,
    %c0_8 = arith.constant 0 : index
    %c0_9 = arith.constant 0 : index
    %15 = vector.load %arg7[%c0_8, %c0_9] : memref<1x256xf32, #tpu.memory_space<vmem>>, vector<1x256xf32>
    %cst_10 = arith.constant dense<0.000000e+00> : vector<256xf32>
    %16 = vector.multi_reduction <add>, %9, %cst_10 [0] : vector<4x256xf32> to vector<256xf32>
    %17 = vector.shape_cast %16 : vector<256xf32> to vector<1x256xf32>
    %18 = arith.addf %15, %17 : vector<1x256xf32>
    %c0_11 = arith.constant 0 : index
    %c0_12 = arith.constant 0 : index
    %19 = vector.load %arg7[%c0_11, %c0_12] : memref<1x256xf32, #tpu.memory_space<vmem>>, vector<1x256xf32>
    tpu.vector_store %arg7[%c0_11, %c0_12], %18 {strides = array<i32>} : memref<1x256xf32, #tpu.memory_space<vmem>>, vector<1x256xf32>,
    %c1_i32_13 = arith.constant 1 : i32
    %c0_i32_14 = arith.constant 0 : i32
    %20 = arith.cmpi eq, %arg1, %c0_i32_14 : i32
    %21 = arith.extui %20 : i1 to i32
    %c0_i32_15 = arith.constant 0 : i32
    %22 = arith.cmpi ne, %21, %c0_i32_15 : i32
    scf.if %22 {
      %cst_16 = arith.constant 0.000000e+00 : f32
      %23 = vector.broadcast %cst_16 : f32 to vector<2x3x22xf32>
      %c0_17 = arith.constant 0 : index
      %c0_18 = arith.constant 0 : index
      %c0_19 = arith.constant 0 : index
      %24 = vector.load %arg8[%c0_17, %c0_18, %c0_19] : memref<2x22x22xf32, #tpu.memory_space<vmem>>, vector<2x3x22xf32>
      tpu.vector_store %arg8[%c0_17, %c0_18, %c0_19], %23 {strides = array<i32>} : memref<2x22x22xf32, #tpu.memory_space<vmem>>, vector<2x3x22xf32>,
      %c0_20 = arith.constant 0 : index
      %c19 = arith.constant 19 : index
      %c0_21 = arith.constant 0 : index
      %25 = vector.load %arg8[%c0_20, %c19, %c0_21] : memref<2x22x22xf32, #tpu.memory_space<vmem>>, vector<2x3x22xf32>
      tpu.vector_store %arg8[%c0_20, %c19, %c0_21], %23 {strides = array<i32>} : memref<2x22x22xf32, #tpu.memory_space<vmem>>, vector<2x3x22xf32>,
      %cst_22 = arith.constant 0.000000e+00 : f32
      %26 = vector.broadcast %cst_22 : f32 to vector<2x22x3xf32>
      %c0_23 = arith.constant 0 : index
      %c0_24 = arith.constant 0 : index
      %c0_25 = arith.constant 0 : index
      %27 = vector.load %arg8[%c0_23, %c0_24, %c0_25] : memref<2x22x22xf32, #tpu.memory_space<vmem>>, vector<2x22x3xf32>
      tpu.vector_store %arg8[%c0_23, %c0_24, %c0_25], %26 {strides = array<i32>} : memref<2x22x22xf32, #tpu.memory_space<vmem>>, vector<2x22x3xf32>,
      %c0_26 = arith.constant 0 : index
      %c0_27 = arith.constant 0 : index
      %c19_28 = arith.constant 19 : index
      %28 = vector.load %arg8[%c0_26, %c0_27, %c19_28] : memref<2x22x22xf32, #tpu.memory_space<vmem>>, vector<2x22x3xf32>
      tpu.vector_store %arg8[%c0_26, %c0_27, %c19_28], %26 {strides = array<i32>} : memref<2x22x22xf32, #tpu.memory_space<vmem>>, vector<2x22x3xf32>,
      %c0_29 = arith.constant 0 : index
      %c0_30 = arith.constant 0 : index
      %29 = vector.load %arg6[%c0_29, %c0_30] : memref<1x256xf32, #tpu.memory_space<vmem>>, vector<1x16xf32>
      %c0_31 = arith.constant 0 : index
      %c3 = arith.constant 3 : index
      %c3_32 = arith.constant 3 : index
      %30 = vector.load %arg8[%c0_31, %c3, %c3_32] : memref<2x22x22xf32, #tpu.memory_space<vmem>>, vector<1x1x16xf32>
      %31 = vector.shape_cast %30 : vector<1x1x16xf32> to vector<1x16xf32>
      %32 = vector.shape_cast %29 : vector<1x16xf32> to vector<1x1x16xf32>
      tpu.vector_store %arg8[%c0_31, %c3, %c3_32], %32 {strides = array<i32>} : memref<2x22x22xf32, #tpu.memory_space<vmem>>, vector<1x1x16xf32>,
      %c0_33 = arith.constant 0 : index
      %c0_34 = arith.constant 0 : index
      %33 = vector.load %arg7[%c0_33, %c0_34] : memref<1x256xf32, #tpu.memory_space<vmem>>, vector<1x16xf32>
      %cst_35 = arith.constant 2.500000e-01 : f32
      %34 = vector.broadcast %cst_35 : f32 to vector<1x16xf32>
      %35 = arith.mulf %33, %34 : vector<1x16xf32>
      %c1 = arith.constant 1 : index
      %c3_36 = arith.constant 3 : index
      %c3_37 = arith.constant 3 : index
      %36 = vector.load %arg8[%c1, %c3_36, %c3_37] : memref<2x22x22xf32, #tpu.memory_space<vmem>>, vector<1x1x16xf32>
      %37 = vector.shape_cast %36 : vector<1x1x16xf32> to vector<1x16xf32>
      %38 = vector.shape_cast %35 : vector<1x16xf32> to vector<1x1x16xf32>
      tpu.vector_store %arg8[%c1, %c3_36, %c3_37], %38 {strides = array<i32>} : memref<2x22x22xf32, #tpu.memory_space<vmem>>, vector<1x1x16xf32>,
      %c0_38 = arith.constant 0 : index
      %c16 = arith.constant 16 : index
      %39 = vector.load %arg6[%c0_38, %c16] : memref<1x256xf32, #tpu.memory_space<vmem>>, vector<1x16xf32>
      %c0_39 = arith.constant 0 : index
      %c4 = arith.constant 4 : index
      %c3_40 = arith.constant 3 : index
      %40 = vector.load %arg8[%c0_39, %c4, %c3_40] : memref<2x22x22xf32, #tpu.memory_space<vmem>>, vector<1x1x16xf32>
      %41 = vector.shape_cast %40 : vector<1x1x16xf32> to vector<1x16xf32>
      %42 = vector.shape_cast %39 : vector<1x16xf32> to vector<1x1x16xf32>
      tpu.vector_store %arg8[%c0_39, %c4, %c3_40], %42 {strides = array<i32>} : memref<2x22x22xf32, #tpu.memory_space<vmem>>, vector<1x1x16xf32>,
      %c0_41 = arith.constant 0 : index
      %c16_42 = arith.constant 16 : index
      %43 = vector.load %arg7[%c0_41, %c16_42] : memref<1x256xf32, #tpu.memory_space<vmem>>, vector<1x16xf32>
      %cst_43 = arith.constant 2.500000e-01 : f32
      %44 = vector.broadcast %cst_43 : f32 to vector<1x16xf32>
      %45 = arith.mulf %43, %44 : vector<1x16xf32>
      %c1_44 = arith.constant 1 : index
      %c4_45 = arith.constant 4 : index
      %c3_46 = arith.constant 3 : index
      %46 = vector.load %arg8[%c1_44, %c4_45, %c3_46] : memref<2x22x22xf32, #tpu.memory_space<vmem>>, vector<1x1x16xf32>
      %47 = vector.shape_cast %46 : vector<1x1x16xf32> to vector<1x16xf32>
      %48 = vector.shape_cast %45 : vector<1x16xf32> to vector<1x1x16xf32>
      tpu.vector_store %arg8[%c1_44, %c4_45, %c3_46], %48 {strides = array<i32>} : memref<2x22x22xf32, #tpu.memory_space<vmem>>, vector<1x1x16xf32>,
      %c0_47 = arith.constant 0 : index
      %c32 = arith.constant 32 : index
      %49 = vector.load %arg6[%c0_47, %c32] : memref<1x256xf32, #tpu.memory_space<vmem>>, vector<1x16xf32>
      %c0_48 = arith.constant 0 : index
      %c5 = arith.constant 5 : index
      %c3_49 = arith.constant 3 : index
      %50 = vector.load %arg8[%c0_48, %c5, %c3_49] : memref<2x22x22xf32, #tpu.memory_space<vmem>>, vector<1x1x16xf32>
      %51 = vector.shape_cast %50 : vector<1x1x16xf32> to vector<1x16xf32>
      %52 = vector.shape_cast %49 : vector<1x16xf32> to vector<1x1x16xf32>
      tpu.vector_store %arg8[%c0_48, %c5, %c3_49], %52 {strides = array<i32>} : memref<2x22x22xf32, #tpu.memory_space<vmem>>, vector<1x1x16xf32>,
      %c0_50 = arith.constant 0 : index
      %c32_51 = arith.constant 32 : index
      %53 = vector.load %arg7[%c0_50, %c32_51] : memref<1x256xf32, #tpu.memory_space<vmem>>, vector<1x16xf32>
      %cst_52 = arith.constant 2.500000e-01 : f32
      %54 = vector.broadcast %cst_52 : f32 to vector<1x16xf32>
      %55 = arith.mulf %53, %54 : vector<1x16xf32>
      %c1_53 = arith.constant 1 : index
      %c5_54 = arith.constant 5 : index
      %c3_55 = arith.constant 3 : index
      %56 = vector.load %arg8[%c1_53, %c5_54, %c3_55] : memref<2x22x22xf32, #tpu.memory_space<vmem>>, vector<1x1x16xf32>
      %57 = vector.shape_cast %56 : vector<1x1x16xf32> to vector<1x16xf32>
      %58 = vector.shape_cast %55 : vector<1x16xf32> to vector<1x1x16xf32>
      tpu.vector_store %arg8[%c1_53, %c5_54, %c3_55], %58 {strides = array<i32>} : memref<2x22x22xf32, #tpu.memory_space<vmem>>, vector<1x1x16xf32>,
      %c0_56 = arith.constant 0 : index
      %c48 = arith.constant 48 : index
      %59 = vector.load %arg6[%c0_56, %c48] : memref<1x256xf32, #tpu.memory_space<vmem>>, vector<1x16xf32>
      %c0_57 = arith.constant 0 : index
      %c6 = arith.constant 6 : index
      %c3_58 = arith.constant 3 : index
      %60 = vector.load %arg8[%c0_57, %c6, %c3_58] : memref<2x22x22xf32, #tpu.memory_space<vmem>>, vector<1x1x16xf32>
      %61 = vector.shape_cast %60 : vector<1x1x16xf32> to vector<1x16xf32>
      %62 = vector.shape_cast %59 : vector<1x16xf32> to vector<1x1x16xf32>
      tpu.vector_store %arg8[%c0_57, %c6, %c3_58], %62 {strides = array<i32>} : memref<2x22x22xf32, #tpu.memory_space<vmem>>, vector<1x1x16xf32>,
      %c0_59 = arith.constant 0 : index
      %c48_60 = arith.constant 48 : index
      %63 = vector.load %arg7[%c0_59, %c48_60] : memref<1x256xf32, #tpu.memory_space<vmem>>, vector<1x16xf32>
      %cst_61 = arith.constant 2.500000e-01 : f32
      %64 = vector.broadcast %cst_61 : f32 to vector<1x16xf32>
      %65 = arith.mulf %63, %64 : vector<1x16xf32>
      %c1_62 = arith.constant 1 : index
      %c6_63 = arith.constant 6 : index
      %c3_64 = arith.constant 3 : index
      %66 = vector.load %arg8[%c1_62, %c6_63, %c3_64] : memref<2x22x22xf32, #tpu.memory_space<vmem>>, vector<1x1x16xf32>
      %67 = vector.shape_cast %66 : vector<1x1x16xf32> to vector<1x16xf32>
      %68 = vector.shape_cast %65 : vector<1x16xf32> to vector<1x1x16xf32>
      tpu.vector_store %arg8[%c1_62, %c6_63, %c3_64], %68 {strides = array<i32>} : memref<2x22x22xf32, #tpu.memory_space<vmem>>, vector<1x1x16xf32>,
      %c0_65 = arith.constant 0 : index
      %c64 = arith.constant 64 : index
      %69 = vector.load %arg6[%c0_65, %c64] : memref<1x256xf32, #tpu.memory_space<vmem>>, vector<1x16xf32>
      %c0_66 = arith.constant 0 : index
      %c7 = arith.constant 7 : index
      %c3_67 = arith.constant 3 : index
      %70 = vector.load %arg8[%c0_66, %c7, %c3_67] : memref<2x22x22xf32, #tpu.memory_space<vmem>>, vector<1x1x16xf32>
      %71 = vector.shape_cast %70 : vector<1x1x16xf32> to vector<1x16xf32>
      %72 = vector.shape_cast %69 : vector<1x16xf32> to vector<1x1x16xf32>
      tpu.vector_store %arg8[%c0_66, %c7, %c3_67], %72 {strides = array<i32>} : memref<2x22x22xf32, #tpu.memory_space<vmem>>, vector<1x1x16xf32>,
      %c0_68 = arith.constant 0 : index
      %c64_69 = arith.constant 64 : index
      %73 = vector.load %arg7[%c0_68, %c64_69] : memref<1x256xf32, #tpu.memory_space<vmem>>, vector<1x16xf32>
      %cst_70 = arith.constant 2.500000e-01 : f32
      %74 = vector.broadcast %cst_70 : f32 to vector<1x16xf32>
      %75 = arith.mulf %73, %74 : vector<1x16xf32>
      %c1_71 = arith.constant 1 : index
      %c7_72 = arith.constant 7 : index
      %c3_73 = arith.constant 3 : index
      %76 = vector.load %arg8[%c1_71, %c7_72, %c3_73] : memref<2x22x22xf32, #tpu.memory_space<vmem>>, vector<1x1x16xf32>
      %77 = vector.shape_cast %76 : vector<1x1x16xf32> to vector<1x16xf32>
      %78 = vector.shape_cast %75 : vector<1x16xf32> to vector<1x1x16xf32>
      tpu.vector_store %arg8[%c1_71, %c7_72, %c3_73], %78 {strides = array<i32>} : memref<2x22x22xf32, #tpu.memory_space<vmem>>, vector<1x1x16xf32>,
      %c0_74 = arith.constant 0 : index
      %c80 = arith.constant 80 : index
      %79 = vector.load %arg6[%c0_74, %c80] : memref<1x256xf32, #tpu.memory_space<vmem>>, vector<1x16xf32>
      %c0_75 = arith.constant 0 : index
      %c8 = arith.constant 8 : index
      %c3_76 = arith.constant 3 : index
      %80 = vector.load %arg8[%c0_75, %c8, %c3_76] : memref<2x22x22xf32, #tpu.memory_space<vmem>>, vector<1x1x16xf32>
      %81 = vector.shape_cast %80 : vector<1x1x16xf32> to vector<1x16xf32>
      %82 = vector.shape_cast %79 : vector<1x16xf32> to vector<1x1x16xf32>
      tpu.vector_store %arg8[%c0_75, %c8, %c3_76], %82 {strides = array<i32>} : memref<2x22x22xf32, #tpu.memory_space<vmem>>, vector<1x1x16xf32>,
      %c0_77 = arith.constant 0 : index
      %c80_78 = arith.constant 80 : index
      %83 = vector.load %arg7[%c0_77, %c80_78] : memref<1x256xf32, #tpu.memory_space<vmem>>, vector<1x16xf32>
      %cst_79 = arith.constant 2.500000e-01 : f32
      %84 = vector.broadcast %cst_79 : f32 to vector<1x16xf32>
      %85 = arith.mulf %83, %84 : vector<1x16xf32>
      %c1_80 = arith.constant 1 : index
      %c8_81 = arith.constant 8 : index
      %c3_82 = arith.constant 3 : index
      %86 = vector.load %arg8[%c1_80, %c8_81, %c3_82] : memref<2x22x22xf32, #tpu.memory_space<vmem>>, vector<1x1x16xf32>
      %87 = vector.shape_cast %86 : vector<1x1x16xf32> to vector<1x16xf32>
      %88 = vector.shape_cast %85 : vector<1x16xf32> to vector<1x1x16xf32>
      tpu.vector_store %arg8[%c1_80, %c8_81, %c3_82], %88 {strides = array<i32>} : memref<2x22x22xf32, #tpu.memory_space<vmem>>, vector<1x1x16xf32>,
      %c0_83 = arith.constant 0 : index
      %c96 = arith.constant 96 : index
      %89 = vector.load %arg6[%c0_83, %c96] : memref<1x256xf32, #tpu.memory_space<vmem>>, vector<1x16xf32>
      %c0_84 = arith.constant 0 : index
      %c9 = arith.constant 9 : index
      %c3_85 = arith.constant 3 : index
      %90 = vector.load %arg8[%c0_84, %c9, %c3_85] : memref<2x22x22xf32, #tpu.memory_space<vmem>>, vector<1x1x16xf32>
      %91 = vector.shape_cast %90 : vector<1x1x16xf32> to vector<1x16xf32>
      %92 = vector.shape_cast %89 : vector<1x16xf32> to vector<1x1x16xf32>
      tpu.vector_store %arg8[%c0_84, %c9, %c3_85], %92 {strides = array<i32>} : memref<2x22x22xf32, #tpu.memory_space<vmem>>, vector<1x1x16xf32>,
      %c0_86 = arith.constant 0 : index
      %c96_87 = arith.constant 96 : index
      %93 = vector.load %arg7[%c0_86, %c96_87] : memref<1x256xf32, #tpu.memory_space<vmem>>, vector<1x16xf32>
      %cst_88 = arith.constant 2.500000e-01 : f32
      %94 = vector.broadcast %cst_88 : f32 to vector<1x16xf32>
      %95 = arith.mulf %93, %94 : vector<1x16xf32>
      %c1_89 = arith.constant 1 : index
      %c9_90 = arith.constant 9 : index
      %c3_91 = arith.constant 3 : index
      %96 = vector.load %arg8[%c1_89, %c9_90, %c3_91] : memref<2x22x22xf32, #tpu.memory_space<vmem>>, vector<1x1x16xf32>
      %97 = vector.shape_cast %96 : vector<1x1x16xf32> to vector<1x16xf32>
      %98 = vector.shape_cast %95 : vector<1x16xf32> to vector<1x1x16xf32>
      tpu.vector_store %arg8[%c1_89, %c9_90, %c3_91], %98 {strides = array<i32>} : memref<2x22x22xf32, #tpu.memory_space<vmem>>, vector<1x1x16xf32>,
      %c0_92 = arith.constant 0 : index
      %c112 = arith.constant 112 : index
      %99 = vector.load %arg6[%c0_92, %c112] : memref<1x256xf32, #tpu.memory_space<vmem>>, vector<1x16xf32>
      %c0_93 = arith.constant 0 : index
      %c10 = arith.constant 10 : index
      %c3_94 = arith.constant 3 : index
      %100 = vector.load %arg8[%c0_93, %c10, %c3_94] : memref<2x22x22xf32, #tpu.memory_space<vmem>>, vector<1x1x16xf32>
      %101 = vector.shape_cast %100 : vector<1x1x16xf32> to vector<1x16xf32>
      %102 = vector.shape_cast %99 : vector<1x16xf32> to vector<1x1x16xf32>
      tpu.vector_store %arg8[%c0_93, %c10, %c3_94], %102 {strides = array<i32>} : memref<2x22x22xf32, #tpu.memory_space<vmem>>, vector<1x1x16xf32>,
      %c0_95 = arith.constant 0 : index
      %c112_96 = arith.constant 112 : index
      %103 = vector.load %arg7[%c0_95, %c112_96] : memref<1x256xf32, #tpu.memory_space<vmem>>, vector<1x16xf32>
      %cst_97 = arith.constant 2.500000e-01 : f32
      %104 = vector.broadcast %cst_97 : f32 to vector<1x16xf32>
      %105 = arith.mulf %103, %104 : vector<1x16xf32>
      %c1_98 = arith.constant 1 : index
      %c10_99 = arith.constant 10 : index
      %c3_100 = arith.constant 3 : index
      %106 = vector.load %arg8[%c1_98, %c10_99, %c3_100] : memref<2x22x22xf32, #tpu.memory_space<vmem>>, vector<1x1x16xf32>
      %107 = vector.shape_cast %106 : vector<1x1x16xf32> to vector<1x16xf32>
      %108 = vector.shape_cast %105 : vector<1x16xf32> to vector<1x1x16xf32>
      tpu.vector_store %arg8[%c1_98, %c10_99, %c3_100], %108 {strides = array<i32>} : memref<2x22x22xf32, #tpu.memory_space<vmem>>, vector<1x1x16xf32>,
      %c0_101 = arith.constant 0 : index
      %c128 = arith.constant 128 : index
      %109 = vector.load %arg6[%c0_101, %c128] : memref<1x256xf32, #tpu.memory_space<vmem>>, vector<1x16xf32>
      %c0_102 = arith.constant 0 : index
      %c11 = arith.constant 11 : index
      %c3_103 = arith.constant 3 : index
      %110 = vector.load %arg8[%c0_102, %c11, %c3_103] : memref<2x22x22xf32, #tpu.memory_space<vmem>>, vector<1x1x16xf32>
      %111 = vector.shape_cast %110 : vector<1x1x16xf32> to vector<1x16xf32>
      %112 = vector.shape_cast %109 : vector<1x16xf32> to vector<1x1x16xf32>
      tpu.vector_store %arg8[%c0_102, %c11, %c3_103], %112 {strides = array<i32>} : memref<2x22x22xf32, #tpu.memory_space<vmem>>, vector<1x1x16xf32>,
      %c0_104 = arith.constant 0 : index
      %c128_105 = arith.constant 128 : index
      %113 = vector.load %arg7[%c0_104, %c128_105] : memref<1x256xf32, #tpu.memory_space<vmem>>, vector<1x16xf32>
      %cst_106 = arith.constant 2.500000e-01 : f32
      %114 = vector.broadcast %cst_106 : f32 to vector<1x16xf32>
      %115 = arith.mulf %113, %114 : vector<1x16xf32>
      %c1_107 = arith.constant 1 : index
      %c11_108 = arith.constant 11 : index
      %c3_109 = arith.constant 3 : index
      %116 = vector.load %arg8[%c1_107, %c11_108, %c3_109] : memref<2x22x22xf32, #tpu.memory_space<vmem>>, vector<1x1x16xf32>
      %117 = vector.shape_cast %116 : vector<1x1x16xf32> to vector<1x16xf32>
      %118 = vector.shape_cast %115 : vector<1x16xf32> to vector<1x1x16xf32>
      tpu.vector_store %arg8[%c1_107, %c11_108, %c3_109], %118 {strides = array<i32>} : memref<2x22x22xf32, #tpu.memory_space<vmem>>, vector<1x1x16xf32>,
      %c0_110 = arith.constant 0 : index
      %c144 = arith.constant 144 : index
      %119 = vector.load %arg6[%c0_110, %c144] : memref<1x256xf32, #tpu.memory_space<vmem>>, vector<1x16xf32>
      %c0_111 = arith.constant 0 : index
      %c12 = arith.constant 12 : index
      %c3_112 = arith.constant 3 : index
      %120 = vector.load %arg8[%c0_111, %c12, %c3_112] : memref<2x22x22xf32, #tpu.memory_space<vmem>>, vector<1x1x16xf32>
      %121 = vector.shape_cast %120 : vector<1x1x16xf32> to vector<1x16xf32>
      %122 = vector.shape_cast %119 : vector<1x16xf32> to vector<1x1x16xf32>
      tpu.vector_store %arg8[%c0_111, %c12, %c3_112], %122 {strides = array<i32>} : memref<2x22x22xf32, #tpu.memory_space<vmem>>, vector<1x1x16xf32>,
      %c0_113 = arith.constant 0 : index
      %c144_114 = arith.constant 144 : index
      %123 = vector.load %arg7[%c0_113, %c144_114] : memref<1x256xf32, #tpu.memory_space<vmem>>, vector<1x16xf32>
      %cst_115 = arith.constant 2.500000e-01 : f32
      %124 = vector.broadcast %cst_115 : f32 to vector<1x16xf32>
      %125 = arith.mulf %123, %124 : vector<1x16xf32>
      %c1_116 = arith.constant 1 : index
      %c12_117 = arith.constant 12 : index
      %c3_118 = arith.constant 3 : index
      %126 = vector.load %arg8[%c1_116, %c12_117, %c3_118] : memref<2x22x22xf32, #tpu.memory_space<vmem>>, vector<1x1x16xf32>
      %127 = vector.shape_cast %126 : vector<1x1x16xf32> to vector<1x16xf32>
      %128 = vector.shape_cast %125 : vector<1x16xf32> to vector<1x1x16xf32>
      tpu.vector_store %arg8[%c1_116, %c12_117, %c3_118], %128 {strides = array<i32>} : memref<2x22x22xf32, #tpu.memory_space<vmem>>, vector<1x1x16xf32>,
      %c0_119 = arith.constant 0 : index
      %c160 = arith.constant 160 : index
      %129 = vector.load %arg6[%c0_119, %c160] : memref<1x256xf32, #tpu.memory_space<vmem>>, vector<1x16xf32>
      %c0_120 = arith.constant 0 : index
      %c13 = arith.constant 13 : index
      %c3_121 = arith.constant 3 : index
      %130 = vector.load %arg8[%c0_120, %c13, %c3_121] : memref<2x22x22xf32, #tpu.memory_space<vmem>>, vector<1x1x16xf32>
      %131 = vector.shape_cast %130 : vector<1x1x16xf32> to vector<1x16xf32>
      %132 = vector.shape_cast %129 : vector<1x16xf32> to vector<1x1x16xf32>
      tpu.vector_store %arg8[%c0_120, %c13, %c3_121], %132 {strides = array<i32>} : memref<2x22x22xf32, #tpu.memory_space<vmem>>, vector<1x1x16xf32>,
      %c0_122 = arith.constant 0 : index
      %c160_123 = arith.constant 160 : index
      %133 = vector.load %arg7[%c0_122, %c160_123] : memref<1x256xf32, #tpu.memory_space<vmem>>, vector<1x16xf32>
      %cst_124 = arith.constant 2.500000e-01 : f32
      %134 = vector.broadcast %cst_124 : f32 to vector<1x16xf32>
      %135 = arith.mulf %133, %134 : vector<1x16xf32>
      %c1_125 = arith.constant 1 : index
      %c13_126 = arith.constant 13 : index
      %c3_127 = arith.constant 3 : index
      %136 = vector.load %arg8[%c1_125, %c13_126, %c3_127] : memref<2x22x22xf32, #tpu.memory_space<vmem>>, vector<1x1x16xf32>
      %137 = vector.shape_cast %136 : vector<1x1x16xf32> to vector<1x16xf32>
      %138 = vector.shape_cast %135 : vector<1x16xf32> to vector<1x1x16xf32>
      tpu.vector_store %arg8[%c1_125, %c13_126, %c3_127], %138 {strides = array<i32>} : memref<2x22x22xf32, #tpu.memory_space<vmem>>, vector<1x1x16xf32>,
      %c0_128 = arith.constant 0 : index
      %c176 = arith.constant 176 : index
      %139 = vector.load %arg6[%c0_128, %c176] : memref<1x256xf32, #tpu.memory_space<vmem>>, vector<1x16xf32>
      %c0_129 = arith.constant 0 : index
      %c14 = arith.constant 14 : index
      %c3_130 = arith.constant 3 : index
      %140 = vector.load %arg8[%c0_129, %c14, %c3_130] : memref<2x22x22xf32, #tpu.memory_space<vmem>>, vector<1x1x16xf32>
      %141 = vector.shape_cast %140 : vector<1x1x16xf32> to vector<1x16xf32>
      %142 = vector.shape_cast %139 : vector<1x16xf32> to vector<1x1x16xf32>
      tpu.vector_store %arg8[%c0_129, %c14, %c3_130], %142 {strides = array<i32>} : memref<2x22x22xf32, #tpu.memory_space<vmem>>, vector<1x1x16xf32>,
      %c0_131 = arith.constant 0 : index
      %c176_132 = arith.constant 176 : index
      %143 = vector.load %arg7[%c0_131, %c176_132] : memref<1x256xf32, #tpu.memory_space<vmem>>, vector<1x16xf32>
      %cst_133 = arith.constant 2.500000e-01 : f32
      %144 = vector.broadcast %cst_133 : f32 to vector<1x16xf32>
      %145 = arith.mulf %143, %144 : vector<1x16xf32>
      %c1_134 = arith.constant 1 : index
      %c14_135 = arith.constant 14 : index
      %c3_136 = arith.constant 3 : index
      %146 = vector.load %arg8[%c1_134, %c14_135, %c3_136] : memref<2x22x22xf32, #tpu.memory_space<vmem>>, vector<1x1x16xf32>
      %147 = vector.shape_cast %146 : vector<1x1x16xf32> to vector<1x16xf32>
      %148 = vector.shape_cast %145 : vector<1x16xf32> to vector<1x1x16xf32>
      tpu.vector_store %arg8[%c1_134, %c14_135, %c3_136], %148 {strides = array<i32>} : memref<2x22x22xf32, #tpu.memory_space<vmem>>, vector<1x1x16xf32>,
      %c0_137 = arith.constant 0 : index
      %c192 = arith.constant 192 : index
      %149 = vector.load %arg6[%c0_137, %c192] : memref<1x256xf32, #tpu.memory_space<vmem>>, vector<1x16xf32>
      %c0_138 = arith.constant 0 : index
      %c15 = arith.constant 15 : index
      %c3_139 = arith.constant 3 : index
      %150 = vector.load %arg8[%c0_138, %c15, %c3_139] : memref<2x22x22xf32, #tpu.memory_space<vmem>>, vector<1x1x16xf32>
      %151 = vector.shape_cast %150 : vector<1x1x16xf32> to vector<1x16xf32>
      %152 = vector.shape_cast %149 : vector<1x16xf32> to vector<1x1x16xf32>
      tpu.vector_store %arg8[%c0_138, %c15, %c3_139], %152 {strides = array<i32>} : memref<2x22x22xf32, #tpu.memory_space<vmem>>, vector<1x1x16xf32>,
      %c0_140 = arith.constant 0 : index
      %c192_141 = arith.constant 192 : index
      %153 = vector.load %arg7[%c0_140, %c192_141] : memref<1x256xf32, #tpu.memory_space<vmem>>, vector<1x16xf32>
      %cst_142 = arith.constant 2.500000e-01 : f32
      %154 = vector.broadcast %cst_142 : f32 to vector<1x16xf32>
      %155 = arith.mulf %153, %154 : vector<1x16xf32>
      %c1_143 = arith.constant 1 : index
      %c15_144 = arith.constant 15 : index
      %c3_145 = arith.constant 3 : index
      %156 = vector.load %arg8[%c1_143, %c15_144, %c3_145] : memref<2x22x22xf32, #tpu.memory_space<vmem>>, vector<1x1x16xf32>
      %157 = vector.shape_cast %156 : vector<1x1x16xf32> to vector<1x16xf32>
      %158 = vector.shape_cast %155 : vector<1x16xf32> to vector<1x1x16xf32>
      tpu.vector_store %arg8[%c1_143, %c15_144, %c3_145], %158 {strides = array<i32>} : memref<2x22x22xf32, #tpu.memory_space<vmem>>, vector<1x1x16xf32>,
      %c0_146 = arith.constant 0 : index
      %c208 = arith.constant 208 : index
      %159 = vector.load %arg6[%c0_146, %c208] : memref<1x256xf32, #tpu.memory_space<vmem>>, vector<1x16xf32>
      %c0_147 = arith.constant 0 : index
      %c16_148 = arith.constant 16 : index
      %c3_149 = arith.constant 3 : index
      %160 = vector.load %arg8[%c0_147, %c16_148, %c3_149] : memref<2x22x22xf32, #tpu.memory_space<vmem>>, vector<1x1x16xf32>
      %161 = vector.shape_cast %160 : vector<1x1x16xf32> to vector<1x16xf32>
      %162 = vector.shape_cast %159 : vector<1x16xf32> to vector<1x1x16xf32>
      tpu.vector_store %arg8[%c0_147, %c16_148, %c3_149], %162 {strides = array<i32>} : memref<2x22x22xf32, #tpu.memory_space<vmem>>, vector<1x1x16xf32>,
      %c0_150 = arith.constant 0 : index
      %c208_151 = arith.constant 208 : index
      %163 = vector.load %arg7[%c0_150, %c208_151] : memref<1x256xf32, #tpu.memory_space<vmem>>, vector<1x16xf32>
      %cst_152 = arith.constant 2.500000e-01 : f32
      %164 = vector.broadcast %cst_152 : f32 to vector<1x16xf32>
      %165 = arith.mulf %163, %164 : vector<1x16xf32>
      %c1_153 = arith.constant 1 : index
      %c16_154 = arith.constant 16 : index
      %c3_155 = arith.constant 3 : index
      %166 = vector.load %arg8[%c1_153, %c16_154, %c3_155] : memref<2x22x22xf32, #tpu.memory_space<vmem>>, vector<1x1x16xf32>
      %167 = vector.shape_cast %166 : vector<1x1x16xf32> to vector<1x16xf32>
      %168 = vector.shape_cast %165 : vector<1x16xf32> to vector<1x1x16xf32>
      tpu.vector_store %arg8[%c1_153, %c16_154, %c3_155], %168 {strides = array<i32>} : memref<2x22x22xf32, #tpu.memory_space<vmem>>, vector<1x1x16xf32>,
      %c0_156 = arith.constant 0 : index
      %c224 = arith.constant 224 : index
      %169 = vector.load %arg6[%c0_156, %c224] : memref<1x256xf32, #tpu.memory_space<vmem>>, vector<1x16xf32>
      %c0_157 = arith.constant 0 : index
      %c17 = arith.constant 17 : index
      %c3_158 = arith.constant 3 : index
      %170 = vector.load %arg8[%c0_157, %c17, %c3_158] : memref<2x22x22xf32, #tpu.memory_space<vmem>>, vector<1x1x16xf32>
      %171 = vector.shape_cast %170 : vector<1x1x16xf32> to vector<1x16xf32>
      %172 = vector.shape_cast %169 : vector<1x16xf32> to vector<1x1x16xf32>
      tpu.vector_store %arg8[%c0_157, %c17, %c3_158], %172 {strides = array<i32>} : memref<2x22x22xf32, #tpu.memory_space<vmem>>, vector<1x1x16xf32>,
      %c0_159 = arith.constant 0 : index
      %c224_160 = arith.constant 224 : index
      %173 = vector.load %arg7[%c0_159, %c224_160] : memref<1x256xf32, #tpu.memory_space<vmem>>, vector<1x16xf32>
      %cst_161 = arith.constant 2.500000e-01 : f32
      %174 = vector.broadcast %cst_161 : f32 to vector<1x16xf32>
      %175 = arith.mulf %173, %174 : vector<1x16xf32>
      %c1_162 = arith.constant 1 : index
      %c17_163 = arith.constant 17 : index
      %c3_164 = arith.constant 3 : index
      %176 = vector.load %arg8[%c1_162, %c17_163, %c3_164] : memref<2x22x22xf32, #tpu.memory_space<vmem>>, vector<1x1x16xf32>
      %177 = vector.shape_cast %176 : vector<1x1x16xf32> to vector<1x16xf32>
      %178 = vector.shape_cast %175 : vector<1x16xf32> to vector<1x1x16xf32>
      tpu.vector_store %arg8[%c1_162, %c17_163, %c3_164], %178 {strides = array<i32>} : memref<2x22x22xf32, #tpu.memory_space<vmem>>, vector<1x1x16xf32>,
      %c0_165 = arith.constant 0 : index
      %c240 = arith.constant 240 : index
      %179 = vector.load %arg6[%c0_165, %c240] : memref<1x256xf32, #tpu.memory_space<vmem>>, vector<1x16xf32>
      %c0_166 = arith.constant 0 : index
      %c18 = arith.constant 18 : index
      %c3_167 = arith.constant 3 : index
      %180 = vector.load %arg8[%c0_166, %c18, %c3_167] : memref<2x22x22xf32, #tpu.memory_space<vmem>>, vector<1x1x16xf32>
      %181 = vector.shape_cast %180 : vector<1x1x16xf32> to vector<1x16xf32>
      %182 = vector.shape_cast %179 : vector<1x16xf32> to vector<1x1x16xf32>
      tpu.vector_store %arg8[%c0_166, %c18, %c3_167], %182 {strides = array<i32>} : memref<2x22x22xf32, #tpu.memory_space<vmem>>, vector<1x1x16xf32>,
      %c0_168 = arith.constant 0 : index
      %c240_169 = arith.constant 240 : index
      %183 = vector.load %arg7[%c0_168, %c240_169] : memref<1x256xf32, #tpu.memory_space<vmem>>, vector<1x16xf32>
      %cst_170 = arith.constant 2.500000e-01 : f32
      %184 = vector.broadcast %cst_170 : f32 to vector<1x16xf32>
      %185 = arith.mulf %183, %184 : vector<1x16xf32>
      %c1_171 = arith.constant 1 : index
      %c18_172 = arith.constant 18 : index
      %c3_173 = arith.constant 3 : index
      %186 = vector.load %arg8[%c1_171, %c18_172, %c3_173] : memref<2x22x22xf32, #tpu.memory_space<vmem>>, vector<1x1x16xf32>
      %187 = vector.shape_cast %186 : vector<1x1x16xf32> to vector<1x16xf32>
      %188 = vector.shape_cast %185 : vector<1x16xf32> to vector<1x1x16xf32>
      tpu.vector_store %arg8[%c1_171, %c18_172, %c3_173], %188 {strides = array<i32>} : memref<2x22x22xf32, #tpu.memory_space<vmem>>, vector<1x1x16xf32>,
      %c0_174 = arith.constant 0 : index
      %c0_175 = arith.constant 0 : index
      %c0_176 = arith.constant 0 : index
      %189 = vector.load %arg8[%c0_174, %c0_175, %c0_176] : memref<2x22x22xf32, #tpu.memory_space<vmem>>, vector<1x16x22xf32>
      %190 = vector.shape_cast %189 : vector<1x16x22xf32> to vector<16x22xf32>
      %c0_177 = arith.constant 0 : index
      %191 = memref.load %arg2[%c0_177] : memref<98xf32, #tpu.memory_space<smem>>
      %192 = vector.extract_strided_slice %190 {offsets = [0, 0], sizes = [16, 16], strides = [1, 1]} : vector<16x22xf32> to vector<16x16xf32>
      %193 = vector.broadcast %191 : f32 to vector<16x16xf32>
      %194 = arith.mulf %193, %192 : vector<16x16xf32>
      %c1_178 = arith.constant 1 : index
      %195 = memref.load %arg2[%c1_178] : memref<98xf32, #tpu.memory_space<smem>>
      %196 = vector.extract_strided_slice %190 {offsets = [0, 1], sizes = [16, 16], strides = [1, 1]} : vector<16x22xf32> to vector<16x16xf32>
      %197 = vector.broadcast %195 : f32 to vector<16x16xf32>
      %198 = arith.mulf %197, %196 : vector<16x16xf32>
      %199 = arith.addf %194, %198 : vector<16x16xf32>
      %c2 = arith.constant 2 : index
      %200 = memref.load %arg2[%c2] : memref<98xf32, #tpu.memory_space<smem>>
      %201 = vector.extract_strided_slice %190 {offsets = [0, 2], sizes = [16, 16], strides = [1, 1]} : vector<16x22xf32> to vector<16x16xf32>
      %202 = vector.broadcast %200 : f32 to vector<16x16xf32>
      %203 = arith.mulf %202, %201 : vector<16x16xf32>
      %204 = arith.addf %199, %203 : vector<16x16xf32>
      %c3_179 = arith.constant 3 : index
      %205 = memref.load %arg2[%c3_179] : memref<98xf32, #tpu.memory_space<smem>>
      %206 = vector.extract_strided_slice %190 {offsets = [0, 3], sizes = [16, 16], strides = [1, 1]} : vector<16x22xf32> to vector<16x16xf32>
      %207 = vector.broadcast %205 : f32 to vector<16x16xf32>
      %208 = arith.mulf %207, %206 : vector<16x16xf32>
      %209 = arith.addf %204, %208 : vector<16x16xf32>
      %c4_180 = arith.constant 4 : index
      %210 = memref.load %arg2[%c4_180] : memref<98xf32, #tpu.memory_space<smem>>
      %211 = vector.extract_strided_slice %190 {offsets = [0, 4], sizes = [16, 16], strides = [1, 1]} : vector<16x22xf32> to vector<16x16xf32>
      %212 = vector.broadcast %210 : f32 to vector<16x16xf32>
      %213 = arith.mulf %212, %211 : vector<16x16xf32>
      %214 = arith.addf %209, %213 : vector<16x16xf32>
      %c5_181 = arith.constant 5 : index
      %215 = memref.load %arg2[%c5_181] : memref<98xf32, #tpu.memory_space<smem>>
      %216 = vector.extract_strided_slice %190 {offsets = [0, 5], sizes = [16, 16], strides = [1, 1]} : vector<16x22xf32> to vector<16x16xf32>
      %217 = vector.broadcast %215 : f32 to vector<16x16xf32>
      %218 = arith.mulf %217, %216 : vector<16x16xf32>
      %219 = arith.addf %214, %218 : vector<16x16xf32>
      %c6_182 = arith.constant 6 : index
      %220 = memref.load %arg2[%c6_182] : memref<98xf32, #tpu.memory_space<smem>>
      %221 = vector.extract_strided_slice %190 {offsets = [0, 6], sizes = [16, 16], strides = [1, 1]} : vector<16x22xf32> to vector<16x16xf32>
      %222 = vector.broadcast %220 : f32 to vector<16x16xf32>
      %223 = arith.mulf %222, %221 : vector<16x16xf32>
      %224 = arith.addf %219, %223 : vector<16x16xf32>
      %c0_183 = arith.constant 0 : index
      %c1_184 = arith.constant 1 : index
      %c0_185 = arith.constant 0 : index
      %225 = vector.load %arg8[%c0_183, %c1_184, %c0_185] : memref<2x22x22xf32, #tpu.memory_space<vmem>>, vector<1x16x22xf32>
      %226 = vector.shape_cast %225 : vector<1x16x22xf32> to vector<16x22xf32>
      %c7_186 = arith.constant 7 : index
      %227 = memref.load %arg2[%c7_186] : memref<98xf32, #tpu.memory_space<smem>>
      %228 = vector.extract_strided_slice %226 {offsets = [0, 0], sizes = [16, 16], strides = [1, 1]} : vector<16x22xf32> to vector<16x16xf32>
      %229 = vector.broadcast %227 : f32 to vector<16x16xf32>
      %230 = arith.mulf %229, %228 : vector<16x16xf32>
      %231 = arith.addf %224, %230 : vector<16x16xf32>
      %c8_187 = arith.constant 8 : index
      %232 = memref.load %arg2[%c8_187] : memref<98xf32, #tpu.memory_space<smem>>
      %233 = vector.extract_strided_slice %226 {offsets = [0, 1], sizes = [16, 16], strides = [1, 1]} : vector<16x22xf32> to vector<16x16xf32>
      %234 = vector.broadcast %232 : f32 to vector<16x16xf32>
      %235 = arith.mulf %234, %233 : vector<16x16xf32>
      %236 = arith.addf %231, %235 : vector<16x16xf32>
      %c9_188 = arith.constant 9 : index
      %237 = memref.load %arg2[%c9_188] : memref<98xf32, #tpu.memory_space<smem>>
      %238 = vector.extract_strided_slice %226 {offsets = [0, 2], sizes = [16, 16], strides = [1, 1]} : vector<16x22xf32> to vector<16x16xf32>
      %239 = vector.broadcast %237 : f32 to vector<16x16xf32>
      %240 = arith.mulf %239, %238 : vector<16x16xf32>
      %241 = arith.addf %236, %240 : vector<16x16xf32>
      %c10_189 = arith.constant 10 : index
      %242 = memref.load %arg2[%c10_189] : memref<98xf32, #tpu.memory_space<smem>>
      %243 = vector.extract_strided_slice %226 {offsets = [0, 3], sizes = [16, 16], strides = [1, 1]} : vector<16x22xf32> to vector<16x16xf32>
      %244 = vector.broadcast %242 : f32 to vector<16x16xf32>
      %245 = arith.mulf %244, %243 : vector<16x16xf32>
      %246 = arith.addf %241, %245 : vector<16x16xf32>
      %c11_190 = arith.constant 11 : index
      %247 = memref.load %arg2[%c11_190] : memref<98xf32, #tpu.memory_space<smem>>
      %248 = vector.extract_strided_slice %226 {offsets = [0, 4], sizes = [16, 16], strides = [1, 1]} : vector<16x22xf32> to vector<16x16xf32>
      %249 = vector.broadcast %247 : f32 to vector<16x16xf32>
      %250 = arith.mulf %249, %248 : vector<16x16xf32>
      %251 = arith.addf %246, %250 : vector<16x16xf32>
      %c12_191 = arith.constant 12 : index
      %252 = memref.load %arg2[%c12_191] : memref<98xf32, #tpu.memory_space<smem>>
      %253 = vector.extract_strided_slice %226 {offsets = [0, 5], sizes = [16, 16], strides = [1, 1]} : vector<16x22xf32> to vector<16x16xf32>
      %254 = vector.broadcast %252 : f32 to vector<16x16xf32>
      %255 = arith.mulf %254, %253 : vector<16x16xf32>
      %256 = arith.addf %251, %255 : vector<16x16xf32>
      %c13_192 = arith.constant 13 : index
      %257 = memref.load %arg2[%c13_192] : memref<98xf32, #tpu.memory_space<smem>>
      %258 = vector.extract_strided_slice %226 {offsets = [0, 6], sizes = [16, 16], strides = [1, 1]} : vector<16x22xf32> to vector<16x16xf32>
      %259 = vector.broadcast %257 : f32 to vector<16x16xf32>
      %260 = arith.mulf %259, %258 : vector<16x16xf32>
      %261 = arith.addf %256, %260 : vector<16x16xf32>
      %c0_193 = arith.constant 0 : index
      %c2_194 = arith.constant 2 : index
      %c0_195 = arith.constant 0 : index
      %262 = vector.load %arg8[%c0_193, %c2_194, %c0_195] : memref<2x22x22xf32, #tpu.memory_space<vmem>>, vector<1x16x22xf32>
      %263 = vector.shape_cast %262 : vector<1x16x22xf32> to vector<16x22xf32>
      %c14_196 = arith.constant 14 : index
      %264 = memref.load %arg2[%c14_196] : memref<98xf32, #tpu.memory_space<smem>>
      %265 = vector.extract_strided_slice %263 {offsets = [0, 0], sizes = [16, 16], strides = [1, 1]} : vector<16x22xf32> to vector<16x16xf32>
      %266 = vector.broadcast %264 : f32 to vector<16x16xf32>
      %267 = arith.mulf %266, %265 : vector<16x16xf32>
      %268 = arith.addf %261, %267 : vector<16x16xf32>
      %c15_197 = arith.constant 15 : index
      %269 = memref.load %arg2[%c15_197] : memref<98xf32, #tpu.memory_space<smem>>
      %270 = vector.extract_strided_slice %263 {offsets = [0, 1], sizes = [16, 16], strides = [1, 1]} : vector<16x22xf32> to vector<16x16xf32>
      %271 = vector.broadcast %269 : f32 to vector<16x16xf32>
      %272 = arith.mulf %271, %270 : vector<16x16xf32>
      %273 = arith.addf %268, %272 : vector<16x16xf32>
      %c16_198 = arith.constant 16 : index
      %274 = memref.load %arg2[%c16_198] : memref<98xf32, #tpu.memory_space<smem>>
      %275 = vector.extract_strided_slice %263 {offsets = [0, 2], sizes = [16, 16], strides = [1, 1]} : vector<16x22xf32> to vector<16x16xf32>
      %276 = vector.broadcast %274 : f32 to vector<16x16xf32>
      %277 = arith.mulf %276, %275 : vector<16x16xf32>
      %278 = arith.addf %273, %277 : vector<16x16xf32>
      %c17_199 = arith.constant 17 : index
      %279 = memref.load %arg2[%c17_199] : memref<98xf32, #tpu.memory_space<smem>>
      %280 = vector.extract_strided_slice %263 {offsets = [0, 3], sizes = [16, 16], strides = [1, 1]} : vector<16x22xf32> to vector<16x16xf32>
      %281 = vector.broadcast %279 : f32 to vector<16x16xf32>
      %282 = arith.mulf %281, %280 : vector<16x16xf32>
      %283 = arith.addf %278, %282 : vector<16x16xf32>
      %c18_200 = arith.constant 18 : index
      %284 = memref.load %arg2[%c18_200] : memref<98xf32, #tpu.memory_space<smem>>
      %285 = vector.extract_strided_slice %263 {offsets = [0, 4], sizes = [16, 16], strides = [1, 1]} : vector<16x22xf32> to vector<16x16xf32>
      %286 = vector.broadcast %284 : f32 to vector<16x16xf32>
      %287 = arith.mulf %286, %285 : vector<16x16xf32>
      %288 = arith.addf %283, %287 : vector<16x16xf32>
      %c19_201 = arith.constant 19 : index
      %289 = memref.load %arg2[%c19_201] : memref<98xf32, #tpu.memory_space<smem>>
      %290 = vector.extract_strided_slice %263 {offsets = [0, 5], sizes = [16, 16], strides = [1, 1]} : vector<16x22xf32> to vector<16x16xf32>
      %291 = vector.broadcast %289 : f32 to vector<16x16xf32>
      %292 = arith.mulf %291, %290 : vector<16x16xf32>
      %293 = arith.addf %288, %292 : vector<16x16xf32>
      %c20 = arith.constant 20 : index
      %294 = memref.load %arg2[%c20] : memref<98xf32, #tpu.memory_space<smem>>
      %295 = vector.extract_strided_slice %263 {offsets = [0, 6], sizes = [16, 16], strides = [1, 1]} : vector<16x22xf32> to vector<16x16xf32>
      %296 = vector.broadcast %294 : f32 to vector<16x16xf32>
      %297 = arith.mulf %296, %295 : vector<16x16xf32>
      %298 = arith.addf %293, %297 : vector<16x16xf32>
      %c0_202 = arith.constant 0 : index
      %c3_203 = arith.constant 3 : index
      %c0_204 = arith.constant 0 : index
      %299 = vector.load %arg8[%c0_202, %c3_203, %c0_204] : memref<2x22x22xf32, #tpu.memory_space<vmem>>, vector<1x16x22xf32>
      %300 = vector.shape_cast %299 : vector<1x16x22xf32> to vector<16x22xf32>
      %c21 = arith.constant 21 : index
      %301 = memref.load %arg2[%c21] : memref<98xf32, #tpu.memory_space<smem>>
      %302 = vector.extract_strided_slice %300 {offsets = [0, 0], sizes = [16, 16], strides = [1, 1]} : vector<16x22xf32> to vector<16x16xf32>
      %303 = vector.broadcast %301 : f32 to vector<16x16xf32>
      %304 = arith.mulf %303, %302 : vector<16x16xf32>
      %305 = arith.addf %298, %304 : vector<16x16xf32>
      %c22 = arith.constant 22 : index
      %306 = memref.load %arg2[%c22] : memref<98xf32, #tpu.memory_space<smem>>
      %307 = vector.extract_strided_slice %300 {offsets = [0, 1], sizes = [16, 16], strides = [1, 1]} : vector<16x22xf32> to vector<16x16xf32>
      %308 = vector.broadcast %306 : f32 to vector<16x16xf32>
      %309 = arith.mulf %308, %307 : vector<16x16xf32>
      %310 = arith.addf %305, %309 : vector<16x16xf32>
      %c23 = arith.constant 23 : index
      %311 = memref.load %arg2[%c23] : memref<98xf32, #tpu.memory_space<smem>>
      %312 = vector.extract_strided_slice %300 {offsets = [0, 2], sizes = [16, 16], strides = [1, 1]} : vector<16x22xf32> to vector<16x16xf32>
      %313 = vector.broadcast %311 : f32 to vector<16x16xf32>
      %314 = arith.mulf %313, %312 : vector<16x16xf32>
      %315 = arith.addf %310, %314 : vector<16x16xf32>
      %c24 = arith.constant 24 : index
      %316 = memref.load %arg2[%c24] : memref<98xf32, #tpu.memory_space<smem>>
      %317 = vector.extract_strided_slice %300 {offsets = [0, 3], sizes = [16, 16], strides = [1, 1]} : vector<16x22xf32> to vector<16x16xf32>
      %318 = vector.broadcast %316 : f32 to vector<16x16xf32>
      %319 = arith.mulf %318, %317 : vector<16x16xf32>
      %320 = arith.addf %315, %319 : vector<16x16xf32>
      %c25 = arith.constant 25 : index
      %321 = memref.load %arg2[%c25] : memref<98xf32, #tpu.memory_space<smem>>
      %322 = vector.extract_strided_slice %300 {offsets = [0, 4], sizes = [16, 16], strides = [1, 1]} : vector<16x22xf32> to vector<16x16xf32>
      %323 = vector.broadcast %321 : f32 to vector<16x16xf32>
      %324 = arith.mulf %323, %322 : vector<16x16xf32>
      %325 = arith.addf %320, %324 : vector<16x16xf32>
      %c26 = arith.constant 26 : index
      %326 = memref.load %arg2[%c26] : memref<98xf32, #tpu.memory_space<smem>>
      %327 = vector.extract_strided_slice %300 {offsets = [0, 5], sizes = [16, 16], strides = [1, 1]} : vector<16x22xf32> to vector<16x16xf32>
      %328 = vector.broadcast %326 : f32 to vector<16x16xf32>
      %329 = arith.mulf %328, %327 : vector<16x16xf32>
      %330 = arith.addf %325, %329 : vector<16x16xf32>
      %c27 = arith.constant 27 : index
      %331 = memref.load %arg2[%c27] : memref<98xf32, #tpu.memory_space<smem>>
      %332 = vector.extract_strided_slice %300 {offsets = [0, 6], sizes = [16, 16], strides = [1, 1]} : vector<16x22xf32> to vector<16x16xf32>
      %333 = vector.broadcast %331 : f32 to vector<16x16xf32>
      %334 = arith.mulf %333, %332 : vector<16x16xf32>
      %335 = arith.addf %330, %334 : vector<16x16xf32>
      %c0_205 = arith.constant 0 : index
      %c4_206 = arith.constant 4 : index
      %c0_207 = arith.constant 0 : index
      %336 = vector.load %arg8[%c0_205, %c4_206, %c0_207] : memref<2x22x22xf32, #tpu.memory_space<vmem>>, vector<1x16x22xf32>
      %337 = vector.shape_cast %336 : vector<1x16x22xf32> to vector<16x22xf32>
      %c28 = arith.constant 28 : index
      %338 = memref.load %arg2[%c28] : memref<98xf32, #tpu.memory_space<smem>>
      %339 = vector.extract_strided_slice %337 {offsets = [0, 0], sizes = [16, 16], strides = [1, 1]} : vector<16x22xf32> to vector<16x16xf32>
      %340 = vector.broadcast %338 : f32 to vector<16x16xf32>
      %341 = arith.mulf %340, %339 : vector<16x16xf32>
      %342 = arith.addf %335, %341 : vector<16x16xf32>
      %c29 = arith.constant 29 : index
      %343 = memref.load %arg2[%c29] : memref<98xf32, #tpu.memory_space<smem>>
      %344 = vector.extract_strided_slice %337 {offsets = [0, 1], sizes = [16, 16], strides = [1, 1]} : vector<16x22xf32> to vector<16x16xf32>
      %345 = vector.broadcast %343 : f32 to vector<16x16xf32>
      %346 = arith.mulf %345, %344 : vector<16x16xf32>
      %347 = arith.addf %342, %346 : vector<16x16xf32>
      %c30 = arith.constant 30 : index
      %348 = memref.load %arg2[%c30] : memref<98xf32, #tpu.memory_space<smem>>
      %349 = vector.extract_strided_slice %337 {offsets = [0, 2], sizes = [16, 16], strides = [1, 1]} : vector<16x22xf32> to vector<16x16xf32>
      %350 = vector.broadcast %348 : f32 to vector<16x16xf32>
      %351 = arith.mulf %350, %349 : vector<16x16xf32>
      %352 = arith.addf %347, %351 : vector<16x16xf32>
      %c31 = arith.constant 31 : index
      %353 = memref.load %arg2[%c31] : memref<98xf32, #tpu.memory_space<smem>>
      %354 = vector.extract_strided_slice %337 {offsets = [0, 3], sizes = [16, 16], strides = [1, 1]} : vector<16x22xf32> to vector<16x16xf32>
      %355 = vector.broadcast %353 : f32 to vector<16x16xf32>
      %356 = arith.mulf %355, %354 : vector<16x16xf32>
      %357 = arith.addf %352, %356 : vector<16x16xf32>
      %c32_208 = arith.constant 32 : index
      %358 = memref.load %arg2[%c32_208] : memref<98xf32, #tpu.memory_space<smem>>
      %359 = vector.extract_strided_slice %337 {offsets = [0, 4], sizes = [16, 16], strides = [1, 1]} : vector<16x22xf32> to vector<16x16xf32>
      %360 = vector.broadcast %358 : f32 to vector<16x16xf32>
      %361 = arith.mulf %360, %359 : vector<16x16xf32>
      %362 = arith.addf %357, %361 : vector<16x16xf32>
      %c33 = arith.constant 33 : index
      %363 = memref.load %arg2[%c33] : memref<98xf32, #tpu.memory_space<smem>>
      %364 = vector.extract_strided_slice %337 {offsets = [0, 5], sizes = [16, 16], strides = [1, 1]} : vector<16x22xf32> to vector<16x16xf32>
      %365 = vector.broadcast %363 : f32 to vector<16x16xf32>
      %366 = arith.mulf %365, %364 : vector<16x16xf32>
      %367 = arith.addf %362, %366 : vector<16x16xf32>
      %c34 = arith.constant 34 : index
      %368 = memref.load %arg2[%c34] : memref<98xf32, #tpu.memory_space<smem>>
      %369 = vector.extract_strided_slice %337 {offsets = [0, 6], sizes = [16, 16], strides = [1, 1]} : vector<16x22xf32> to vector<16x16xf32>
      %370 = vector.broadcast %368 : f32 to vector<16x16xf32>
      %371 = arith.mulf %370, %369 : vector<16x16xf32>
      %372 = arith.addf %367, %371 : vector<16x16xf32>
      %c0_209 = arith.constant 0 : index
      %c5_210 = arith.constant 5 : index
      %c0_211 = arith.constant 0 : index
      %373 = vector.load %arg8[%c0_209, %c5_210, %c0_211] : memref<2x22x22xf32, #tpu.memory_space<vmem>>, vector<1x16x22xf32>
      %374 = vector.shape_cast %373 : vector<1x16x22xf32> to vector<16x22xf32>
      %c35 = arith.constant 35 : index
      %375 = memref.load %arg2[%c35] : memref<98xf32, #tpu.memory_space<smem>>
      %376 = vector.extract_strided_slice %374 {offsets = [0, 0], sizes = [16, 16], strides = [1, 1]} : vector<16x22xf32> to vector<16x16xf32>
      %377 = vector.broadcast %375 : f32 to vector<16x16xf32>
      %378 = arith.mulf %377, %376 : vector<16x16xf32>
      %379 = arith.addf %372, %378 : vector<16x16xf32>
      %c36 = arith.constant 36 : index
      %380 = memref.load %arg2[%c36] : memref<98xf32, #tpu.memory_space<smem>>
      %381 = vector.extract_strided_slice %374 {offsets = [0, 1], sizes = [16, 16], strides = [1, 1]} : vector<16x22xf32> to vector<16x16xf32>
      %382 = vector.broadcast %380 : f32 to vector<16x16xf32>
      %383 = arith.mulf %382, %381 : vector<16x16xf32>
      %384 = arith.addf %379, %383 : vector<16x16xf32>
      %c37 = arith.constant 37 : index
      %385 = memref.load %arg2[%c37] : memref<98xf32, #tpu.memory_space<smem>>
      %386 = vector.extract_strided_slice %374 {offsets = [0, 2], sizes = [16, 16], strides = [1, 1]} : vector<16x22xf32> to vector<16x16xf32>
      %387 = vector.broadcast %385 : f32 to vector<16x16xf32>
      %388 = arith.mulf %387, %386 : vector<16x16xf32>
      %389 = arith.addf %384, %388 : vector<16x16xf32>
      %c38 = arith.constant 38 : index
      %390 = memref.load %arg2[%c38] : memref<98xf32, #tpu.memory_space<smem>>
      %391 = vector.extract_strided_slice %374 {offsets = [0, 3], sizes = [16, 16], strides = [1, 1]} : vector<16x22xf32> to vector<16x16xf32>
      %392 = vector.broadcast %390 : f32 to vector<16x16xf32>
      %393 = arith.mulf %392, %391 : vector<16x16xf32>
      %394 = arith.addf %389, %393 : vector<16x16xf32>
      %c39 = arith.constant 39 : index
      %395 = memref.load %arg2[%c39] : memref<98xf32, #tpu.memory_space<smem>>
      %396 = vector.extract_strided_slice %374 {offsets = [0, 4], sizes = [16, 16], strides = [1, 1]} : vector<16x22xf32> to vector<16x16xf32>
      %397 = vector.broadcast %395 : f32 to vector<16x16xf32>
      %398 = arith.mulf %397, %396 : vector<16x16xf32>
      %399 = arith.addf %394, %398 : vector<16x16xf32>
      %c40 = arith.constant 40 : index
      %400 = memref.load %arg2[%c40] : memref<98xf32, #tpu.memory_space<smem>>
      %401 = vector.extract_strided_slice %374 {offsets = [0, 5], sizes = [16, 16], strides = [1, 1]} : vector<16x22xf32> to vector<16x16xf32>
      %402 = vector.broadcast %400 : f32 to vector<16x16xf32>
      %403 = arith.mulf %402, %401 : vector<16x16xf32>
      %404 = arith.addf %399, %403 : vector<16x16xf32>
      %c41 = arith.constant 41 : index
      %405 = memref.load %arg2[%c41] : memref<98xf32, #tpu.memory_space<smem>>
      %406 = vector.extract_strided_slice %374 {offsets = [0, 6], sizes = [16, 16], strides = [1, 1]} : vector<16x22xf32> to vector<16x16xf32>
      %407 = vector.broadcast %405 : f32 to vector<16x16xf32>
      %408 = arith.mulf %407, %406 : vector<16x16xf32>
      %409 = arith.addf %404, %408 : vector<16x16xf32>
      %c0_212 = arith.constant 0 : index
      %c6_213 = arith.constant 6 : index
      %c0_214 = arith.constant 0 : index
      %410 = vector.load %arg8[%c0_212, %c6_213, %c0_214] : memref<2x22x22xf32, #tpu.memory_space<vmem>>, vector<1x16x22xf32>
      %411 = vector.shape_cast %410 : vector<1x16x22xf32> to vector<16x22xf32>
      %c42 = arith.constant 42 : index
      %412 = memref.load %arg2[%c42] : memref<98xf32, #tpu.memory_space<smem>>
      %413 = vector.extract_strided_slice %411 {offsets = [0, 0], sizes = [16, 16], strides = [1, 1]} : vector<16x22xf32> to vector<16x16xf32>
      %414 = vector.broadcast %412 : f32 to vector<16x16xf32>
      %415 = arith.mulf %414, %413 : vector<16x16xf32>
      %416 = arith.addf %409, %415 : vector<16x16xf32>
      %c43 = arith.constant 43 : index
      %417 = memref.load %arg2[%c43] : memref<98xf32, #tpu.memory_space<smem>>
      %418 = vector.extract_strided_slice %411 {offsets = [0, 1], sizes = [16, 16], strides = [1, 1]} : vector<16x22xf32> to vector<16x16xf32>
      %419 = vector.broadcast %417 : f32 to vector<16x16xf32>
      %420 = arith.mulf %419, %418 : vector<16x16xf32>
      %421 = arith.addf %416, %420 : vector<16x16xf32>
      %c44 = arith.constant 44 : index
      %422 = memref.load %arg2[%c44] : memref<98xf32, #tpu.memory_space<smem>>
      %423 = vector.extract_strided_slice %411 {offsets = [0, 2], sizes = [16, 16], strides = [1, 1]} : vector<16x22xf32> to vector<16x16xf32>
      %424 = vector.broadcast %422 : f32 to vector<16x16xf32>
      %425 = arith.mulf %424, %423 : vector<16x16xf32>
      %426 = arith.addf %421, %425 : vector<16x16xf32>
      %c45 = arith.constant 45 : index
      %427 = memref.load %arg2[%c45] : memref<98xf32, #tpu.memory_space<smem>>
      %428 = vector.extract_strided_slice %411 {offsets = [0, 3], sizes = [16, 16], strides = [1, 1]} : vector<16x22xf32> to vector<16x16xf32>
      %429 = vector.broadcast %427 : f32 to vector<16x16xf32>
      %430 = arith.mulf %429, %428 : vector<16x16xf32>
      %431 = arith.addf %426, %430 : vector<16x16xf32>
      %c46 = arith.constant 46 : index
      %432 = memref.load %arg2[%c46] : memref<98xf32, #tpu.memory_space<smem>>
      %433 = vector.extract_strided_slice %411 {offsets = [0, 4], sizes = [16, 16], strides = [1, 1]} : vector<16x22xf32> to vector<16x16xf32>
      %434 = vector.broadcast %432 : f32 to vector<16x16xf32>
      %435 = arith.mulf %434, %433 : vector<16x16xf32>
      %436 = arith.addf %431, %435 : vector<16x16xf32>
      %c47 = arith.constant 47 : index
      %437 = memref.load %arg2[%c47] : memref<98xf32, #tpu.memory_space<smem>>
      %438 = vector.extract_strided_slice %411 {offsets = [0, 5], sizes = [16, 16], strides = [1, 1]} : vector<16x22xf32> to vector<16x16xf32>
      %439 = vector.broadcast %437 : f32 to vector<16x16xf32>
      %440 = arith.mulf %439, %438 : vector<16x16xf32>
      %441 = arith.addf %436, %440 : vector<16x16xf32>
      %c48_215 = arith.constant 48 : index
      %442 = memref.load %arg2[%c48_215] : memref<98xf32, #tpu.memory_space<smem>>
      %443 = vector.extract_strided_slice %411 {offsets = [0, 6], sizes = [16, 16], strides = [1, 1]} : vector<16x22xf32> to vector<16x16xf32>
      %444 = vector.broadcast %442 : f32 to vector<16x16xf32>
      %445 = arith.mulf %444, %443 : vector<16x16xf32>
      %446 = arith.addf %441, %445 : vector<16x16xf32>
      %c1_216 = arith.constant 1 : index
      %c0_217 = arith.constant 0 : index
      %c0_218 = arith.constant 0 : index
      %447 = vector.load %arg8[%c1_216, %c0_217, %c0_218] : memref<2x22x22xf32, #tpu.memory_space<vmem>>, vector<1x16x22xf32>
      %448 = vector.shape_cast %447 : vector<1x16x22xf32> to vector<16x22xf32>
      %c49 = arith.constant 49 : index
      %449 = memref.load %arg2[%c49] : memref<98xf32, #tpu.memory_space<smem>>
      %450 = vector.extract_strided_slice %448 {offsets = [0, 0], sizes = [16, 16], strides = [1, 1]} : vector<16x22xf32> to vector<16x16xf32>
      %451 = vector.broadcast %449 : f32 to vector<16x16xf32>
      %452 = arith.mulf %451, %450 : vector<16x16xf32>
      %c50 = arith.constant 50 : index
      %453 = memref.load %arg2[%c50] : memref<98xf32, #tpu.memory_space<smem>>
      %454 = vector.extract_strided_slice %448 {offsets = [0, 1], sizes = [16, 16], strides = [1, 1]} : vector<16x22xf32> to vector<16x16xf32>
      %455 = vector.broadcast %453 : f32 to vector<16x16xf32>
      %456 = arith.mulf %455, %454 : vector<16x16xf32>
      %457 = arith.addf %452, %456 : vector<16x16xf32>
      %c51 = arith.constant 51 : index
      %458 = memref.load %arg2[%c51] : memref<98xf32, #tpu.memory_space<smem>>
      %459 = vector.extract_strided_slice %448 {offsets = [0, 2], sizes = [16, 16], strides = [1, 1]} : vector<16x22xf32> to vector<16x16xf32>
      %460 = vector.broadcast %458 : f32 to vector<16x16xf32>
      %461 = arith.mulf %460, %459 : vector<16x16xf32>
      %462 = arith.addf %457, %461 : vector<16x16xf32>
      %c52 = arith.constant 52 : index
      %463 = memref.load %arg2[%c52] : memref<98xf32, #tpu.memory_space<smem>>
      %464 = vector.extract_strided_slice %448 {offsets = [0, 3], sizes = [16, 16], strides = [1, 1]} : vector<16x22xf32> to vector<16x16xf32>
      %465 = vector.broadcast %463 : f32 to vector<16x16xf32>
      %466 = arith.mulf %465, %464 : vector<16x16xf32>
      %467 = arith.addf %462, %466 : vector<16x16xf32>
      %c53 = arith.constant 53 : index
      %468 = memref.load %arg2[%c53] : memref<98xf32, #tpu.memory_space<smem>>
      %469 = vector.extract_strided_slice %448 {offsets = [0, 4], sizes = [16, 16], strides = [1, 1]} : vector<16x22xf32> to vector<16x16xf32>
      %470 = vector.broadcast %468 : f32 to vector<16x16xf32>
      %471 = arith.mulf %470, %469 : vector<16x16xf32>
      %472 = arith.addf %467, %471 : vector<16x16xf32>
      %c54 = arith.constant 54 : index
      %473 = memref.load %arg2[%c54] : memref<98xf32, #tpu.memory_space<smem>>
      %474 = vector.extract_strided_slice %448 {offsets = [0, 5], sizes = [16, 16], strides = [1, 1]} : vector<16x22xf32> to vector<16x16xf32>
      %475 = vector.broadcast %473 : f32 to vector<16x16xf32>
      %476 = arith.mulf %475, %474 : vector<16x16xf32>
      %477 = arith.addf %472, %476 : vector<16x16xf32>
      %c55 = arith.constant 55 : index
      %478 = memref.load %arg2[%c55] : memref<98xf32, #tpu.memory_space<smem>>
      %479 = vector.extract_strided_slice %448 {offsets = [0, 6], sizes = [16, 16], strides = [1, 1]} : vector<16x22xf32> to vector<16x16xf32>
      %480 = vector.broadcast %478 : f32 to vector<16x16xf32>
      %481 = arith.mulf %480, %479 : vector<16x16xf32>
      %482 = arith.addf %477, %481 : vector<16x16xf32>
      %c1_219 = arith.constant 1 : index
      %c1_220 = arith.constant 1 : index
      %c0_221 = arith.constant 0 : index
      %483 = vector.load %arg8[%c1_219, %c1_220, %c0_221] : memref<2x22x22xf32, #tpu.memory_space<vmem>>, vector<1x16x22xf32>
      %484 = vector.shape_cast %483 : vector<1x16x22xf32> to vector<16x22xf32>
      %c56 = arith.constant 56 : index
      %485 = memref.load %arg2[%c56] : memref<98xf32, #tpu.memory_space<smem>>
      %486 = vector.extract_strided_slice %484 {offsets = [0, 0], sizes = [16, 16], strides = [1, 1]} : vector<16x22xf32> to vector<16x16xf32>
      %487 = vector.broadcast %485 : f32 to vector<16x16xf32>
      %488 = arith.mulf %487, %486 : vector<16x16xf32>
      %489 = arith.addf %482, %488 : vector<16x16xf32>
      %c57 = arith.constant 57 : index
      %490 = memref.load %arg2[%c57] : memref<98xf32, #tpu.memory_space<smem>>
      %491 = vector.extract_strided_slice %484 {offsets = [0, 1], sizes = [16, 16], strides = [1, 1]} : vector<16x22xf32> to vector<16x16xf32>
      %492 = vector.broadcast %490 : f32 to vector<16x16xf32>
      %493 = arith.mulf %492, %491 : vector<16x16xf32>
      %494 = arith.addf %489, %493 : vector<16x16xf32>
      %c58 = arith.constant 58 : index
      %495 = memref.load %arg2[%c58] : memref<98xf32, #tpu.memory_space<smem>>
      %496 = vector.extract_strided_slice %484 {offsets = [0, 2], sizes = [16, 16], strides = [1, 1]} : vector<16x22xf32> to vector<16x16xf32>
      %497 = vector.broadcast %495 : f32 to vector<16x16xf32>
      %498 = arith.mulf %497, %496 : vector<16x16xf32>
      %499 = arith.addf %494, %498 : vector<16x16xf32>
      %c59 = arith.constant 59 : index
      %500 = memref.load %arg2[%c59] : memref<98xf32, #tpu.memory_space<smem>>
      %501 = vector.extract_strided_slice %484 {offsets = [0, 3], sizes = [16, 16], strides = [1, 1]} : vector<16x22xf32> to vector<16x16xf32>
      %502 = vector.broadcast %500 : f32 to vector<16x16xf32>
      %503 = arith.mulf %502, %501 : vector<16x16xf32>
      %504 = arith.addf %499, %503 : vector<16x16xf32>
      %c60 = arith.constant 60 : index
      %505 = memref.load %arg2[%c60] : memref<98xf32, #tpu.memory_space<smem>>
      %506 = vector.extract_strided_slice %484 {offsets = [0, 4], sizes = [16, 16], strides = [1, 1]} : vector<16x22xf32> to vector<16x16xf32>
      %507 = vector.broadcast %505 : f32 to vector<16x16xf32>
      %508 = arith.mulf %507, %506 : vector<16x16xf32>
      %509 = arith.addf %504, %508 : vector<16x16xf32>
      %c61 = arith.constant 61 : index
      %510 = memref.load %arg2[%c61] : memref<98xf32, #tpu.memory_space<smem>>
      %511 = vector.extract_strided_slice %484 {offsets = [0, 5], sizes = [16, 16], strides = [1, 1]} : vector<16x22xf32> to vector<16x16xf32>
      %512 = vector.broadcast %510 : f32 to vector<16x16xf32>
      %513 = arith.mulf %512, %511 : vector<16x16xf32>
      %514 = arith.addf %509, %513 : vector<16x16xf32>
      %c62 = arith.constant 62 : index
      %515 = memref.load %arg2[%c62] : memref<98xf32, #tpu.memory_space<smem>>
      %516 = vector.extract_strided_slice %484 {offsets = [0, 6], sizes = [16, 16], strides = [1, 1]} : vector<16x22xf32> to vector<16x16xf32>
      %517 = vector.broadcast %515 : f32 to vector<16x16xf32>
      %518 = arith.mulf %517, %516 : vector<16x16xf32>
      %519 = arith.addf %514, %518 : vector<16x16xf32>
      %c1_222 = arith.constant 1 : index
      %c2_223 = arith.constant 2 : index
      %c0_224 = arith.constant 0 : index
      %520 = vector.load %arg8[%c1_222, %c2_223, %c0_224] : memref<2x22x22xf32, #tpu.memory_space<vmem>>, vector<1x16x22xf32>
      %521 = vector.shape_cast %520 : vector<1x16x22xf32> to vector<16x22xf32>
      %c63 = arith.constant 63 : index
      %522 = memref.load %arg2[%c63] : memref<98xf32, #tpu.memory_space<smem>>
      %523 = vector.extract_strided_slice %521 {offsets = [0, 0], sizes = [16, 16], strides = [1, 1]} : vector<16x22xf32> to vector<16x16xf32>
      %524 = vector.broadcast %522 : f32 to vector<16x16xf32>
      %525 = arith.mulf %524, %523 : vector<16x16xf32>
      %526 = arith.addf %519, %525 : vector<16x16xf32>
      %c64_225 = arith.constant 64 : index
      %527 = memref.load %arg2[%c64_225] : memref<98xf32, #tpu.memory_space<smem>>
      %528 = vector.extract_strided_slice %521 {offsets = [0, 1], sizes = [16, 16], strides = [1, 1]} : vector<16x22xf32> to vector<16x16xf32>
      %529 = vector.broadcast %527 : f32 to vector<16x16xf32>
      %530 = arith.mulf %529, %528 : vector<16x16xf32>
      %531 = arith.addf %526, %530 : vector<16x16xf32>
      %c65 = arith.constant 65 : index
      %532 = memref.load %arg2[%c65] : memref<98xf32, #tpu.memory_space<smem>>
      %533 = vector.extract_strided_slice %521 {offsets = [0, 2], sizes = [16, 16], strides = [1, 1]} : vector<16x22xf32> to vector<16x16xf32>
      %534 = vector.broadcast %532 : f32 to vector<16x16xf32>
      %535 = arith.mulf %534, %533 : vector<16x16xf32>
      %536 = arith.addf %531, %535 : vector<16x16xf32>
      %c66 = arith.constant 66 : index
      %537 = memref.load %arg2[%c66] : memref<98xf32, #tpu.memory_space<smem>>
      %538 = vector.extract_strided_slice %521 {offsets = [0, 3], sizes = [16, 16], strides = [1, 1]} : vector<16x22xf32> to vector<16x16xf32>
      %539 = vector.broadcast %537 : f32 to vector<16x16xf32>
      %540 = arith.mulf %539, %538 : vector<16x16xf32>
      %541 = arith.addf %536, %540 : vector<16x16xf32>
      %c67 = arith.constant 67 : index
      %542 = memref.load %arg2[%c67] : memref<98xf32, #tpu.memory_space<smem>>
      %543 = vector.extract_strided_slice %521 {offsets = [0, 4], sizes = [16, 16], strides = [1, 1]} : vector<16x22xf32> to vector<16x16xf32>
      %544 = vector.broadcast %542 : f32 to vector<16x16xf32>
      %545 = arith.mulf %544, %543 : vector<16x16xf32>
      %546 = arith.addf %541, %545 : vector<16x16xf32>
      %c68 = arith.constant 68 : index
      %547 = memref.load %arg2[%c68] : memref<98xf32, #tpu.memory_space<smem>>
      %548 = vector.extract_strided_slice %521 {offsets = [0, 5], sizes = [16, 16], strides = [1, 1]} : vector<16x22xf32> to vector<16x16xf32>
      %549 = vector.broadcast %547 : f32 to vector<16x16xf32>
      %550 = arith.mulf %549, %548 : vector<16x16xf32>
      %551 = arith.addf %546, %550 : vector<16x16xf32>
      %c69 = arith.constant 69 : index
      %552 = memref.load %arg2[%c69] : memref<98xf32, #tpu.memory_space<smem>>
      %553 = vector.extract_strided_slice %521 {offsets = [0, 6], sizes = [16, 16], strides = [1, 1]} : vector<16x22xf32> to vector<16x16xf32>
      %554 = vector.broadcast %552 : f32 to vector<16x16xf32>
      %555 = arith.mulf %554, %553 : vector<16x16xf32>
      %556 = arith.addf %551, %555 : vector<16x16xf32>
      %c1_226 = arith.constant 1 : index
      %c3_227 = arith.constant 3 : index
      %c0_228 = arith.constant 0 : index
      %557 = vector.load %arg8[%c1_226, %c3_227, %c0_228] : memref<2x22x22xf32, #tpu.memory_space<vmem>>, vector<1x16x22xf32>
      %558 = vector.shape_cast %557 : vector<1x16x22xf32> to vector<16x22xf32>
      %c70 = arith.constant 70 : index
      %559 = memref.load %arg2[%c70] : memref<98xf32, #tpu.memory_space<smem>>
      %560 = vector.extract_strided_slice %558 {offsets = [0, 0], sizes = [16, 16], strides = [1, 1]} : vector<16x22xf32> to vector<16x16xf32>
      %561 = vector.broadcast %559 : f32 to vector<16x16xf32>
      %562 = arith.mulf %561, %560 : vector<16x16xf32>
      %563 = arith.addf %556, %562 : vector<16x16xf32>
      %c71 = arith.constant 71 : index
      %564 = memref.load %arg2[%c71] : memref<98xf32, #tpu.memory_space<smem>>
      %565 = vector.extract_strided_slice %558 {offsets = [0, 1], sizes = [16, 16], strides = [1, 1]} : vector<16x22xf32> to vector<16x16xf32>
      %566 = vector.broadcast %564 : f32 to vector<16x16xf32>
      %567 = arith.mulf %566, %565 : vector<16x16xf32>
      %568 = arith.addf %563, %567 : vector<16x16xf32>
      %c72 = arith.constant 72 : index
      %569 = memref.load %arg2[%c72] : memref<98xf32, #tpu.memory_space<smem>>
      %570 = vector.extract_strided_slice %558 {offsets = [0, 2], sizes = [16, 16], strides = [1, 1]} : vector<16x22xf32> to vector<16x16xf32>
      %571 = vector.broadcast %569 : f32 to vector<16x16xf32>
      %572 = arith.mulf %571, %570 : vector<16x16xf32>
      %573 = arith.addf %568, %572 : vector<16x16xf32>
      %c73 = arith.constant 73 : index
      %574 = memref.load %arg2[%c73] : memref<98xf32, #tpu.memory_space<smem>>
      %575 = vector.extract_strided_slice %558 {offsets = [0, 3], sizes = [16, 16], strides = [1, 1]} : vector<16x22xf32> to vector<16x16xf32>
      %576 = vector.broadcast %574 : f32 to vector<16x16xf32>
      %577 = arith.mulf %576, %575 : vector<16x16xf32>
      %578 = arith.addf %573, %577 : vector<16x16xf32>
      %c74 = arith.constant 74 : index
      %579 = memref.load %arg2[%c74] : memref<98xf32, #tpu.memory_space<smem>>
      %580 = vector.extract_strided_slice %558 {offsets = [0, 4], sizes = [16, 16], strides = [1, 1]} : vector<16x22xf32> to vector<16x16xf32>
      %581 = vector.broadcast %579 : f32 to vector<16x16xf32>
      %582 = arith.mulf %581, %580 : vector<16x16xf32>
      %583 = arith.addf %578, %582 : vector<16x16xf32>
      %c75 = arith.constant 75 : index
      %584 = memref.load %arg2[%c75] : memref<98xf32, #tpu.memory_space<smem>>
      %585 = vector.extract_strided_slice %558 {offsets = [0, 5], sizes = [16, 16], strides = [1, 1]} : vector<16x22xf32> to vector<16x16xf32>
      %586 = vector.broadcast %584 : f32 to vector<16x16xf32>
      %587 = arith.mulf %586, %585 : vector<16x16xf32>
      %588 = arith.addf %583, %587 : vector<16x16xf32>
      %c76 = arith.constant 76 : index
      %589 = memref.load %arg2[%c76] : memref<98xf32, #tpu.memory_space<smem>>
      %590 = vector.extract_strided_slice %558 {offsets = [0, 6], sizes = [16, 16], strides = [1, 1]} : vector<16x22xf32> to vector<16x16xf32>
      %591 = vector.broadcast %589 : f32 to vector<16x16xf32>
      %592 = arith.mulf %591, %590 : vector<16x16xf32>
      %593 = arith.addf %588, %592 : vector<16x16xf32>
      %c1_229 = arith.constant 1 : index
      %c4_230 = arith.constant 4 : index
      %c0_231 = arith.constant 0 : index
      %594 = vector.load %arg8[%c1_229, %c4_230, %c0_231] : memref<2x22x22xf32, #tpu.memory_space<vmem>>, vector<1x16x22xf32>
      %595 = vector.shape_cast %594 : vector<1x16x22xf32> to vector<16x22xf32>
      %c77 = arith.constant 77 : index
      %596 = memref.load %arg2[%c77] : memref<98xf32, #tpu.memory_space<smem>>
      %597 = vector.extract_strided_slice %595 {offsets = [0, 0], sizes = [16, 16], strides = [1, 1]} : vector<16x22xf32> to vector<16x16xf32>
      %598 = vector.broadcast %596 : f32 to vector<16x16xf32>
      %599 = arith.mulf %598, %597 : vector<16x16xf32>
      %600 = arith.addf %593, %599 : vector<16x16xf32>
      %c78 = arith.constant 78 : index
      %601 = memref.load %arg2[%c78] : memref<98xf32, #tpu.memory_space<smem>>
      %602 = vector.extract_strided_slice %595 {offsets = [0, 1], sizes = [16, 16], strides = [1, 1]} : vector<16x22xf32> to vector<16x16xf32>
      %603 = vector.broadcast %601 : f32 to vector<16x16xf32>
      %604 = arith.mulf %603, %602 : vector<16x16xf32>
      %605 = arith.addf %600, %604 : vector<16x16xf32>
      %c79 = arith.constant 79 : index
      %606 = memref.load %arg2[%c79] : memref<98xf32, #tpu.memory_space<smem>>
      %607 = vector.extract_strided_slice %595 {offsets = [0, 2], sizes = [16, 16], strides = [1, 1]} : vector<16x22xf32> to vector<16x16xf32>
      %608 = vector.broadcast %606 : f32 to vector<16x16xf32>
      %609 = arith.mulf %608, %607 : vector<16x16xf32>
      %610 = arith.addf %605, %609 : vector<16x16xf32>
      %c80_232 = arith.constant 80 : index
      %611 = memref.load %arg2[%c80_232] : memref<98xf32, #tpu.memory_space<smem>>
      %612 = vector.extract_strided_slice %595 {offsets = [0, 3], sizes = [16, 16], strides = [1, 1]} : vector<16x22xf32> to vector<16x16xf32>
      %613 = vector.broadcast %611 : f32 to vector<16x16xf32>
      %614 = arith.mulf %613, %612 : vector<16x16xf32>
      %615 = arith.addf %610, %614 : vector<16x16xf32>
      %c81 = arith.constant 81 : index
      %616 = memref.load %arg2[%c81] : memref<98xf32, #tpu.memory_space<smem>>
      %617 = vector.extract_strided_slice %595 {offsets = [0, 4], sizes = [16, 16], strides = [1, 1]} : vector<16x22xf32> to vector<16x16xf32>
      %618 = vector.broadcast %616 : f32 to vector<16x16xf32>
      %619 = arith.mulf %618, %617 : vector<16x16xf32>
      %620 = arith.addf %615, %619 : vector<16x16xf32>
      %c82 = arith.constant 82 : index
      %621 = memref.load %arg2[%c82] : memref<98xf32, #tpu.memory_space<smem>>
      %622 = vector.extract_strided_slice %595 {offsets = [0, 5], sizes = [16, 16], strides = [1, 1]} : vector<16x22xf32> to vector<16x16xf32>
      %623 = vector.broadcast %621 : f32 to vector<16x16xf32>
      %624 = arith.mulf %623, %622 : vector<16x16xf32>
      %625 = arith.addf %620, %624 : vector<16x16xf32>
      %c83 = arith.constant 83 : index
      %626 = memref.load %arg2[%c83] : memref<98xf32, #tpu.memory_space<smem>>
      %627 = vector.extract_strided_slice %595 {offsets = [0, 6], sizes = [16, 16], strides = [1, 1]} : vector<16x22xf32> to vector<16x16xf32>
      %628 = vector.broadcast %626 : f32 to vector<16x16xf32>
      %629 = arith.mulf %628, %627 : vector<16x16xf32>
      %630 = arith.addf %625, %629 : vector<16x16xf32>
      %c1_233 = arith.constant 1 : index
      %c5_234 = arith.constant 5 : index
      %c0_235 = arith.constant 0 : index
      %631 = vector.load %arg8[%c1_233, %c5_234, %c0_235] : memref<2x22x22xf32, #tpu.memory_space<vmem>>, vector<1x16x22xf32>
      %632 = vector.shape_cast %631 : vector<1x16x22xf32> to vector<16x22xf32>
      %c84 = arith.constant 84 : index
      %633 = memref.load %arg2[%c84] : memref<98xf32, #tpu.memory_space<smem>>
      %634 = vector.extract_strided_slice %632 {offsets = [0, 0], sizes = [16, 16], strides = [1, 1]} : vector<16x22xf32> to vector<16x16xf32>
      %635 = vector.broadcast %633 : f32 to vector<16x16xf32>
      %636 = arith.mulf %635, %634 : vector<16x16xf32>
      %637 = arith.addf %630, %636 : vector<16x16xf32>
      %c85 = arith.constant 85 : index
      %638 = memref.load %arg2[%c85] : memref<98xf32, #tpu.memory_space<smem>>
      %639 = vector.extract_strided_slice %632 {offsets = [0, 1], sizes = [16, 16], strides = [1, 1]} : vector<16x22xf32> to vector<16x16xf32>
      %640 = vector.broadcast %638 : f32 to vector<16x16xf32>
      %641 = arith.mulf %640, %639 : vector<16x16xf32>
      %642 = arith.addf %637, %641 : vector<16x16xf32>
      %c86 = arith.constant 86 : index
      %643 = memref.load %arg2[%c86] : memref<98xf32, #tpu.memory_space<smem>>
      %644 = vector.extract_strided_slice %632 {offsets = [0, 2], sizes = [16, 16], strides = [1, 1]} : vector<16x22xf32> to vector<16x16xf32>
      %645 = vector.broadcast %643 : f32 to vector<16x16xf32>
      %646 = arith.mulf %645, %644 : vector<16x16xf32>
      %647 = arith.addf %642, %646 : vector<16x16xf32>
      %c87 = arith.constant 87 : index
      %648 = memref.load %arg2[%c87] : memref<98xf32, #tpu.memory_space<smem>>
      %649 = vector.extract_strided_slice %632 {offsets = [0, 3], sizes = [16, 16], strides = [1, 1]} : vector<16x22xf32> to vector<16x16xf32>
      %650 = vector.broadcast %648 : f32 to vector<16x16xf32>
      %651 = arith.mulf %650, %649 : vector<16x16xf32>
      %652 = arith.addf %647, %651 : vector<16x16xf32>
      %c88 = arith.constant 88 : index
      %653 = memref.load %arg2[%c88] : memref<98xf32, #tpu.memory_space<smem>>
      %654 = vector.extract_strided_slice %632 {offsets = [0, 4], sizes = [16, 16], strides = [1, 1]} : vector<16x22xf32> to vector<16x16xf32>
      %655 = vector.broadcast %653 : f32 to vector<16x16xf32>
      %656 = arith.mulf %655, %654 : vector<16x16xf32>
      %657 = arith.addf %652, %656 : vector<16x16xf32>
      %c89 = arith.constant 89 : index
      %658 = memref.load %arg2[%c89] : memref<98xf32, #tpu.memory_space<smem>>
      %659 = vector.extract_strided_slice %632 {offsets = [0, 5], sizes = [16, 16], strides = [1, 1]} : vector<16x22xf32> to vector<16x16xf32>
      %660 = vector.broadcast %658 : f32 to vector<16x16xf32>
      %661 = arith.mulf %660, %659 : vector<16x16xf32>
      %662 = arith.addf %657, %661 : vector<16x16xf32>
      %c90 = arith.constant 90 : index
      %663 = memref.load %arg2[%c90] : memref<98xf32, #tpu.memory_space<smem>>
      %664 = vector.extract_strided_slice %632 {offsets = [0, 6], sizes = [16, 16], strides = [1, 1]} : vector<16x22xf32> to vector<16x16xf32>
      %665 = vector.broadcast %663 : f32 to vector<16x16xf32>
      %666 = arith.mulf %665, %664 : vector<16x16xf32>
      %667 = arith.addf %662, %666 : vector<16x16xf32>
      %c1_236 = arith.constant 1 : index
      %c6_237 = arith.constant 6 : index
      %c0_238 = arith.constant 0 : index
      %668 = vector.load %arg8[%c1_236, %c6_237, %c0_238] : memref<2x22x22xf32, #tpu.memory_space<vmem>>, vector<1x16x22xf32>
      %669 = vector.shape_cast %668 : vector<1x16x22xf32> to vector<16x22xf32>
      %c91 = arith.constant 91 : index
      %670 = memref.load %arg2[%c91] : memref<98xf32, #tpu.memory_space<smem>>
      %671 = vector.extract_strided_slice %669 {offsets = [0, 0], sizes = [16, 16], strides = [1, 1]} : vector<16x22xf32> to vector<16x16xf32>
      %672 = vector.broadcast %670 : f32 to vector<16x16xf32>
      %673 = arith.mulf %672, %671 : vector<16x16xf32>
      %674 = arith.addf %667, %673 : vector<16x16xf32>
      %c92 = arith.constant 92 : index
      %675 = memref.load %arg2[%c92] : memref<98xf32, #tpu.memory_space<smem>>
      %676 = vector.extract_strided_slice %669 {offsets = [0, 1], sizes = [16, 16], strides = [1, 1]} : vector<16x22xf32> to vector<16x16xf32>
      %677 = vector.broadcast %675 : f32 to vector<16x16xf32>
      %678 = arith.mulf %677, %676 : vector<16x16xf32>
      %679 = arith.addf %674, %678 : vector<16x16xf32>
      %c93 = arith.constant 93 : index
      %680 = memref.load %arg2[%c93] : memref<98xf32, #tpu.memory_space<smem>>
      %681 = vector.extract_strided_slice %669 {offsets = [0, 2], sizes = [16, 16], strides = [1, 1]} : vector<16x22xf32> to vector<16x16xf32>
      %682 = vector.broadcast %680 : f32 to vector<16x16xf32>
      %683 = arith.mulf %682, %681 : vector<16x16xf32>
      %684 = arith.addf %679, %683 : vector<16x16xf32>
      %c94 = arith.constant 94 : index
      %685 = memref.load %arg2[%c94] : memref<98xf32, #tpu.memory_space<smem>>
      %686 = vector.extract_strided_slice %669 {offsets = [0, 3], sizes = [16, 16], strides = [1, 1]} : vector<16x22xf32> to vector<16x16xf32>
      %687 = vector.broadcast %685 : f32 to vector<16x16xf32>
      %688 = arith.mulf %687, %686 : vector<16x16xf32>
      %689 = arith.addf %684, %688 : vector<16x16xf32>
      %c95 = arith.constant 95 : index
      %690 = memref.load %arg2[%c95] : memref<98xf32, #tpu.memory_space<smem>>
      %691 = vector.extract_strided_slice %669 {offsets = [0, 4], sizes = [16, 16], strides = [1, 1]} : vector<16x22xf32> to vector<16x16xf32>
      %692 = vector.broadcast %690 : f32 to vector<16x16xf32>
      %693 = arith.mulf %692, %691 : vector<16x16xf32>
      %694 = arith.addf %689, %693 : vector<16x16xf32>
      %c96_239 = arith.constant 96 : index
      %695 = memref.load %arg2[%c96_239] : memref<98xf32, #tpu.memory_space<smem>>
      %696 = vector.extract_strided_slice %669 {offsets = [0, 5], sizes = [16, 16], strides = [1, 1]} : vector<16x22xf32> to vector<16x16xf32>
      %697 = vector.broadcast %695 : f32 to vector<16x16xf32>
      %698 = arith.mulf %697, %696 : vector<16x16xf32>
      %699 = arith.addf %694, %698 : vector<16x16xf32>
      %c97 = arith.constant 97 : index
      %700 = memref.load %arg2[%c97] : memref<98xf32, #tpu.memory_space<smem>>
      %701 = vector.extract_strided_slice %669 {offsets = [0, 6], sizes = [16, 16], strides = [1, 1]} : vector<16x22xf32> to vector<16x16xf32>
      %702 = vector.broadcast %700 : f32 to vector<16x16xf32>
      %703 = arith.mulf %702, %701 : vector<16x16xf32>
      %704 = arith.addf %699, %703 : vector<16x16xf32>
      %705 = arith.addf %446, %704 : vector<16x16xf32>
      %c0_240 = arith.constant 0 : index
      %706 = memref.load %arg3[%c0_240] : memref<1xf32, #tpu.memory_space<smem>>
      %707 = vector.broadcast %706 : f32 to vector<16x16xf32>
      %708 = arith.addf %705, %707 : vector<16x16xf32>
      %709 = arith.negf %708 : vector<16x16xf32>
      %710 = math.exp %709 : vector<16x16xf32>
      %cst_241 = arith.constant 1.000000e+00 : f32
      %711 = vector.broadcast %cst_241 : f32 to vector<16x16xf32>
      %712 = arith.addf %711, %710 : vector<16x16xf32>
      %713 = arith.divf %711, %712 : vector<16x16xf32>
      %714 = vector.extract_strided_slice %713 {offsets = [0, 0], sizes = [1, 16], strides = [1, 1]} : vector<16x16xf32> to vector<1x16xf32>
      %c0_242 = arith.constant 0 : index
      %c0_243 = arith.constant 0 : index
      %c0_244 = arith.constant 0 : index
      %715 = vector.load %arg5[%c0_242, %c0_243, %c0_244] : memref<1x1x256xf32, #tpu.memory_space<vmem>>, vector<1x1x16xf32>
      %716 = vector.shape_cast %715 : vector<1x1x16xf32> to vector<1x16xf32>
      %717 = vector.shape_cast %714 : vector<1x16xf32> to vector<1x1x16xf32>
      tpu.vector_store %arg5[%c0_242, %c0_243, %c0_244], %717 {strides = array<i32>} : memref<1x1x256xf32, #tpu.memory_space<vmem>>, vector<1x1x16xf32>,
      %718 = vector.extract_strided_slice %713 {offsets = [1, 0], sizes = [1, 16], strides = [1, 1]} : vector<16x16xf32> to vector<1x16xf32>
      %c0_245 = arith.constant 0 : index
      %c0_246 = arith.constant 0 : index
      %c16_247 = arith.constant 16 : index
      %719 = vector.load %arg5[%c0_245, %c0_246, %c16_247] : memref<1x1x256xf32, #tpu.memory_space<vmem>>, vector<1x1x16xf32>
      %720 = vector.shape_cast %719 : vector<1x1x16xf32> to vector<1x16xf32>
      %721 = vector.shape_cast %718 : vector<1x16xf32> to vector<1x1x16xf32>
      tpu.vector_store %arg5[%c0_245, %c0_246, %c16_247], %721 {strides = array<i32>} : memref<1x1x256xf32, #tpu.memory_space<vmem>>, vector<1x1x16xf32>,
      %722 = vector.extract_strided_slice %713 {offsets = [2, 0], sizes = [1, 16], strides = [1, 1]} : vector<16x16xf32> to vector<1x16xf32>
      %c0_248 = arith.constant 0 : index
      %c0_249 = arith.constant 0 : index
      %c32_250 = arith.constant 32 : index
      %723 = vector.load %arg5[%c0_248, %c0_249, %c32_250] : memref<1x1x256xf32, #tpu.memory_space<vmem>>, vector<1x1x16xf32>
      %724 = vector.shape_cast %723 : vector<1x1x16xf32> to vector<1x16xf32>
      %725 = vector.shape_cast %722 : vector<1x16xf32> to vector<1x1x16xf32>
      tpu.vector_store %arg5[%c0_248, %c0_249, %c32_250], %725 {strides = array<i32>} : memref<1x1x256xf32, #tpu.memory_space<vmem>>, vector<1x1x16xf32>,
      %726 = vector.extract_strided_slice %713 {offsets = [3, 0], sizes = [1, 16], strides = [1, 1]} : vector<16x16xf32> to vector<1x16xf32>
      %c0_251 = arith.constant 0 : index
      %c0_252 = arith.constant 0 : index
      %c48_253 = arith.constant 48 : index
      %727 = vector.load %arg5[%c0_251, %c0_252, %c48_253] : memref<1x1x256xf32, #tpu.memory_space<vmem>>, vector<1x1x16xf32>
      %728 = vector.shape_cast %727 : vector<1x1x16xf32> to vector<1x16xf32>
      %729 = vector.shape_cast %726 : vector<1x16xf32> to vector<1x1x16xf32>
      tpu.vector_store %arg5[%c0_251, %c0_252, %c48_253], %729 {strides = array<i32>} : memref<1x1x256xf32, #tpu.memory_space<vmem>>, vector<1x1x16xf32>,
      %730 = vector.extract_strided_slice %713 {offsets = [4, 0], sizes = [1, 16], strides = [1, 1]} : vector<16x16xf32> to vector<1x16xf32>
      %c0_254 = arith.constant 0 : index
      %c0_255 = arith.constant 0 : index
      %c64_256 = arith.constant 64 : index
      %731 = vector.load %arg5[%c0_254, %c0_255, %c64_256] : memref<1x1x256xf32, #tpu.memory_space<vmem>>, vector<1x1x16xf32>
      %732 = vector.shape_cast %731 : vector<1x1x16xf32> to vector<1x16xf32>
      %733 = vector.shape_cast %730 : vector<1x16xf32> to vector<1x1x16xf32>
      tpu.vector_store %arg5[%c0_254, %c0_255, %c64_256], %733 {strides = array<i32>} : memref<1x1x256xf32, #tpu.memory_space<vmem>>, vector<1x1x16xf32>,
      %734 = vector.extract_strided_slice %713 {offsets = [5, 0], sizes = [1, 16], strides = [1, 1]} : vector<16x16xf32> to vector<1x16xf32>
      %c0_257 = arith.constant 0 : index
      %c0_258 = arith.constant 0 : index
      %c80_259 = arith.constant 80 : index
      %735 = vector.load %arg5[%c0_257, %c0_258, %c80_259] : memref<1x1x256xf32, #tpu.memory_space<vmem>>, vector<1x1x16xf32>
      %736 = vector.shape_cast %735 : vector<1x1x16xf32> to vector<1x16xf32>
      %737 = vector.shape_cast %734 : vector<1x16xf32> to vector<1x1x16xf32>
      tpu.vector_store %arg5[%c0_257, %c0_258, %c80_259], %737 {strides = array<i32>} : memref<1x1x256xf32, #tpu.memory_space<vmem>>, vector<1x1x16xf32>,
      %738 = vector.extract_strided_slice %713 {offsets = [6, 0], sizes = [1, 16], strides = [1, 1]} : vector<16x16xf32> to vector<1x16xf32>
      %c0_260 = arith.constant 0 : index
      %c0_261 = arith.constant 0 : index
      %c96_262 = arith.constant 96 : index
      %739 = vector.load %arg5[%c0_260, %c0_261, %c96_262] : memref<1x1x256xf32, #tpu.memory_space<vmem>>, vector<1x1x16xf32>
      %740 = vector.shape_cast %739 : vector<1x1x16xf32> to vector<1x16xf32>
      %741 = vector.shape_cast %738 : vector<1x16xf32> to vector<1x1x16xf32>
      tpu.vector_store %arg5[%c0_260, %c0_261, %c96_262], %741 {strides = array<i32>} : memref<1x1x256xf32, #tpu.memory_space<vmem>>, vector<1x1x16xf32>,
      %742 = vector.extract_strided_slice %713 {offsets = [7, 0], sizes = [1, 16], strides = [1, 1]} : vector<16x16xf32> to vector<1x16xf32>
      %c0_263 = arith.constant 0 : index
      %c0_264 = arith.constant 0 : index
      %c112_265 = arith.constant 112 : index
      %743 = vector.load %arg5[%c0_263, %c0_264, %c112_265] : memref<1x1x256xf32, #tpu.memory_space<vmem>>, vector<1x1x16xf32>
      %744 = vector.shape_cast %743 : vector<1x1x16xf32> to vector<1x16xf32>
      %745 = vector.shape_cast %742 : vector<1x16xf32> to vector<1x1x16xf32>
      tpu.vector_store %arg5[%c0_263, %c0_264, %c112_265], %745 {strides = array<i32>} : memref<1x1x256xf32, #tpu.memory_space<vmem>>, vector<1x1x16xf32>,
      %746 = vector.extract_strided_slice %713 {offsets = [8, 0], sizes = [1, 16], strides = [1, 1]} : vector<16x16xf32> to vector<1x16xf32>
      %c0_266 = arith.constant 0 : index
      %c0_267 = arith.constant 0 : index
      %c128_268 = arith.constant 128 : index
      %747 = vector.load %arg5[%c0_266, %c0_267, %c128_268] : memref<1x1x256xf32, #tpu.memory_space<vmem>>, vector<1x1x16xf32>
      %748 = vector.shape_cast %747 : vector<1x1x16xf32> to vector<1x16xf32>
      %749 = vector.shape_cast %746 : vector<1x16xf32> to vector<1x1x16xf32>
      tpu.vector_store %arg5[%c0_266, %c0_267, %c128_268], %749 {strides = array<i32>} : memref<1x1x256xf32, #tpu.memory_space<vmem>>, vector<1x1x16xf32>,
      %750 = vector.extract_strided_slice %713 {offsets = [9, 0], sizes = [1, 16], strides = [1, 1]} : vector<16x16xf32> to vector<1x16xf32>
      %c0_269 = arith.constant 0 : index
      %c0_270 = arith.constant 0 : index
      %c144_271 = arith.constant 144 : index
      %751 = vector.load %arg5[%c0_269, %c0_270, %c144_271] : memref<1x1x256xf32, #tpu.memory_space<vmem>>, vector<1x1x16xf32>
      %752 = vector.shape_cast %751 : vector<1x1x16xf32> to vector<1x16xf32>
      %753 = vector.shape_cast %750 : vector<1x16xf32> to vector<1x1x16xf32>
      tpu.vector_store %arg5[%c0_269, %c0_270, %c144_271], %753 {strides = array<i32>} : memref<1x1x256xf32, #tpu.memory_space<vmem>>, vector<1x1x16xf32>,
      %754 = vector.extract_strided_slice %713 {offsets = [10, 0], sizes = [1, 16], strides = [1, 1]} : vector<16x16xf32> to vector<1x16xf32>
      %c0_272 = arith.constant 0 : index
      %c0_273 = arith.constant 0 : index
      %c160_274 = arith.constant 160 : index
      %755 = vector.load %arg5[%c0_272, %c0_273, %c160_274] : memref<1x1x256xf32, #tpu.memory_space<vmem>>, vector<1x1x16xf32>
      %756 = vector.shape_cast %755 : vector<1x1x16xf32> to vector<1x16xf32>
      %757 = vector.shape_cast %754 : vector<1x16xf32> to vector<1x1x16xf32>
      tpu.vector_store %arg5[%c0_272, %c0_273, %c160_274], %757 {strides = array<i32>} : memref<1x1x256xf32, #tpu.memory_space<vmem>>, vector<1x1x16xf32>,
      %758 = vector.extract_strided_slice %713 {offsets = [11, 0], sizes = [1, 16], strides = [1, 1]} : vector<16x16xf32> to vector<1x16xf32>
      %c0_275 = arith.constant 0 : index
      %c0_276 = arith.constant 0 : index
      %c176_277 = arith.constant 176 : index
      %759 = vector.load %arg5[%c0_275, %c0_276, %c176_277] : memref<1x1x256xf32, #tpu.memory_space<vmem>>, vector<1x1x16xf32>
      %760 = vector.shape_cast %759 : vector<1x1x16xf32> to vector<1x16xf32>
      %761 = vector.shape_cast %758 : vector<1x16xf32> to vector<1x1x16xf32>
      tpu.vector_store %arg5[%c0_275, %c0_276, %c176_277], %761 {strides = array<i32>} : memref<1x1x256xf32, #tpu.memory_space<vmem>>, vector<1x1x16xf32>,
      %762 = vector.extract_strided_slice %713 {offsets = [12, 0], sizes = [1, 16], strides = [1, 1]} : vector<16x16xf32> to vector<1x16xf32>
      %c0_278 = arith.constant 0 : index
      %c0_279 = arith.constant 0 : index
      %c192_280 = arith.constant 192 : index
      %763 = vector.load %arg5[%c0_278, %c0_279, %c192_280] : memref<1x1x256xf32, #tpu.memory_space<vmem>>, vector<1x1x16xf32>
      %764 = vector.shape_cast %763 : vector<1x1x16xf32> to vector<1x16xf32>
      %765 = vector.shape_cast %762 : vector<1x16xf32> to vector<1x1x16xf32>
      tpu.vector_store %arg5[%c0_278, %c0_279, %c192_280], %765 {strides = array<i32>} : memref<1x1x256xf32, #tpu.memory_space<vmem>>, vector<1x1x16xf32>,
      %766 = vector.extract_strided_slice %713 {offsets = [13, 0], sizes = [1, 16], strides = [1, 1]} : vector<16x16xf32> to vector<1x16xf32>
      %c0_281 = arith.constant 0 : index
      %c0_282 = arith.constant 0 : index
      %c208_283 = arith.constant 208 : index
      %767 = vector.load %arg5[%c0_281, %c0_282, %c208_283] : memref<1x1x256xf32, #tpu.memory_space<vmem>>, vector<1x1x16xf32>
      %768 = vector.shape_cast %767 : vector<1x1x16xf32> to vector<1x16xf32>
      %769 = vector.shape_cast %766 : vector<1x16xf32> to vector<1x1x16xf32>
      tpu.vector_store %arg5[%c0_281, %c0_282, %c208_283], %769 {strides = array<i32>} : memref<1x1x256xf32, #tpu.memory_space<vmem>>, vector<1x1x16xf32>,
      %770 = vector.extract_strided_slice %713 {offsets = [14, 0], sizes = [1, 16], strides = [1, 1]} : vector<16x16xf32> to vector<1x16xf32>
      %c0_284 = arith.constant 0 : index
      %c0_285 = arith.constant 0 : index
      %c224_286 = arith.constant 224 : index
      %771 = vector.load %arg5[%c0_284, %c0_285, %c224_286] : memref<1x1x256xf32, #tpu.memory_space<vmem>>, vector<1x1x16xf32>
      %772 = vector.shape_cast %771 : vector<1x1x16xf32> to vector<1x16xf32>
      %773 = vector.shape_cast %770 : vector<1x16xf32> to vector<1x1x16xf32>
      tpu.vector_store %arg5[%c0_284, %c0_285, %c224_286], %773 {strides = array<i32>} : memref<1x1x256xf32, #tpu.memory_space<vmem>>, vector<1x1x16xf32>,
      %774 = vector.extract_strided_slice %713 {offsets = [15, 0], sizes = [1, 16], strides = [1, 1]} : vector<16x16xf32> to vector<1x16xf32>
      %c0_287 = arith.constant 0 : index
      %c0_288 = arith.constant 0 : index
      %c240_289 = arith.constant 240 : index
      %775 = vector.load %arg5[%c0_287, %c0_288, %c240_289] : memref<1x1x256xf32, #tpu.memory_space<vmem>>, vector<1x1x16xf32>
      %776 = vector.shape_cast %775 : vector<1x1x16xf32> to vector<1x16xf32>
      %777 = vector.shape_cast %774 : vector<1x16xf32> to vector<1x1x16xf32>
      tpu.vector_store %arg5[%c0_287, %c0_288, %c240_289], %777 {strides = array<i32>} : memref<1x1x256xf32, #tpu.memory_space<vmem>>, vector<1x1x16xf32>,
    } else {
    }
    return
  }
  func.func @transform_0(%arg0: i32, %arg1: i32) -> i32 {
    %c0_i32 = arith.constant 0 : i32
    %c0_i32_0 = arith.constant 0 : i32
    return %c0_i32 : i32
  }
  func.func @transform_1(%arg0: i32, %arg1: i32) -> i32 {
    %c0_i32 = arith.constant 0 : i32
    %c0_i32_0 = arith.constant 0 : i32
    return %c0_i32 : i32
  }
  func.func @transform_2(%arg0: i32, %arg1: i32) -> (i32, i32, i32) {
    %c0_i32 = arith.constant 0 : i32
    %c0_i32_0 = arith.constant 0 : i32
    return %arg0, %arg1, %c0_i32 : i32, i32, i32
  }
  func.func @transform_3(%arg0: i32, %arg1: i32) -> (i32, i32, i32) {
    %c0_i32 = arith.constant 0 : i32
    %c0_i32_0 = arith.constant 0 : i32
    %c0_i32_1 = arith.constant 0 : i32
    return %arg0, %c0_i32, %c0_i32_0 : i32, i32, i32
  }
}

</mosaic_0001>

<llo_original>
// kernel: tpu_custom_call.1
$region0: #{tpu_custom_call.1}
  #allocation0 [shape = 'u32[]', space=smem, size = 0x4, offset = 0x4, fixed_abs, tag = 'smem constant byte address 0x4 - core index']
  #allocation1 [shape = 'u32[144,128]{1,0:T(1,128)}', space=vmem, size = 0x12000, scoped, tag = 'internal scratch']
  #allocation2 [shape = 'f32[1,256]{1,0:T(1,128)}', space=vmem, size = 0x400, scoped, tag = 'scratch operand']
  #allocation3 [shape = 'f32[1,256]{1,0:T(1,128)}', space=vmem, size = 0x400, scoped, tag = 'scratch operand']
  #allocation4 [shape = 'f32[2,22,22]{2,1,0:T(8,128)}', space=vmem, size = 0x6000, scoped, tag = 'scratch operand']
  #allocation5 [shape = 'f32[1]{0:T(128)S(6)}', space=smem, size = 0x200, scoped, tag = 'scoped memory for tpu_custom_call.1']
  %s0 = inlined_call_operand.vmem [shape: f32[98], index: 0, kind: input, shape index: {}]
  %s1 = inlined_call_operand.<no memory space> [shape: f32[1], index: 1, kind: input, shape index: {}]
  %s2 = inlined_call_operand.hbm [shape: f32[2,4,256], index: 2, kind: input, shape index: {}]
  %s3 = inlined_call_operand.hbm [shape: f32[2,1,256], index: 3, kind: output, shape index: {}]
  %s4 = sld [smem:[#allocation0]]
  $region61: #{tpu_custom_call.1} parent=0
    _
  %s6 = ssub.s32 1, %s4
  %s7 = scalar_select 0, %s6, %s4
  %8 = sst [smem:[#allocation5]] %s1
  $region1: #{tpu_custom_call.1} parent=0
    #allocation6 [shape = 'u8[512]{0}', space=smem, size = 0x200, scoped, tag = 'input window, operand 0, single buffered']
    #allocation7 [shape = 's32[2]{0}', space=sflag, size = 0x8, scoped, tag = 'scoped memory for tpu_custom_call.1']
    #allocation8 [shape = 's32[2]{0}', space=sflag, size = 0x8, scoped, tag = 'scoped memory for tpu_custom_call.1']
    #allocation9 [shape = 's32[2]{0}', space=sflag, size = 0x8, scoped, tag = 'scoped memory for tpu_custom_call.1']
    #allocation10 [shape = 'u8[8192]{0}', space=vmem, size = 0x2000, scoped, tag = 'input window, operand 2']
    #allocation11 [shape = 'u8[2048]{0}', space=vmem, size = 0x800, scoped, tag = 'output window, operand 0']
    %9 = vsyncpa [#allocation9], 0
    %10 = vsyncpa [#allocation7], 0
    %s11 = scalar_lea.sflag [#allocation7], 1
    %12 = vsyncpa %s11, 0
    %13 = vsyncpa [#allocation8], 0
    %s14 = scalar_lea.sflag [#allocation8], 1
    %15 = vsyncpa %s14, 0
    loop: start=0, step=1, limit=4
    $region2: #{tpu_custom_call.1} parent=1 // loop_pre_header
      _
    $region3: #{tpu_custom_call.1} parent=1 // loop_header
      %s17 = sphi 0, %s21
      %p18 = scmp.ge.s32.totalorder %s17, 4
      %s24 = sphi 0, %s36
      %s25 = sphi 0, %s32
      %s26 = sphi 0, %s24
      %s27 = sphi 0, %s25
      %s28 = sphi 0, %s26
      %s29 = sphi 0, %s27
      %s37 = sphi 0, %s37
      %s39 = sphi 0, %s37
      %s40 = sphi 0, %s39
      %s54 = sphi 0, %s40
      %s58 = sphi 0, %s58
      %s60 = sphi 0, %s58
      %s61 = sphi 0, %s60
      %s75 = sphi 0, %s61
      %s83 = sphi 0, %s85
      %s86 = sphi 0, %s83
      %s87 = sphi 0, %s86
      %s103 = sphi 0, %s87
      %s109 = sphi 0, %s111
      %s112 = sphi 0, %s109
      %s113 = sphi 0, %s112
      %s129 = sphi 0, %s113
    $region4: #{tpu_custom_call.1} parent=1 // loop_header_branch
      %20 = sbr.rel (%p18) target = $region8
    $region5: #{tpu_custom_call.1} parent=1 // loop_body
      %s22 = ssub.s32 %s17, 1
      %s23 = ssub.s32 %s17, 2
      %s30 = sadd.s32 1, %s25
      %p31 = scmp.ge.s32.totalorder %s30, 1
      %s32 = scalar_select %p31, 0, %s30
      %s33 = sadd.s32 1, %s24
      %s34 = scalar_select %p31, %s33, %s24
      %p35 = scmp.ge.s32.totalorder %s34, 2
      %s36 = scalar_select %p35, 0, %s34
      %s38 = sadd.s32 %s37, 1
      %p41 = scmp.eq.s32.totalorder %s17, 1
      %p42 = scmp.ne.s32.totalorder %s37, %s39
      %p43 = scmp.eq.s32.totalorder %s17, 0
      %p44 = por %p42, %p43
      %p45 = scmp.ne.s32.totalorder %s37, %s39
      %p46 = scmp.eq.s32.totalorder %s22, 1
      %p47 = por %p45, %p46
      %p48 = scmp.ne.s32.totalorder %s39, %s40
      %p49 = scmp.eq.s32.totalorder %s22, 0
      %p50 = por %p48, %p49
      %p51 = scmp.ne.s32.totalorder %s39, %s40
      %p52 = scmp.eq.s32.totalorder %s23, 1
      %p53 = por %p51, %p52
      %p55 = scmp.ne.s32.totalorder %s40, %s54
      %p56 = scmp.eq.s32.totalorder %s23, 0
      %p57 = por %p55, %p56
      %s59 = sadd.s32 %s58, 1
      %p62 = scmp.eq.s32.totalorder %s17, 1
      %p63 = scmp.ne.s32.totalorder %s58, %s60
      %p64 = scmp.eq.s32.totalorder %s17, 0
      %p65 = por %p63, %p64
      %p66 = scmp.ne.s32.totalorder %s58, %s60
      %p67 = scmp.eq.s32.totalorder %s22, 1
      %p68 = por %p66, %p67
      %p69 = scmp.ne.s32.totalorder %s60, %s61
      %p70 = scmp.eq.s32.totalorder %s22, 0
      %p71 = por %p69, %p70
      %p72 = scmp.ne.s32.totalorder %s60, %s61
      %p73 = scmp.eq.s32.totalorder %s23, 1
      %p74 = por %p72, %p73
      %p76 = scmp.ne.s32.totalorder %s61, %s75
      %p77 = scmp.eq.s32.totalorder %s23, 0
      %p78 = por %p76, %p77
      %s79 = ssub.s32 %s24, %s36
      %s80 = ssub.s32 %s25, %s32
      %s81 = sor.u32 %s79, %s80
      %p82 = scmp.eq.s32.totalorder %s81, 0
      %s84 = sadd.s32 %s83, 1
      %s85 = scalar_select %p82, %s83, %s84
      %p88 = pneg %p82
      %p89 = scmp.eq.s32.totalorder %s17, 1
      %p90 = por %p88, %p89
      %p91 = scmp.ne.s32.totalorder %s83, %s86
      %p92 = scmp.eq.s32.totalorder %s17, 0
      %p93 = por %p91, %p92
      %p94 = scmp.ne.s32.totalorder %s83, %s86
      %p95 = scmp.eq.s32.totalorder %s22, 1
      %p96 = por %p94, %p95
      %p97 = scmp.ne.s32.totalorder %s86, %s87
      %p98 = scmp.eq.s32.totalorder %s22, 0
      %p99 = por %p97, %p98
      %p100 = scmp.ne.s32.totalorder %s86, %s87
      %p101 = scmp.eq.s32.totalorder %s23, 1
      %p102 = por %p100, %p101
      %p104 = scmp.ne.s32.totalorder %s87, %s103
      %p105 = scmp.eq.s32.totalorder %s23, 0
      %p106 = por %p104, %p105
      %s107 = ssub.s32 %s24, %s36
      %p108 = scmp.eq.s32.totalorder %s107, 0
      %s110 = sadd.s32 %s109, 1
      %s111 = scalar_select %p108, %s109, %s110
      %p114 = pneg %p108
      %p115 = scmp.eq.s32.totalorder %s17, 1
      %p116 = por %p114, %p115
      %p117 = scmp.ne.s32.totalorder %s109, %s112
      %p118 = scmp.eq.s32.totalorder %s17, 0
      %p119 = por %p117, %p118
      %p120 = scmp.ne.s32.totalorder %s109, %s112
      %p121 = scmp.eq.s32.totalorder %s22, 1
      %p122 = por %p120, %p121
      %p123 = scmp.ne.s32.totalorder %s112, %s113
      %p124 = scmp.eq.s32.totalorder %s22, 0
      %p125 = por %p123, %p124
      %p126 = scmp.ne.s32.totalorder %s112, %s113
      %p127 = scmp.eq.s32.totalorder %s23, 1
      %p128 = por %p126, %p127
      %p130 = scmp.ne.s32.totalorder %s113, %s129
      %p131 = scmp.eq.s32.totalorder %s23, 0
      %p132 = por %p130, %p131
      %p133 = scmp.le.s32.totalorder 1, %s17
      %p134 = scmp.lt.s32.totalorder %s17, 3
      %p135 = pnand %p133, %p134
      %p136 = pneg %p135
      // Predicated region
      $region9: #{tpu_custom_call.1} parent=5 // pred_check
        _
      $region10: #{tpu_custom_call.1} parent=5 // pred_check_branch
        %138 = sbr.rel (%p135) target = $region12
      $region11: #{tpu_custom_call.1} parent=5 // pred_region
        %s139 = ssub.s32 %s17, 1
        // Predicated region
        $region13: #{tpu_custom_call.1} parent=11 // pred_check
          %p140 = pneg %p50
        $region14: #{tpu_custom_call.1} parent=11 // pred_check_branch
          %142 = sbr.rel (%p140) target = $region16
        $region15: #{tpu_custom_call.1} parent=11 // pred_region
          %s144 = ssub.s32 16, 16
          %145 = vsyncadd [#allocation9], %s144
          %s147 = sshll.u32 %s0, 4
          %s148 = int_to_ptr.vmem [resolvable:$true] %s147
          %150 = dma.vmem_to_smem %s148, 16, [#allocation6], [#allocation9]
        $region16: #{tpu_custom_call.1} parent=11 // pred_fallthru
          _
        // Predicated region
        $region17: #{tpu_custom_call.1} parent=11 // pred_check
          %p151 = pneg %p71
        $region18: #{tpu_custom_call.1} parent=11 // pred_check_branch
          %153 = sbr.rel (%p151) target = $region20
        $region19: #{tpu_custom_call.1} parent=11 // pred_region
          _
        $region20: #{tpu_custom_call.1} parent=11 // pred_fallthru
          _
      $region12: #{tpu_custom_call.1} parent=5 // pred_fallthru
        _
      %p154 = scmp.lt.s32.totalorder %s17, 2
      // Predicated region
      $region21: #{tpu_custom_call.1} parent=5 // pred_check
        %p155 = pneg %p154
      $region22: #{tpu_custom_call.1} parent=5 // pred_check_branch
        %157 = sbr.rel (%p155) target = $region24
      $region23: #{tpu_custom_call.1} parent=5 // pred_region
        // Predicated region
        $region25: #{tpu_custom_call.1} parent=23 // pred_check
          %p158 = pneg %p93
        $region26: #{tpu_custom_call.1} parent=23 // pred_check_branch
          %160 = sbr.rel (%p158) target = $region28
        $region27: #{tpu_custom_call.1} parent=23 // pred_region
          %s161 = sand.u32 %s83, 1
          %s162 = scalar_lea.sflag [#allocation7], %s161
          %s163 = sand.u32 %s83, 1
          %s164 = smul.addr %s163, 8
          %s165 = scalar_lea.vmem [#allocation10], %s164
          %s167 = ssub.s32 128, 128
          %168 = vsyncadd %s162, %s167
          %s169 = smul.addr %s25, 2
          %s170 = smul.addr %s24, 2
          %s171 = sadd.s32 %s169, %s170
          %s172 = smul.addr %s171, 64
          %s173 = scalar_lea.hbm %s2, %s172
          %s175 = sshll.u32 %s165, 4
          %s176 = int_to_ptr.vmem [resolvable:$true] %s175
          %178 = dma.hbm_to_vmem [thread:$0]  %s173, 128, %s176, %s162
        $region28: #{tpu_custom_call.1} parent=23 // pred_fallthru
          _
      $region24: #{tpu_custom_call.1} parent=5 // pred_fallthru
        _
      %p179 = scmp.le.s32.totalorder 1, %s17
      %p180 = scmp.lt.s32.totalorder %s17, 3
      %p181 = pnand %p179, %p180
      %p182 = pneg %p181
      // Predicated region
      $region29: #{tpu_custom_call.1} parent=5 // pred_check
        _
      $region30: #{tpu_custom_call.1} parent=5 // pred_check_branch
        %184 = sbr.rel (%p181) target = $region32
      $region31: #{tpu_custom_call.1} parent=5 // pred_region
        %s185 = ssub.s32 %s17, 1
        // Predicated region
        $region33: #{tpu_custom_call.1} parent=31 // pred_check
          %p186 = pneg %p50
        $region34: #{tpu_custom_call.1} parent=31 // pred_check_branch
          %188 = sbr.rel (%p186) target = $region36
        $region35: #{tpu_custom_call.1} parent=31 // pred_region
          %189 = dma.done [#allocation9], 16
        $region36: #{tpu_custom_call.1} parent=31 // pred_fallthru
          _
        %s190 = sand.u32 %s86, 1
        %s191 = scalar_lea.sflag [#allocation7], %s190
        %s192 = sand.u32 %s86, 1
        %s193 = smul.addr %s192, 8
        %s194 = scalar_lea.vmem [#allocation10], %s193
        // Predicated region
        $region37: #{tpu_custom_call.1} parent=31 // pred_check
          %p195 = pneg %p99
        $region38: #{tpu_custom_call.1} parent=31 // pred_check_branch
          %197 = sbr.rel (%p195) target = $region40
        $region39: #{tpu_custom_call.1} parent=31 // pred_region
          %198 = dma.done %s191, 128
        $region40: #{tpu_custom_call.1} parent=31 // pred_fallthru
          _
        %199 = sfence
        %p200 = pneg %p50
        %p201 = pneg %p47
        %p202 = pneg %p71
        %p203 = pneg %p68
        %s204 = sand.u32 %s86, 1
        %s205 = scalar_lea.sflag [#allocation7], %s204
        %s206 = sand.u32 %s86, 1
        %s207 = smul.addr %s206, 8
        %s208 = scalar_lea.vmem [#allocation10], %s207
        %p209 = pneg %p99
        %p210 = pneg %p96
        %p211 = pneg %p125
        %p212 = pneg %p122
        %s213 = sand.u32 %s112, 1
        %s214 = scalar_lea.sflag [#allocation8], %s213
        %s215 = sand.u32 %s112, 1
        %s216 = smul.addr %s215, 2
        %s217 = scalar_lea.vmem [#allocation11], %s216
        %p218 = scmp.eq.s32.totalorder %s27, 0
        // Predicated region
        $region41: #{tpu_custom_call.1} parent=31 // pred_check
          %p219 = pneg %p218
        $region42: #{tpu_custom_call.1} parent=31 // pred_check_branch
          %221 = sbr.rel (%p219) target = $region44
        $region43: #{tpu_custom_call.1} parent=31 // pred_region
          %v222 = vlaneseq
          %vm223 = vcmp.ge.s32.totalorder %v222, 0
          %vm224 = vcmp.lt.s32.totalorder %v222, 256
          %vm225 = vmand %vm223, %vm224
          %226 = vst.msk [vmem:[#allocation2] sm:$0x3] %vm225, -inf
          %227 = vst.msk [vmem:[#allocation3] sm:$0x3] %vm225, 0.0
        $region44: #{tpu_custom_call.1} parent=31 // pred_fallthru
          _
        %s228 = smul.u32 0, 2
        %s229 = smul.addr %s228, 4
        %s230 = scalar_lea.vmem %s194, %s229 [#allocation10]
        %v231 = vld [vmem:[%s230] sm:$0xff]
        %v232 = vld [vmem:[#allocation2] sm:$0x3]
        %v234 = vcombine.high %v231, %v231
        %vm236 = vcmask 1043456
        %v237 = vsel %vm236, %v231, -inf
        %v238 = vrot.slane %v237, 4
        %v239 = vmax.f32 %v237, %v238
        %v240 = vrot.slane %v239, 2
        %v241 = vmax.f32 %v239, %v240
        %v242 = vrot.slane %v241, 1
        %v243 = vmax.f32 %v241, %v242
        %v244 = vsel %vm236, %v234, -inf
        %v245 = vrot.slane %v244, 4
        %v246 = vmax.f32 %v244, %v245
        %v247 = vrot.slane %v246, 2
        %v248 = vmax.f32 %v246, %v247
        %v249 = vrot.slane %v248, 1
        %v250 = vmax.f32 %v248, %v249
        %v253 = vcombine.low %v243, %v250
        %v255 = vunpack.c.l.s4 1966171168
        %v256 = vunpack.c.0.s8 %v255
        %v257 = vlaneseq
        %v258 = vshrl.u32 %v257, 7
        %v259 = vsub.s32 %v256, %v258
        %v260 = vrot.slane %v253, %v259
        %v262 = vunpack.c.l.s4 1966171168
        %v263 = vunpack.c.0.s8 %v262
        %v264 = vlaneseq
        %v265 = vshrl.u32 %v264, 7
        %v266 = vsub.s32 %v263, %v265
        %v267 = vrot.slane %v260, %v266
        %v269 = vmax.f32 %v232, %v267
        %v270 = vlaneseq
        %vm271 = vcmp.ge.s32.totalorder %v270, 0
        %vm272 = vcmp.lt.s32.totalorder %v270, 256
        %vm273 = vmand %vm271, %vm272
        %274 = vst.msk [vmem:[#allocation2] sm:$0x3] %vm273, %v269
        %v275 = vld [vmem:[#allocation3] sm:$0x3]
        %v276 = vsel %vm236, %v231, 0.0
        %v277 = vrot.slane %v276, 4
        %v278 = vadd.f32 %v276, %v277
        %v279 = vrot.slane %v278, 2
        %v280 = vadd.f32 %v278, %v279
        %v281 = vrot.slane %v280, 1
        %v282 = vadd.f32 %v280, %v281
        %v283 = vsel %vm236, %v234, 0.0
        %v284 = vrot.slane %v283, 4
        %v285 = vadd.f32 %v283, %v284
        %v286 = vrot.slane %v285, 2
        %v287 = vadd.f32 %v285, %v286
        %v288 = vrot.slane %v287, 1
        %v289 = vadd.f32 %v287, %v288
        %v292 = vcombine.low %v282, %v289
        %v294 = vunpack.c.l.s4 1966171168
        %v295 = vunpack.c.0.s8 %v294
        %v296 = vlaneseq
        %v297 = vshrl.u32 %v296, 7
        %v298 = vsub.s32 %v295, %v297
        %v299 = vrot.slane %v292, %v298
        %v301 = vunpack.c.l.s4 1966171168
        %v302 = vunpack.c.0.s8 %v301
        %v303 = vlaneseq
        %v304 = vshrl.u32 %v303, 7
        %v305 = vsub.s32 %v302, %v304
        %v306 = vrot.slane %v299, %v305
        %v308 = vadd.f32 %v275, %v306
        %309 = vst.msk [vmem:[#allocation3] sm:$0x3] %vm273, %v308
        // Predicated region
        $region45: #{tpu_custom_call.1} parent=31 // pred_check
          %p310 = pneg %p218
        $region46: #{tpu_custom_call.1} parent=31 // pred_check_branch
          %312 = sbr.rel (%p310) target = $region48
        $region47: #{tpu_custom_call.1} parent=31 // pred_region
          %vm313 = vcmask 174080
          %314 = vst.msk [vmem:[#allocation4] sm:$0x7] %vm313, 0.0
          %315 = vst.msk [vmem:[#allocation4 + $0x18] sm:$0x7] %vm313, 0.0
          %316 = vst.msk [vmem:[#allocation4 + $0x13] sm:$0x7] %vm313, 0.0
          %317 = vst.msk [vmem:[#allocation4 + $0x2b] sm:$0x7] %vm313, 0.0
          %vm318 = vcmask 23552
          %319 = vst.msk [vmem:[#allocation4] sm:$0xff] %vm318, 0.0
          %320 = vst.msk [vmem:[#allocation4 + $0x8] sm:$0xff] %vm318, 0.0
          %vm321 = vcmask 21504
          %322 = vst.msk [vmem:[#allocation4 + $0x10] sm:$0x3f] %vm321, 0.0
          %323 = vst.msk [vmem:[#allocation4 + $0x18] sm:$0xff] %vm318, 0.0
          %324 = vst.msk [vmem:[#allocation4 + $0x20] sm:$0xff] %vm318, 0.0
          %325 = vst.msk [vmem:[#allocation4 + $0x28] sm:$0x3f] %vm321, 0.0
          %vm326 = vcmask 179352
          %327 = vst.msk [vmem:[#allocation4] sm:$0xff] %vm326, 0.0
          %328 = vst.msk [vmem:[#allocation4 + $0x8] sm:$0xff] %vm326, 0.0
          %vm329 = vcmask 177304
          %330 = vst.msk [vmem:[#allocation4 + $0x10] sm:$0x3f] %vm329, 0.0
          %331 = vst.msk [vmem:[#allocation4 + $0x18] sm:$0xff] %vm326, 0.0
          %332 = vst.msk [vmem:[#allocation4 + $0x20] sm:$0xff] %vm326, 0.0
          %333 = vst.msk [vmem:[#allocation4 + $0x28] sm:$0x3f] %vm329, 0.0
          %v334 = vld [vmem:[#allocation2] sm:$0x1]
          %v336 = vlaneseq
          %v337 = vshrl.u32 %v336, 7
          %v338 = vsub.s32 0, %v337
          %v339 = vrot.slane %v334, %v338
          %340 = vrot.lane.b32.xlu0 %v339, 3
          %v341 = vpop.permute.xlu0 %340
          %vm343 = vcmask 147480
          %344 = vst.msk [vmem:[#allocation4 + $0x3] sm:$0x1] %vm343, %v341
          %v345 = vld [vmem:[#allocation3] sm:$0x1]
          %v346 = vmul.f32 %v345, 0.25
          %v348 = vlaneseq
          %v349 = vshrl.u32 %v348, 7
          %v350 = vsub.s32 0, %v349
          %v351 = vrot.slane %v346, %v350
          %352 = vrot.lane.b32.xlu0 %v351, 3
          %v353 = vpop.permute.xlu0 %352
          %s355 = scalar_lea.vmem [#allocation4], 24
          %356 = vst.msk [vmem:[%s355 + $0x3] sm:$0x1] %vm343, %v353
          %v357 = vld [vmem:[#allocation2] sm:$0x1]
          %v359 = vlaneseq
          %v360 = vshrl.u32 %v359, 7
          %v361 = vsub.s32 0, %v360
          %v362 = vrot.slane %v357, %v361
          %363 = vrot.lane.b32.xlu0 %v362, 115
          %v364 = vpop.permute.xlu0 %363
          %366 = vst.msk [vmem:[#allocation4 + $0x4] sm:$0x1] %vm343, %v364
          %v367 = vld [vmem:[#allocation3] sm:$0x1]
          %v368 = vmul.f32 %v367, 0.25
          %v370 = vlaneseq
          %v371 = vshrl.u32 %v370, 7
          %v372 = vsub.s32 0, %v371
          %v373 = vrot.slane %v368, %v372
          %374 = vrot.lane.b32.xlu0 %v373, 115
          %v375 = vpop.permute.xlu0 %374
          %377 = vst.msk [vmem:[%s355 + $0x4] sm:$0x1] %vm343, %v375
          %v378 = vld [vmem:[#allocation2] sm:$0x1]
          %v380 = vlaneseq
          %v381 = vshrl.u32 %v380, 7
          %v382 = vsub.s32 0, %v381
          %v383 = vrot.slane %v378, %v382
          %384 = vrot.lane.b32.xlu0 %v383, 99
          %v385 = vpop.permute.xlu0 %384
          %387 = vst.msk [vmem:[#allocation4 + $0x5] sm:$0x1] %vm343, %v385
          %v388 = vld [vmem:[#allocation3] sm:$0x1]
          %v389 = vmul.f32 %v388, 0.25
          %v391 = vlaneseq
          %v392 = vshrl.u32 %v391, 7
          %v393 = vsub.s32 0, %v392
          %v394 = vrot.slane %v389, %v393
          %395 = vrot.lane.b32.xlu0 %v394, 99
          %v396 = vpop.permute.xlu0 %395
          %398 = vst.msk [vmem:[%s355 + $0x5] sm:$0x1] %vm343, %v396
          %v399 = vld [vmem:[#allocation2] sm:$0x1]
          %v401 = vlaneseq
          %v402 = vshrl.u32 %v401, 7
          %v403 = vsub.s32 0, %v402
          %v404 = vrot.slane %v399, %v403
          %405 = vrot.lane.b32.xlu0 %v404, 83
          %v406 = vpop.permute.xlu0 %405
          %408 = vst.msk [vmem:[#allocation4 + $0x6] sm:$0x1] %vm343, %v406
          %v409 = vld [vmem:[#allocation3] sm:$0x1]
          %v410 = vmul.f32 %v409, 0.25
          %v412 = vlaneseq
          %v413 = vshrl.u32 %v412, 7
          %v414 = vsub.s32 0, %v413
          %v415 = vrot.slane %v410, %v414
          %416 = vrot.lane.b32.xlu0 %v415, 83
          %v417 = vpop.permute.xlu0 %416
          %419 = vst.msk [vmem:[%s355 + $0x6] sm:$0x1] %vm343, %v417
          %v420 = vld [vmem:[#allocation2] sm:$0x1]
          %v422 = vlaneseq
          %v423 = vshrl.u32 %v422, 7
          %v424 = vsub.s32 0, %v423
          %v425 = vrot.slane %v420, %v424
          %426 = vrot.lane.b32.xlu0 %v425, 67
          %v427 = vpop.permute.xlu0 %426
          %429 = vst.msk [vmem:[#allocation4 + $0x7] sm:$0x1] %vm343, %v427
          %v430 = vld [vmem:[#allocation3] sm:$0x1]
          %v431 = vmul.f32 %v430, 0.25
          %v433 = vlaneseq
          %v434 = vshrl.u32 %v433, 7
          %v435 = vsub.s32 0, %v434
          %v436 = vrot.slane %v431, %v435
          %437 = vrot.lane.b32.xlu0 %v436, 67
          %v438 = vpop.permute.xlu0 %437
          %440 = vst.msk [vmem:[%s355 + $0x7] sm:$0x1] %vm343, %v438
          %v441 = vld [vmem:[#allocation2] sm:$0x1]
          %v443 = vlaneseq
          %v444 = vshrl.u32 %v443, 7
          %v445 = vsub.s32 0, %v444
          %v446 = vrot.slane %v441, %v445
          %447 = vrot.lane.b32.xlu0 %v446, 51
          %v448 = vpop.permute.xlu0 %447
          %450 = vst.msk [vmem:[#allocation4 + $0x8] sm:$0x1] %vm343, %v448
          %v451 = vld [vmem:[#allocation3] sm:$0x1]
          %v452 = vmul.f32 %v451, 0.25
          %v454 = vlaneseq
          %v455 = vshrl.u32 %v454, 7
          %v456 = vsub.s32 0, %v455
          %v457 = vrot.slane %v452, %v456
          %458 = vrot.lane.b32.xlu0 %v457, 51
          %v459 = vpop.permute.xlu0 %458
          %461 = vst.msk [vmem:[%s355 + $0x8] sm:$0x1] %vm343, %v459
          %v462 = vld [vmem:[#allocation2] sm:$0x1]
          %v464 = vlaneseq
          %v465 = vshrl.u32 %v464, 7
          %v466 = vsub.s32 0, %v465
          %v467 = vrot.slane %v462, %v466
          %468 = vrot.lane.b32.xlu0 %v467, 35
          %v469 = vpop.permute.xlu0 %468
          %471 = vst.msk [vmem:[#allocation4 + $0x9] sm:$0x1] %vm343, %v469
          %v472 = vld [vmem:[#allocation3] sm:$0x1]
          %v473 = vmul.f32 %v472, 0.25
          %v475 = vlaneseq
          %v476 = vshrl.u32 %v475, 7
          %v477 = vsub.s32 0, %v476
          %v478 = vrot.slane %v473, %v477
          %479 = vrot.lane.b32.xlu0 %v478, 35
          %v480 = vpop.permute.xlu0 %479
          %482 = vst.msk [vmem:[%s355 + $0x9] sm:$0x1] %vm343, %v480
          %v483 = vld [vmem:[#allocation2] sm:$0x1]
          %v485 = vlaneseq
          %v486 = vshrl.u32 %v485, 7
          %v487 = vsub.s32 0, %v486
          %v488 = vrot.slane %v483, %v487
          %489 = vrot.lane.b32.xlu0 %v488, 19
          %v490 = vpop.permute.xlu0 %489
          %492 = vst.msk [vmem:[#allocation4 + $0xa] sm:$0x1] %vm343, %v490
          %v493 = vld [vmem:[#allocation3] sm:$0x1]
          %v494 = vmul.f32 %v493, 0.25
          %v496 = vlaneseq
          %v497 = vshrl.u32 %v496, 7
          %v498 = vsub.s32 0, %v497
          %v499 = vrot.slane %v494, %v498
          %500 = vrot.lane.b32.xlu0 %v499, 19
          %v501 = vpop.permute.xlu0 %500
          %503 = vst.msk [vmem:[%s355 + $0xa] sm:$0x1] %vm343, %v501
          %v504 = vld [vmem:[#allocation2 + $0x1] sm:$0x1]
          %v506 = vlaneseq
          %v507 = vshrl.u32 %v506, 7
          %v508 = vsub.s32 0, %v507
          %v509 = vrot.slane %v504, %v508
          %510 = vrot.lane.b32.xlu0 %v509, 3
          %v511 = vpop.permute.xlu0 %510
          %513 = vst.msk [vmem:[#allocation4 + $0xb] sm:$0x1] %vm343, %v511
          %v514 = vld [vmem:[#allocation3 + $0x1] sm:$0x1]
          %v515 = vmul.f32 %v514, 0.25
          %v517 = vlaneseq
          %v518 = vshrl.u32 %v517, 7
          %v519 = vsub.s32 0, %v518
          %v520 = vrot.slane %v515, %v519
          %521 = vrot.lane.b32.xlu0 %v520, 3
          %v522 = vpop.permute.xlu0 %521
          %524 = vst.msk [vmem:[%s355 + $0xb] sm:$0x1] %vm343, %v522
          %v525 = vld [vmem:[#allocation2 + $0x1] sm:$0x1]
          %v527 = vlaneseq
          %v528 = vshrl.u32 %v527, 7
          %v529 = vsub.s32 0, %v528
          %v530 = vrot.slane %v525, %v529
          %531 = vrot.lane.b32.xlu0 %v530, 115
          %v532 = vpop.permute.xlu0 %531
          %534 = vst.msk [vmem:[#allocation4 + $0xc] sm:$0x1] %vm343, %v532
          %v535 = vld [vmem:[#allocation3 + $0x1] sm:$0x1]
          %v536 = vmul.f32 %v535, 0.25
          %v538 = vlaneseq
          %v539 = vshrl.u32 %v538, 7
          %v540 = vsub.s32 0, %v539
          %v541 = vrot.slane %v536, %v540
          %542 = vrot.lane.b32.xlu0 %v541, 115
          %v543 = vpop.permute.xlu0 %542
          %545 = vst.msk [vmem:[%s355 + $0xc] sm:$0x1] %vm343, %v543
          %v546 = vld [vmem:[#allocation2 + $0x1] sm:$0x1]
          %v548 = vlaneseq
          %v549 = vshrl.u32 %v548, 7
          %v550 = vsub.s32 0, %v549
          %v551 = vrot.slane %v546, %v550
          %552 = vrot.lane.b32.xlu0 %v551, 99
          %v553 = vpop.permute.xlu0 %552
          %555 = vst.msk [vmem:[#allocation4 + $0xd] sm:$0x1] %vm343, %v553
          %v556 = vld [vmem:[#allocation3 + $0x1] sm:$0x1]
          %v557 = vmul.f32 %v556, 0.25
          %v559 = vlaneseq
          %v560 = vshrl.u32 %v559, 7
          %v561 = vsub.s32 0, %v560
          %v562 = vrot.slane %v557, %v561
          %563 = vrot.lane.b32.xlu0 %v562, 99
          %v564 = vpop.permute.xlu0 %563
          %566 = vst.msk [vmem:[%s355 + $0xd] sm:$0x1] %vm343, %v564
          %v567 = vld [vmem:[#allocation2 + $0x1] sm:$0x1]
          %v569 = vlaneseq
          %v570 = vshrl.u32 %v569, 7
          %v571 = vsub.s32 0, %v570
          %v572 = vrot.slane %v567, %v571
          %573 = vrot.lane.b32.xlu0 %v572, 83
          %v574 = vpop.permute.xlu0 %573
          %576 = vst.msk [vmem:[#allocation4 + $0xe] sm:$0x1] %vm343, %v574
          %v577 = vld [vmem:[#allocation3 + $0x1] sm:$0x1]
          %v578 = vmul.f32 %v577, 0.25
          %v580 = vlaneseq
          %v581 = vshrl.u32 %v580, 7
          %v582 = vsub.s32 0, %v581
          %v583 = vrot.slane %v578, %v582
          %584 = vrot.lane.b32.xlu0 %v583, 83
          %v585 = vpop.permute.xlu0 %584
          %587 = vst.msk [vmem:[%s355 + $0xe] sm:$0x1] %vm343, %v585
          %v588 = vld [vmem:[#allocation2 + $0x1] sm:$0x1]
          %v590 = vlaneseq
          %v591 = vshrl.u32 %v590, 7
          %v592 = vsub.s32 0, %v591
          %v593 = vrot.slane %v588, %v592
          %594 = vrot.lane.b32.xlu0 %v593, 67
          %v595 = vpop.permute.xlu0 %594
          %597 = vst.msk [vmem:[#allocation4 + $0xf] sm:$0x1] %vm343, %v595
          %v598 = vld [vmem:[#allocation3 + $0x1] sm:$0x1]
          %v599 = vmul.f32 %v598, 0.25
          %v601 = vlaneseq
          %v602 = vshrl.u32 %v601, 7
          %v603 = vsub.s32 0, %v602
          %v604 = vrot.slane %v599, %v603
          %605 = vrot.lane.b32.xlu0 %v604, 67
          %v606 = vpop.permute.xlu0 %605
          %608 = vst.msk [vmem:[%s355 + $0xf] sm:$0x1] %vm343, %v606
          %v609 = vld [vmem:[#allocation2 + $0x1] sm:$0x1]
          %v611 = vlaneseq
          %v612 = vshrl.u32 %v611, 7
          %v613 = vsub.s32 0, %v612
          %v614 = vrot.slane %v609, %v613
          %615 = vrot.lane.b32.xlu0 %v614, 51
          %v616 = vpop.permute.xlu0 %615
          %618 = vst.msk [vmem:[#allocation4 + $0x10] sm:$0x1] %vm343, %v616
          %v619 = vld [vmem:[#allocation3 + $0x1] sm:$0x1]
          %v620 = vmul.f32 %v619, 0.25
          %v622 = vlaneseq
          %v623 = vshrl.u32 %v622, 7
          %v624 = vsub.s32 0, %v623
          %v625 = vrot.slane %v620, %v624
          %626 = vrot.lane.b32.xlu0 %v625, 51
          %v627 = vpop.permute.xlu0 %626
          %629 = vst.msk [vmem:[%s355 + $0x10] sm:$0x1] %vm343, %v627
          %v630 = vld [vmem:[#allocation2 + $0x1] sm:$0x1]
          %v632 = vlaneseq
          %v633 = vshrl.u32 %v632, 7
          %v634 = vsub.s32 0, %v633
          %v635 = vrot.slane %v630, %v634
          %636 = vrot.lane.b32.xlu0 %v635, 35
          %v637 = vpop.permute.xlu0 %636
          %639 = vst.msk [vmem:[#allocation4 + $0x11] sm:$0x1] %vm343, %v637
          %v640 = vld [vmem:[#allocation3 + $0x1] sm:$0x1]
          %v641 = vmul.f32 %v640, 0.25
          %v643 = vlaneseq
          %v644 = vshrl.u32 %v643, 7
          %v645 = vsub.s32 0, %v644
          %v646 = vrot.slane %v641, %v645
          %647 = vrot.lane.b32.xlu0 %v646, 35
          %v648 = vpop.permute.xlu0 %647
          %650 = vst.msk [vmem:[%s355 + $0x11] sm:$0x1] %vm343, %v648
          %v651 = vld [vmem:[#allocation2 + $0x1] sm:$0x1]
          %v653 = vlaneseq
          %v654 = vshrl.u32 %v653, 7
          %v655 = vsub.s32 0, %v654
          %v656 = vrot.slane %v651, %v655
          %657 = vrot.lane.b32.xlu0 %v656, 19
          %v658 = vpop.permute.xlu0 %657
          %660 = vst.msk [vmem:[#allocation4 + $0x12] sm:$0x1] %vm343, %v658
          %v661 = vld [vmem:[#allocation3 + $0x1] sm:$0x1]
          %v662 = vmul.f32 %v661, 0.25
          %v664 = vlaneseq
          %v665 = vshrl.u32 %v664, 7
          %v666 = vsub.s32 0, %v665
          %v667 = vrot.slane %v662, %v666
          %668 = vrot.lane.b32.xlu0 %v667, 19
          %v669 = vpop.permute.xlu0 %668
          %671 = vst.msk [vmem:[%s355 + $0x12] sm:$0x1] %vm343, %v669
          %v672 = vld [vmem:[#allocation4] sm:$0xff]
          %v673 = vld [vmem:[#allocation4 + $0x8] sm:$0xff]
          %s674 = sld [smem:[#allocation6]]
          %v675 = vstv %s674
          %v676 = vmul.f32 %v675, %v672
          %v677 = vmul.f32 %v675, %v673
          %s678 = sld [smem:[#allocation6 + $0x1]]
          %v679 = vstv %s678
          %v680 = vmul.f32 %v679, %v672
          %v681 = vmul.f32 %v679, %v673
          %684 = vrot.lane.b32.xlu0 %v680, 127
          %v685 = vpop.permute.xlu0 %684
          %686 = vrot.lane.b32.xlu0 %v681, 127
          %v687 = vpop.permute.xlu0 %686
          %v690 = vadd.f32 %v676, %v685
          %v691 = vadd.f32 %v677, %v687
          %s692 = sld [smem:[#allocation6 + $0x2]]
          %v693 = vstv %s692
          %v694 = vmul.f32 %v693, %v672
          %v695 = vmul.f32 %v693, %v673
          %698 = vrot.lane.b32.xlu0 %v694, 126
          %v699 = vpop.permute.xlu0 %698
          %700 = vrot.lane.b32.xlu0 %v695, 126
          %v701 = vpop.permute.xlu0 %700
          %v704 = vadd.f32 %v690, %v699
          %v705 = vadd.f32 %v691, %v701
          %s706 = sld [smem:[#allocation6 + $0x3]]
          %v707 = vstv %s706
          %v708 = vmul.f32 %v707, %v672
          %v709 = vmul.f32 %v707, %v673
          %712 = vrot.lane.b32.xlu0 %v708, 125
          %v713 = vpop.permute.xlu0 %712
          %714 = vrot.lane.b32.xlu0 %v709, 125
          %v715 = vpop.permute.xlu0 %714
          %v718 = vadd.f32 %v704, %v713
          %v719 = vadd.f32 %v705, %v715
          %s720 = sld [smem:[#allocation6 + $0x4]]
          %v721 = vstv %s720
          %v722 = vmul.f32 %v721, %v672
          %v723 = vmul.f32 %v721, %v673
          %726 = vrot.lane.b32.xlu0 %v722, 124
          %v727 = vpop.permute.xlu0 %726
          %728 = vrot.lane.b32.xlu0 %v723, 124
          %v729 = vpop.permute.xlu0 %728
          %v732 = vadd.f32 %v718, %v727
          %v733 = vadd.f32 %v719, %v729
          %s734 = sld [smem:[#allocation6 + $0x5]]
          %v735 = vstv %s734
          %v736 = vmul.f32 %v735, %v672
          %v737 = vmul.f32 %v735, %v673
          %740 = vrot.lane.b32.xlu0 %v736, 123
          %v741 = vpop.permute.xlu0 %740
          %742 = vrot.lane.b32.xlu0 %v737, 123
          %v743 = vpop.permute.xlu0 %742
          %v746 = vadd.f32 %v732, %v741
          %v747 = vadd.f32 %v733, %v743
          %s748 = sld [smem:[#allocation6 + $0x6]]
          %v749 = vstv %s748
          %v750 = vmul.f32 %v749, %v672
          %v751 = vmul.f32 %v749, %v673
          %754 = vrot.lane.b32.xlu0 %v750, 122
          %v755 = vpop.permute.xlu0 %754
          %756 = vrot.lane.b32.xlu0 %v751, 122
          %v757 = vpop.permute.xlu0 %756
          %v760 = vadd.f32 %v746, %v755
          %v761 = vadd.f32 %v747, %v757
          %v762 = vld [vmem:[#allocation4 + $0x1] sm:$0xff]
          %v763 = vld [vmem:[#allocation4 + $0x9] sm:$0xff]
          %s764 = sld [smem:[#allocation6 + $0x7]]
          %v765 = vstv %s764
          %v766 = vmul.f32 %v765, %v762
          %v767 = vmul.f32 %v765, %v763
          %v768 = vadd.f32 %v760, %v766
          %v769 = vadd.f32 %v761, %v767
          %s770 = sld [smem:[#allocation6 + $0x8]]
          %v771 = vstv %s770
          %v772 = vmul.f32 %v771, %v762
          %v773 = vmul.f32 %v771, %v763
          %776 = vrot.lane.b32.xlu0 %v772, 127
          %v777 = vpop.permute.xlu0 %776
          %778 = vrot.lane.b32.xlu0 %v773, 127
          %v779 = vpop.permute.xlu0 %778
          %v782 = vadd.f32 %v768, %v777
          %v783 = vadd.f32 %v769, %v779
          %s784 = sld [smem:[#allocation6 + $0x9]]
          %v785 = vstv %s784
          %v786 = vmul.f32 %v785, %v762
          %v787 = vmul.f32 %v785, %v763
          %790 = vrot.lane.b32.xlu0 %v786, 126
          %v791 = vpop.permute.xlu0 %790
          %792 = vrot.lane.b32.xlu0 %v787, 126
          %v793 = vpop.permute.xlu0 %792
          %v796 = vadd.f32 %v782, %v791
          %v797 = vadd.f32 %v783, %v793
          %s798 = sld [smem:[#allocation6 + $0xa]]
          %v799 = vstv %s798
          %v800 = vmul.f32 %v799, %v762
          %v801 = vmul.f32 %v799, %v763
          %804 = vrot.lane.b32.xlu0 %v800, 125
          %v805 = vpop.permute.xlu0 %804
          %806 = vrot.lane.b32.xlu0 %v801, 125
          %v807 = vpop.permute.xlu0 %806
          %v810 = vadd.f32 %v796, %v805
          %v811 = vadd.f32 %v797, %v807
          %s812 = sld [smem:[#allocation6 + $0xb]]
          %v813 = vstv %s812
          %v814 = vmul.f32 %v813, %v762
          %v815 = vmul.f32 %v813, %v763
          %818 = vrot.lane.b32.xlu0 %v814, 124
          %v819 = vpop.permute.xlu0 %818
          %820 = vrot.lane.b32.xlu0 %v815, 124
          %v821 = vpop.permute.xlu0 %820
          %v824 = vadd.f32 %v810, %v819
          %v825 = vadd.f32 %v811, %v821
          %s826 = sld [smem:[#allocation6 + $0xc]]
          %v827 = vstv %s826
          %v828 = vmul.f32 %v827, %v762
          %v829 = vmul.f32 %v827, %v763
          %832 = vrot.lane.b32.xlu0 %v828, 123
          %v833 = vpop.permute.xlu0 %832
          %834 = vrot.lane.b32.xlu0 %v829, 123
          %v835 = vpop.permute.xlu0 %834
          %v838 = vadd.f32 %v824, %v833
          %v839 = vadd.f32 %v825, %v835
          %s840 = sld [smem:[#allocation6 + $0xd]]
          %v841 = vstv %s840
          %v842 = vmul.f32 %v841, %v762
          %v843 = vmul.f32 %v841, %v763
          %846 = vrot.lane.b32.xlu0 %v842, 122
          %v847 = vpop.permute.xlu0 %846
          %848 = vrot.lane.b32.xlu0 %v843, 122
          %v849 = vpop.permute.xlu0 %848
          %v852 = vadd.f32 %v838, %v847
          %v853 = vadd.f32 %v839, %v849
          %v854 = vld [vmem:[#allocation4 + $0x2] sm:$0xff]
          %v855 = vld [vmem:[#allocation4 + $0xa] sm:$0xff]
          %s856 = sld [smem:[#allocation6 + $0xe]]
          %v857 = vstv %s856
          %v858 = vmul.f32 %v857, %v854
          %v859 = vmul.f32 %v857, %v855
          %v860 = vadd.f32 %v852, %v858
          %v861 = vadd.f32 %v853, %v859
          %s862 = sld [smem:[#allocation6 + $0xf]]
          %v863 = vstv %s862
          %v864 = vmul.f32 %v863, %v854
          %v865 = vmul.f32 %v863, %v855
          %868 = vrot.lane.b32.xlu0 %v864, 127
          %v869 = vpop.permute.xlu0 %868
          %870 = vrot.lane.b32.xlu0 %v865, 127
          %v871 = vpop.permute.xlu0 %870
          %v874 = vadd.f32 %v860, %v869
          %v875 = vadd.f32 %v861, %v871
          %s876 = sld [smem:[#allocation6 + $0x10]]
          %v877 = vstv %s876
          %v878 = vmul.f32 %v877, %v854
          %v879 = vmul.f32 %v877, %v855
          %882 = vrot.lane.b32.xlu0 %v878, 126
          %v883 = vpop.permute.xlu0 %882
          %884 = vrot.lane.b32.xlu0 %v879, 126
          %v885 = vpop.permute.xlu0 %884
          %v888 = vadd.f32 %v874, %v883
          %v889 = vadd.f32 %v875, %v885
          %s890 = sld [smem:[#allocation6 + $0x11]]
          %v891 = vstv %s890
          %v892 = vmul.f32 %v891, %v854
          %v893 = vmul.f32 %v891, %v855
          %896 = vrot.lane.b32.xlu0 %v892, 125
          %v897 = vpop.permute.xlu0 %896
          %898 = vrot.lane.b32.xlu0 %v893, 125
          %v899 = vpop.permute.xlu0 %898
          %v902 = vadd.f32 %v888, %v897
          %v903 = vadd.f32 %v889, %v899
          %s904 = sld [smem:[#allocation6 + $0x12]]
          %v905 = vstv %s904
          %v906 = vmul.f32 %v905, %v854
          %v907 = vmul.f32 %v905, %v855
          %910 = vrot.lane.b32.xlu0 %v906, 124
          %v911 = vpop.permute.xlu0 %910
          %912 = vrot.lane.b32.xlu0 %v907, 124
          %v913 = vpop.permute.xlu0 %912
          %v916 = vadd.f32 %v902, %v911
          %v917 = vadd.f32 %v903, %v913
          %s918 = sld [smem:[#allocation6 + $0x13]]
          %v919 = vstv %s918
          %v920 = vmul.f32 %v919, %v854
          %v921 = vmul.f32 %v919, %v855
          %924 = vrot.lane.b32.xlu0 %v920, 123
          %v925 = vpop.permute.xlu0 %924
          %926 = vrot.lane.b32.xlu0 %v921, 123
          %v927 = vpop.permute.xlu0 %926
          %v930 = vadd.f32 %v916, %v925
          %v931 = vadd.f32 %v917, %v927
          %s932 = sld [smem:[#allocation6 + $0x14]]
          %v933 = vstv %s932
          %v934 = vmul.f32 %v933, %v854
          %v935 = vmul.f32 %v933, %v855
          %938 = vrot.lane.b32.xlu0 %v934, 122
          %v939 = vpop.permute.xlu0 %938
          %940 = vrot.lane.b32.xlu0 %v935, 122
          %v941 = vpop.permute.xlu0 %940
          %v944 = vadd.f32 %v930, %v939
          %v945 = vadd.f32 %v931, %v941
          %v946 = vld [vmem:[#allocation4 + $0x3] sm:$0xff]
          %v947 = vld [vmem:[#allocation4 + $0xb] sm:$0xff]
          %s948 = sld [smem:[#allocation6 + $0x15]]
          %v949 = vstv %s948
          %v950 = vmul.f32 %v949, %v946
          %v951 = vmul.f32 %v949, %v947
          %v952 = vadd.f32 %v944, %v950
          %v953 = vadd.f32 %v945, %v951
          %s954 = sld [smem:[#allocation6 + $0x16]]
          %v955 = vstv %s954
          %v956 = vmul.f32 %v955, %v946
          %v957 = vmul.f32 %v955, %v947
          %960 = vrot.lane.b32.xlu0 %v956, 127
          %v961 = vpop.permute.xlu0 %960
          %962 = vrot.lane.b32.xlu0 %v957, 127
          %v963 = vpop.permute.xlu0 %962
          %v966 = vadd.f32 %v952, %v961
          %v967 = vadd.f32 %v953, %v963
          %s968 = sld [smem:[#allocation6 + $0x17]]
          %v969 = vstv %s968
          %v970 = vmul.f32 %v969, %v946
          %v971 = vmul.f32 %v969, %v947
          %974 = vrot.lane.b32.xlu0 %v970, 126
          %v975 = vpop.permute.xlu0 %974
          %976 = vrot.lane.b32.xlu0 %v971, 126
          %v977 = vpop.permute.xlu0 %976
          %v980 = vadd.f32 %v966, %v975
          %v981 = vadd.f32 %v967, %v977
          %s982 = sld [smem:[#allocation6 + $0x18]]
          %v983 = vstv %s982
          %v984 = vmul.f32 %v983, %v946
          %v985 = vmul.f32 %v983, %v947
          %988 = vrot.lane.b32.xlu0 %v984, 125
          %v989 = vpop.permute.xlu0 %988
          %990 = vrot.lane.b32.xlu0 %v985, 125
          %v991 = vpop.permute.xlu0 %990
          %v994 = vadd.f32 %v980, %v989
          %v995 = vadd.f32 %v981, %v991
          %s996 = sld [smem:[#allocation6 + $0x19]]
          %v997 = vstv %s996
          %v998 = vmul.f32 %v997, %v946
          %v999 = vmul.f32 %v997, %v947
          %1002 = vrot.lane.b32.xlu0 %v998, 124
          %v1003 = vpop.permute.xlu0 %1002
          %1004 = vrot.lane.b32.xlu0 %v999, 124
          %v1005 = vpop.permute.xlu0 %1004
          %v1008 = vadd.f32 %v994, %v1003
          %v1009 = vadd.f32 %v995, %v1005
          %s1010 = sld [smem:[#allocation6 + $0x1a]]
          %v1011 = vstv %s1010
          %v1012 = vmul.f32 %v1011, %v946
          %v1013 = vmul.f32 %v1011, %v947
          %1016 = vrot.lane.b32.xlu0 %v1012, 123
          %v1017 = vpop.permute.xlu0 %1016
          %1018 = vrot.lane.b32.xlu0 %v1013, 123
          %v1019 = vpop.permute.xlu0 %1018
          %v1022 = vadd.f32 %v1008, %v1017
          %v1023 = vadd.f32 %v1009, %v1019
          %s1024 = sld [smem:[#allocation6 + $0x1b]]
          %v1025 = vstv %s1024
          %v1026 = vmul.f32 %v1025, %v946
          %v1027 = vmul.f32 %v1025, %v947
          %1030 = vrot.lane.b32.xlu0 %v1026, 122
          %v1031 = vpop.permute.xlu0 %1030
          %1032 = vrot.lane.b32.xlu0 %v1027, 122
          %v1033 = vpop.permute.xlu0 %1032
          %v1036 = vadd.f32 %v1022, %v1031
          %v1037 = vadd.f32 %v1023, %v1033
          %v1038 = vld [vmem:[#allocation4 + $0x4] sm:$0xff]
          %v1039 = vld [vmem:[#allocation4 + $0xc] sm:$0xff]
          %s1040 = sld [smem:[#allocation6 + $0x1c]]
          %v1041 = vstv %s1040
          %v1042 = vmul.f32 %v1041, %v1038
          %v1043 = vmul.f32 %v1041, %v1039
          %v1044 = vadd.f32 %v1036, %v1042
          %v1045 = vadd.f32 %v1037, %v1043
          %s1046 = sld [smem:[#allocation6 + $0x1d]]
          %v1047 = vstv %s1046
          %v1048 = vmul.f32 %v1047, %v1038
          %v1049 = vmul.f32 %v1047, %v1039
          %1052 = vrot.lane.b32.xlu0 %v1048, 127
          %v1053 = vpop.permute.xlu0 %1052
          %1054 = vrot.lane.b32.xlu0 %v1049, 127
          %v1055 = vpop.permute.xlu0 %1054
          %v1058 = vadd.f32 %v1044, %v1053
          %v1059 = vadd.f32 %v1045, %v1055
          %s1060 = sld [smem:[#allocation6 + $0x1e]]
          %v1061 = vstv %s1060
          %v1062 = vmul.f32 %v1061, %v1038
          %v1063 = vmul.f32 %v1061, %v1039
          %1066 = vrot.lane.b32.xlu0 %v1062, 126
          %v1067 = vpop.permute.xlu0 %1066
          %1068 = vrot.lane.b32.xlu0 %v1063, 126
          %v1069 = vpop.permute.xlu0 %1068
          %v1072 = vadd.f32 %v1058, %v1067
          %v1073 = vadd.f32 %v1059, %v1069
          %s1074 = sld [smem:[#allocation6 + $0x1f]]
          %v1075 = vstv %s1074
          %v1076 = vmul.f32 %v1075, %v1038
          %v1077 = vmul.f32 %v1075, %v1039
          %1080 = vrot.lane.b32.xlu0 %v1076, 125
          %v1081 = vpop.permute.xlu0 %1080
          %1082 = vrot.lane.b32.xlu0 %v1077, 125
          %v1083 = vpop.permute.xlu0 %1082
          %v1086 = vadd.f32 %v1072, %v1081
          %v1087 = vadd.f32 %v1073, %v1083
          %s1088 = sld [smem:[#allocation6 + $0x20]]
          %v1089 = vstv %s1088
          %v1090 = vmul.f32 %v1089, %v1038
          %v1091 = vmul.f32 %v1089, %v1039
          %1094 = vrot.lane.b32.xlu0 %v1090, 124
          %v1095 = vpop.permute.xlu0 %1094
          %1096 = vrot.lane.b32.xlu0 %v1091, 124
          %v1097 = vpop.permute.xlu0 %1096
          %v1100 = vadd.f32 %v1086, %v1095
          %v1101 = vadd.f32 %v1087, %v1097
          %s1102 = sld [smem:[#allocation6 + $0x21]]
          %v1103 = vstv %s1102
          %v1104 = vmul.f32 %v1103, %v1038
          %v1105 = vmul.f32 %v1103, %v1039
          %1108 = vrot.lane.b32.xlu0 %v1104, 123
          %v1109 = vpop.permute.xlu0 %1108
          %1110 = vrot.lane.b32.xlu0 %v1105, 123
          %v1111 = vpop.permute.xlu0 %1110
          %v1114 = vadd.f32 %v1100, %v1109
          %v1115 = vadd.f32 %v1101, %v1111
          %s1116 = sld [smem:[#allocation6 + $0x22]]
          %v1117 = vstv %s1116
          %v1118 = vmul.f32 %v1117, %v1038
          %v1119 = vmul.f32 %v1117, %v1039
          %1122 = vrot.lane.b32.xlu0 %v1118, 122
          %v1123 = vpop.permute.xlu0 %1122
          %1124 = vrot.lane.b32.xlu0 %v1119, 122
          %v1125 = vpop.permute.xlu0 %1124
          %v1128 = vadd.f32 %v1114, %v1123
          %v1129 = vadd.f32 %v1115, %v1125
          %v1130 = vld [vmem:[#allocation4 + $0x5] sm:$0xff]
          %v1131 = vld [vmem:[#allocation4 + $0xd] sm:$0xff]
          %s1132 = sld [smem:[#allocation6 + $0x23]]
          %v1133 = vstv %s1132
          %v1134 = vmul.f32 %v1133, %v1130
          %v1135 = vmul.f32 %v1133, %v1131
          %v1136 = vadd.f32 %v1128, %v1134
          %v1137 = vadd.f32 %v1129, %v1135
          %s1138 = sld [smem:[#allocation6 + $0x24]]
          %v1139 = vstv %s1138
          %v1140 = vmul.f32 %v1139, %v1130
          %v1141 = vmul.f32 %v1139, %v1131
          %1144 = vrot.lane.b32.xlu0 %v1140, 127
          %v1145 = vpop.permute.xlu0 %1144
          %1146 = vrot.lane.b32.xlu0 %v1141, 127
          %v1147 = vpop.permute.xlu0 %1146
          %v1150 = vadd.f32 %v1136, %v1145
          %v1151 = vadd.f32 %v1137, %v1147
          %s1152 = sld [smem:[#allocation6 + $0x25]]
          %v1153 = vstv %s1152
          %v1154 = vmul.f32 %v1153, %v1130
          %v1155 = vmul.f32 %v1153, %v1131
          %1158 = vrot.lane.b32.xlu0 %v1154, 126
          %v1159 = vpop.permute.xlu0 %1158
          %1160 = vrot.lane.b32.xlu0 %v1155, 126
          %v1161 = vpop.permute.xlu0 %1160
          %v1164 = vadd.f32 %v1150, %v1159
          %v1165 = vadd.f32 %v1151, %v1161
          %s1166 = sld [smem:[#allocation6 + $0x26]]
          %v1167 = vstv %s1166
          %v1168 = vmul.f32 %v1167, %v1130
          %v1169 = vmul.f32 %v1167, %v1131
          %1172 = vrot.lane.b32.xlu0 %v1168, 125
          %v1173 = vpop.permute.xlu0 %1172
          %1174 = vrot.lane.b32.xlu0 %v1169, 125
          %v1175 = vpop.permute.xlu0 %1174
          %v1178 = vadd.f32 %v1164, %v1173
          %v1179 = vadd.f32 %v1165, %v1175
          %s1180 = sld [smem:[#allocation6 + $0x27]]
          %v1181 = vstv %s1180
          %v1182 = vmul.f32 %v1181, %v1130
          %v1183 = vmul.f32 %v1181, %v1131
          %1186 = vrot.lane.b32.xlu0 %v1182, 124
          %v1187 = vpop.permute.xlu0 %1186
          %1188 = vrot.lane.b32.xlu0 %v1183, 124
          %v1189 = vpop.permute.xlu0 %1188
          %v1192 = vadd.f32 %v1178, %v1187
          %v1193 = vadd.f32 %v1179, %v1189
          %s1194 = sld [smem:[#allocation6 + $0x28]]
          %v1195 = vstv %s1194
          %v1196 = vmul.f32 %v1195, %v1130
          %v1197 = vmul.f32 %v1195, %v1131
          %1200 = vrot.lane.b32.xlu0 %v1196, 123
          %v1201 = vpop.permute.xlu0 %1200
          %1202 = vrot.lane.b32.xlu0 %v1197, 123
          %v1203 = vpop.permute.xlu0 %1202
          %v1206 = vadd.f32 %v1192, %v1201
          %v1207 = vadd.f32 %v1193, %v1203
          %s1208 = sld [smem:[#allocation6 + $0x29]]
          %v1209 = vstv %s1208
          %v1210 = vmul.f32 %v1209, %v1130
          %v1211 = vmul.f32 %v1209, %v1131
          %1214 = vrot.lane.b32.xlu0 %v1210, 122
          %v1215 = vpop.permute.xlu0 %1214
          %1216 = vrot.lane.b32.xlu0 %v1211, 122
          %v1217 = vpop.permute.xlu0 %1216
          %v1220 = vadd.f32 %v1206, %v1215
          %v1221 = vadd.f32 %v1207, %v1217
          %v1222 = vld [vmem:[#allocation4 + $0x6] sm:$0xff]
          %v1223 = vld [vmem:[#allocation4 + $0xe] sm:$0xff]
          %s1224 = sld [smem:[#allocation6 + $0x2a]]
          %v1225 = vstv %s1224
          %v1226 = vmul.f32 %v1225, %v1222
          %v1227 = vmul.f32 %v1225, %v1223
          %v1228 = vadd.f32 %v1220, %v1226
          %v1229 = vadd.f32 %v1221, %v1227
          %s1230 = sld [smem:[#allocation6 + $0x2b]]
          %v1231 = vstv %s1230
          %v1232 = vmul.f32 %v1231, %v1222
          %v1233 = vmul.f32 %v1231, %v1223
          %1236 = vrot.lane.b32.xlu0 %v1232, 127
          %v1237 = vpop.permute.xlu0 %1236
          %1238 = vrot.lane.b32.xlu0 %v1233, 127
          %v1239 = vpop.permute.xlu0 %1238
          %v1242 = vadd.f32 %v1228, %v1237
          %v1243 = vadd.f32 %v1229, %v1239
          %s1244 = sld [smem:[#allocation6 + $0x2c]]
          %v1245 = vstv %s1244
          %v1246 = vmul.f32 %v1245, %v1222
          %v1247 = vmul.f32 %v1245, %v1223
          %1250 = vrot.lane.b32.xlu0 %v1246, 126
          %v1251 = vpop.permute.xlu0 %1250
          %1252 = vrot.lane.b32.xlu0 %v1247, 126
          %v1253 = vpop.permute.xlu0 %1252
          %v1256 = vadd.f32 %v1242, %v1251
          %v1257 = vadd.f32 %v1243, %v1253
          %s1258 = sld [smem:[#allocation6 + $0x2d]]
          %v1259 = vstv %s1258
          %v1260 = vmul.f32 %v1259, %v1222
          %v1261 = vmul.f32 %v1259, %v1223
          %1264 = vrot.lane.b32.xlu0 %v1260, 125
          %v1265 = vpop.permute.xlu0 %1264
          %1266 = vrot.lane.b32.xlu0 %v1261, 125
          %v1267 = vpop.permute.xlu0 %1266
          %v1270 = vadd.f32 %v1256, %v1265
          %v1271 = vadd.f32 %v1257, %v1267
          %s1272 = sld [smem:[#allocation6 + $0x2e]]
          %v1273 = vstv %s1272
          %v1274 = vmul.f32 %v1273, %v1222
          %v1275 = vmul.f32 %v1273, %v1223
          %1278 = vrot.lane.b32.xlu0 %v1274, 124
          %v1279 = vpop.permute.xlu0 %1278
          %1280 = vrot.lane.b32.xlu0 %v1275, 124
          %v1281 = vpop.permute.xlu0 %1280
          %v1284 = vadd.f32 %v1270, %v1279
          %v1285 = vadd.f32 %v1271, %v1281
          %s1286 = sld [smem:[#allocation6 + $0x2f]]
          %v1287 = vstv %s1286
          %v1288 = vmul.f32 %v1287, %v1222
          %v1289 = vmul.f32 %v1287, %v1223
          %1292 = vrot.lane.b32.xlu0 %v1288, 123
          %v1293 = vpop.permute.xlu0 %1292
          %1294 = vrot.lane.b32.xlu0 %v1289, 123
          %v1295 = vpop.permute.xlu0 %1294
          %v1298 = vadd.f32 %v1284, %v1293
          %v1299 = vadd.f32 %v1285, %v1295
          %s1300 = sld [smem:[#allocation6 + $0x30]]
          %v1301 = vstv %s1300
          %v1302 = vmul.f32 %v1301, %v1222
          %v1303 = vmul.f32 %v1301, %v1223
          %1306 = vrot.lane.b32.xlu0 %v1302, 122
          %v1307 = vpop.permute.xlu0 %1306
          %1308 = vrot.lane.b32.xlu0 %v1303, 122
          %v1309 = vpop.permute.xlu0 %1308
          %v1312 = vadd.f32 %v1298, %v1307
          %v1313 = vadd.f32 %v1299, %v1309
          %v1314 = vld [vmem:[%s355] sm:$0xff]
          %v1315 = vld [vmem:[%s355 + $0x8] sm:$0xff]
          %s1316 = sld [smem:[#allocation6 + $0x31]]
          %v1317 = vstv %s1316
          %v1318 = vmul.f32 %v1317, %v1314
          %v1319 = vmul.f32 %v1317, %v1315
          %s1320 = sld [smem:[#allocation6 + $0x32]]
          %v1321 = vstv %s1320
          %v1322 = vmul.f32 %v1321, %v1314
          %v1323 = vmul.f32 %v1321, %v1315
          %1326 = vrot.lane.b32.xlu0 %v1322, 127
          %v1327 = vpop.permute.xlu0 %1326
          %1328 = vrot.lane.b32.xlu0 %v1323, 127
          %v1329 = vpop.permute.xlu0 %1328
          %v1332 = vadd.f32 %v1318, %v1327
          %v1333 = vadd.f32 %v1319, %v1329
          %s1334 = sld [smem:[#allocation6 + $0x33]]
          %v1335 = vstv %s1334
          %v1336 = vmul.f32 %v1335, %v1314
          %v1337 = vmul.f32 %v1335, %v1315
          %1340 = vrot.lane.b32.xlu0 %v1336, 126
          %v1341 = vpop.permute.xlu0 %1340
          %1342 = vrot.lane.b32.xlu0 %v1337, 126
          %v1343 = vpop.permute.xlu0 %1342
          %v1346 = vadd.f32 %v1332, %v1341
          %v1347 = vadd.f32 %v1333, %v1343
          %s1348 = sld [smem:[#allocation6 + $0x34]]
          %v1349 = vstv %s1348
          %v1350 = vmul.f32 %v1349, %v1314
          %v1351 = vmul.f32 %v1349, %v1315
          %1354 = vrot.lane.b32.xlu0 %v1350, 125
          %v1355 = vpop.permute.xlu0 %1354
          %1356 = vrot.lane.b32.xlu0 %v1351, 125
          %v1357 = vpop.permute.xlu0 %1356
          %v1360 = vadd.f32 %v1346, %v1355
          %v1361 = vadd.f32 %v1347, %v1357
          %s1362 = sld [smem:[#allocation6 + $0x35]]
          %v1363 = vstv %s1362
          %v1364 = vmul.f32 %v1363, %v1314
          %v1365 = vmul.f32 %v1363, %v1315
          %1368 = vrot.lane.b32.xlu0 %v1364, 124
          %v1369 = vpop.permute.xlu0 %1368
          %1370 = vrot.lane.b32.xlu0 %v1365, 124
          %v1371 = vpop.permute.xlu0 %1370
          %v1374 = vadd.f32 %v1360, %v1369
          %v1375 = vadd.f32 %v1361, %v1371
          %s1376 = sld [smem:[#allocation6 + $0x36]]
          %v1377 = vstv %s1376
          %v1378 = vmul.f32 %v1377, %v1314
          %v1379 = vmul.f32 %v1377, %v1315
          %1382 = vrot.lane.b32.xlu0 %v1378, 123
          %v1383 = vpop.permute.xlu0 %1382
          %1384 = vrot.lane.b32.xlu0 %v1379, 123
          %v1385 = vpop.permute.xlu0 %1384
          %v1388 = vadd.f32 %v1374, %v1383
          %v1389 = vadd.f32 %v1375, %v1385
          %s1390 = sld [smem:[#allocation6 + $0x37]]
          %v1391 = vstv %s1390
          %v1392 = vmul.f32 %v1391, %v1314
          %v1393 = vmul.f32 %v1391, %v1315
          %1396 = vrot.lane.b32.xlu0 %v1392, 122
          %v1397 = vpop.permute.xlu0 %1396
          %1398 = vrot.lane.b32.xlu0 %v1393, 122
          %v1399 = vpop.permute.xlu0 %1398
          %v1402 = vadd.f32 %v1388, %v1397
          %v1403 = vadd.f32 %v1389, %v1399
          %v1404 = vld [vmem:[%s355 + $0x1] sm:$0xff]
          %v1405 = vld [vmem:[%s355 + $0x9] sm:$0xff]
          %s1406 = sld [smem:[#allocation6 + $0x38]]
          %v1407 = vstv %s1406
          %v1408 = vmul.f32 %v1407, %v1404
          %v1409 = vmul.f32 %v1407, %v1405
          %v1410 = vadd.f32 %v1402, %v1408
          %v1411 = vadd.f32 %v1403, %v1409
          %s1412 = sld [smem:[#allocation6 + $0x39]]
          %v1413 = vstv %s1412
          %v1414 = vmul.f32 %v1413, %v1404
          %v1415 = vmul.f32 %v1413, %v1405
          %1418 = vrot.lane.b32.xlu0 %v1414, 127
          %v1419 = vpop.permute.xlu0 %1418
          %1420 = vrot.lane.b32.xlu0 %v1415, 127
          %v1421 = vpop.permute.xlu0 %1420
          %v1424 = vadd.f32 %v1410, %v1419
          %v1425 = vadd.f32 %v1411, %v1421
          %s1426 = sld [smem:[#allocation6 + $0x3a]]
          %v1427 = vstv %s1426
          %v1428 = vmul.f32 %v1427, %v1404
          %v1429 = vmul.f32 %v1427, %v1405
          %1432 = vrot.lane.b32.xlu0 %v1428, 126
          %v1433 = vpop.permute.xlu0 %1432
          %1434 = vrot.lane.b32.xlu0 %v1429, 126
          %v1435 = vpop.permute.xlu0 %1434
          %v1438 = vadd.f32 %v1424, %v1433
          %v1439 = vadd.f32 %v1425, %v1435
          %s1440 = sld [smem:[#allocation6 + $0x3b]]
          %v1441 = vstv %s1440
          %v1442 = vmul.f32 %v1441, %v1404
          %v1443 = vmul.f32 %v1441, %v1405
          %1446 = vrot.lane.b32.xlu0 %v1442, 125
          %v1447 = vpop.permute.xlu0 %1446
          %1448 = vrot.lane.b32.xlu0 %v1443, 125
          %v1449 = vpop.permute.xlu0 %1448
          %v1452 = vadd.f32 %v1438, %v1447
          %v1453 = vadd.f32 %v1439, %v1449
          %s1454 = sld [smem:[#allocation6 + $0x3c]]
          %v1455 = vstv %s1454
          %v1456 = vmul.f32 %v1455, %v1404
          %v1457 = vmul.f32 %v1455, %v1405
          %1460 = vrot.lane.b32.xlu0 %v1456, 124
          %v1461 = vpop.permute.xlu0 %1460
          %1462 = vrot.lane.b32.xlu0 %v1457, 124
          %v1463 = vpop.permute.xlu0 %1462
          %v1466 = vadd.f32 %v1452, %v1461
          %v1467 = vadd.f32 %v1453, %v1463
          %s1468 = sld [smem:[#allocation6 + $0x3d]]
          %v1469 = vstv %s1468
          %v1470 = vmul.f32 %v1469, %v1404
          %v1471 = vmul.f32 %v1469, %v1405
          %1474 = vrot.lane.b32.xlu0 %v1470, 123
          %v1475 = vpop.permute.xlu0 %1474
          %1476 = vrot.lane.b32.xlu0 %v1471, 123
          %v1477 = vpop.permute.xlu0 %1476
          %v1480 = vadd.f32 %v1466, %v1475
          %v1481 = vadd.f32 %v1467, %v1477
          %s1482 = sld [smem:[#allocation6 + $0x3e]]
          %v1483 = vstv %s1482
          %v1484 = vmul.f32 %v1483, %v1404
          %v1485 = vmul.f32 %v1483, %v1405
          %1488 = vrot.lane.b32.xlu0 %v1484, 122
          %v1489 = vpop.permute.xlu0 %1488
          %1490 = vrot.lane.b32.xlu0 %v1485, 122
          %v1491 = vpop.permute.xlu0 %1490
          %v1494 = vadd.f32 %v1480, %v1489
          %v1495 = vadd.f32 %v1481, %v1491
          %v1496 = vld [vmem:[%s355 + $0x2] sm:$0xff]
          %v1497 = vld [vmem:[%s355 + $0xa] sm:$0xff]
          %s1498 = sld [smem:[#allocation6 + $0x3f]]
          %v1499 = vstv %s1498
          %v1500 = vmul.f32 %v1499, %v1496
          %v1501 = vmul.f32 %v1499, %v1497
          %v1502 = vadd.f32 %v1494, %v1500
          %v1503 = vadd.f32 %v1495, %v1501
          %s1504 = sld [smem:[#allocation6 + $0x40]]
          %v1505 = vstv %s1504
          %v1506 = vmul.f32 %v1505, %v1496
          %v1507 = vmul.f32 %v1505, %v1497
          %1510 = vrot.lane.b32.xlu0 %v1506, 127
          %v1511 = vpop.permute.xlu0 %1510
          %1512 = vrot.lane.b32.xlu0 %v1507, 127
          %v1513 = vpop.permute.xlu0 %1512
          %v1516 = vadd.f32 %v1502, %v1511
          %v1517 = vadd.f32 %v1503, %v1513
          %s1518 = sld [smem:[#allocation6 + $0x41]]
          %v1519 = vstv %s1518
          %v1520 = vmul.f32 %v1519, %v1496
          %v1521 = vmul.f32 %v1519, %v1497
          %1524 = vrot.lane.b32.xlu0 %v1520, 126
          %v1525 = vpop.permute.xlu0 %1524
          %1526 = vrot.lane.b32.xlu0 %v1521, 126
          %v1527 = vpop.permute.xlu0 %1526
          %v1530 = vadd.f32 %v1516, %v1525
          %v1531 = vadd.f32 %v1517, %v1527
          %s1532 = sld [smem:[#allocation6 + $0x42]]
          %v1533 = vstv %s1532
          %v1534 = vmul.f32 %v1533, %v1496
          %v1535 = vmul.f32 %v1533, %v1497
          %1538 = vrot.lane.b32.xlu0 %v1534, 125
          %v1539 = vpop.permute.xlu0 %1538
          %1540 = vrot.lane.b32.xlu0 %v1535, 125
          %v1541 = vpop.permute.xlu0 %1540
          %v1544 = vadd.f32 %v1530, %v1539
          %v1545 = vadd.f32 %v1531, %v1541
          %s1546 = sld [smem:[#allocation6 + $0x43]]
          %v1547 = vstv %s1546
          %v1548 = vmul.f32 %v1547, %v1496
          %v1549 = vmul.f32 %v1547, %v1497
          %1552 = vrot.lane.b32.xlu0 %v1548, 124
          %v1553 = vpop.permute.xlu0 %1552
          %1554 = vrot.lane.b32.xlu0 %v1549, 124
          %v1555 = vpop.permute.xlu0 %1554
          %v1558 = vadd.f32 %v1544, %v1553
          %v1559 = vadd.f32 %v1545, %v1555
          %s1560 = sld [smem:[#allocation6 + $0x44]]
          %v1561 = vstv %s1560
          %v1562 = vmul.f32 %v1561, %v1496
          %v1563 = vmul.f32 %v1561, %v1497
          %1566 = vrot.lane.b32.xlu0 %v1562, 123
          %v1567 = vpop.permute.xlu0 %1566
          %1568 = vrot.lane.b32.xlu0 %v1563, 123
          %v1569 = vpop.permute.xlu0 %1568
          %v1572 = vadd.f32 %v1558, %v1567
          %v1573 = vadd.f32 %v1559, %v1569
          %s1574 = sld [smem:[#allocation6 + $0x45]]
          %v1575 = vstv %s1574
          %v1576 = vmul.f32 %v1575, %v1496
          %v1577 = vmul.f32 %v1575, %v1497
          %1580 = vrot.lane.b32.xlu0 %v1576, 122
          %v1581 = vpop.permute.xlu0 %1580
          %1582 = vrot.lane.b32.xlu0 %v1577, 122
          %v1583 = vpop.permute.xlu0 %1582
          %v1586 = vadd.f32 %v1572, %v1581
          %v1587 = vadd.f32 %v1573, %v1583
          %v1588 = vld [vmem:[%s355 + $0x3] sm:$0xff]
          %v1589 = vld [vmem:[%s355 + $0xb] sm:$0xff]
          %s1590 = sld [smem:[#allocation6 + $0x46]]
          %v1591 = vstv %s1590
          %v1592 = vmul.f32 %v1591, %v1588
          %v1593 = vmul.f32 %v1591, %v1589
          %v1594 = vadd.f32 %v1586, %v1592
          %v1595 = vadd.f32 %v1587, %v1593
          %s1596 = sld [smem:[#allocation6 + $0x47]]
          %v1597 = vstv %s1596
          %v1598 = vmul.f32 %v1597, %v1588
          %v1599 = vmul.f32 %v1597, %v1589
          %1602 = vrot.lane.b32.xlu0 %v1598, 127
          %v1603 = vpop.permute.xlu0 %1602
          %1604 = vrot.lane.b32.xlu0 %v1599, 127
          %v1605 = vpop.permute.xlu0 %1604
          %v1608 = vadd.f32 %v1594, %v1603
          %v1609 = vadd.f32 %v1595, %v1605
          %s1610 = sld [smem:[#allocation6 + $0x48]]
          %v1611 = vstv %s1610
          %v1612 = vmul.f32 %v1611, %v1588
          %v1613 = vmul.f32 %v1611, %v1589
          %1616 = vrot.lane.b32.xlu0 %v1612, 126
          %v1617 = vpop.permute.xlu0 %1616
          %1618 = vrot.lane.b32.xlu0 %v1613, 126
          %v1619 = vpop.permute.xlu0 %1618
          %v1622 = vadd.f32 %v1608, %v1617
          %v1623 = vadd.f32 %v1609, %v1619
          %s1624 = sld [smem:[#allocation6 + $0x49]]
          %v1625 = vstv %s1624
          %v1626 = vmul.f32 %v1625, %v1588
          %v1627 = vmul.f32 %v1625, %v1589
          %1630 = vrot.lane.b32.xlu0 %v1626, 125
          %v1631 = vpop.permute.xlu0 %1630
          %1632 = vrot.lane.b32.xlu0 %v1627, 125
          %v1633 = vpop.permute.xlu0 %1632
          %v1636 = vadd.f32 %v1622, %v1631
          %v1637 = vadd.f32 %v1623, %v1633
          %s1638 = sld [smem:[#allocation6 + $0x4a]]
          %v1639 = vstv %s1638
          %v1640 = vmul.f32 %v1639, %v1588
          %v1641 = vmul.f32 %v1639, %v1589
          %1644 = vrot.lane.b32.xlu0 %v1640, 124
          %v1645 = vpop.permute.xlu0 %1644
          %1646 = vrot.lane.b32.xlu0 %v1641, 124
          %v1647 = vpop.permute.xlu0 %1646
          %v1650 = vadd.f32 %v1636, %v1645
          %v1651 = vadd.f32 %v1637, %v1647
          %s1652 = sld [smem:[#allocation6 + $0x4b]]
          %v1653 = vstv %s1652
          %v1654 = vmul.f32 %v1653, %v1588
          %v1655 = vmul.f32 %v1653, %v1589
          %1658 = vrot.lane.b32.xlu0 %v1654, 123
          %v1659 = vpop.permute.xlu0 %1658
          %1660 = vrot.lane.b32.xlu0 %v1655, 123
          %v1661 = vpop.permute.xlu0 %1660
          %v1664 = vadd.f32 %v1650, %v1659
          %v1665 = vadd.f32 %v1651, %v1661
          %s1666 = sld [smem:[#allocation6 + $0x4c]]
          %v1667 = vstv %s1666
          %v1668 = vmul.f32 %v1667, %v1588
          %v1669 = vmul.f32 %v1667, %v1589
          %1672 = vrot.lane.b32.xlu0 %v1668, 122
          %v1673 = vpop.permute.xlu0 %1672
          %1674 = vrot.lane.b32.xlu0 %v1669, 122
          %v1675 = vpop.permute.xlu0 %1674
          %v1678 = vadd.f32 %v1664, %v1673
          %v1679 = vadd.f32 %v1665, %v1675
          %v1680 = vld [vmem:[%s355 + $0x4] sm:$0xff]
          %v1681 = vld [vmem:[%s355 + $0xc] sm:$0xff]
          %s1682 = sld [smem:[#allocation6 + $0x4d]]
          %v1683 = vstv %s1682
          %v1684 = vmul.f32 %v1683, %v1680
          %v1685 = vmul.f32 %v1683, %v1681
          %v1686 = vadd.f32 %v1678, %v1684
          %v1687 = vadd.f32 %v1679, %v1685
          %s1688 = sld [smem:[#allocation6 + $0x4e]]
          %v1689 = vstv %s1688
          %v1690 = vmul.f32 %v1689, %v1680
          %v1691 = vmul.f32 %v1689, %v1681
          %1694 = vrot.lane.b32.xlu0 %v1690, 127
          %v1695 = vpop.permute.xlu0 %1694
          %1696 = vrot.lane.b32.xlu0 %v1691, 127
          %v1697 = vpop.permute.xlu0 %1696
          %v1700 = vadd.f32 %v1686, %v1695
          %v1701 = vadd.f32 %v1687, %v1697
          %s1702 = sld [smem:[#allocation6 + $0x4f]]
          %v1703 = vstv %s1702
          %v1704 = vmul.f32 %v1703, %v1680
          %v1705 = vmul.f32 %v1703, %v1681
          %1708 = vrot.lane.b32.xlu0 %v1704, 126
          %v1709 = vpop.permute.xlu0 %1708
          %1710 = vrot.lane.b32.xlu0 %v1705, 126
          %v1711 = vpop.permute.xlu0 %1710
          %v1714 = vadd.f32 %v1700, %v1709
          %v1715 = vadd.f32 %v1701, %v1711
          %s1716 = sld [smem:[#allocation6 + $0x50]]
          %v1717 = vstv %s1716
          %v1718 = vmul.f32 %v1717, %v1680
          %v1719 = vmul.f32 %v1717, %v1681
          %1722 = vrot.lane.b32.xlu0 %v1718, 125
          %v1723 = vpop.permute.xlu0 %1722
          %1724 = vrot.lane.b32.xlu0 %v1719, 125
          %v1725 = vpop.permute.xlu0 %1724
          %v1728 = vadd.f32 %v1714, %v1723
          %v1729 = vadd.f32 %v1715, %v1725
          %s1730 = sld [smem:[#allocation6 + $0x51]]
          %v1731 = vstv %s1730
          %v1732 = vmul.f32 %v1731, %v1680
          %v1733 = vmul.f32 %v1731, %v1681
          %1736 = vrot.lane.b32.xlu0 %v1732, 124
          %v1737 = vpop.permute.xlu0 %1736
          %1738 = vrot.lane.b32.xlu0 %v1733, 124
          %v1739 = vpop.permute.xlu0 %1738
          %v1742 = vadd.f32 %v1728, %v1737
          %v1743 = vadd.f32 %v1729, %v1739
          %s1744 = sld [smem:[#allocation6 + $0x52]]
          %v1745 = vstv %s1744
          %v1746 = vmul.f32 %v1745, %v1680
          %v1747 = vmul.f32 %v1745, %v1681
          %1750 = vrot.lane.b32.xlu0 %v1746, 123
          %v1751 = vpop.permute.xlu0 %1750
          %1752 = vrot.lane.b32.xlu0 %v1747, 123
          %v1753 = vpop.permute.xlu0 %1752
          %v1756 = vadd.f32 %v1742, %v1751
          %v1757 = vadd.f32 %v1743, %v1753
          %s1758 = sld [smem:[#allocation6 + $0x53]]
          %v1759 = vstv %s1758
          %v1760 = vmul.f32 %v1759, %v1680
          %v1761 = vmul.f32 %v1759, %v1681
          %1764 = vrot.lane.b32.xlu0 %v1760, 122
          %v1765 = vpop.permute.xlu0 %1764
          %1766 = vrot.lane.b32.xlu0 %v1761, 122
          %v1767 = vpop.permute.xlu0 %1766
          %v1770 = vadd.f32 %v1756, %v1765
          %v1771 = vadd.f32 %v1757, %v1767
          %v1772 = vld [vmem:[%s355 + $0x5] sm:$0xff]
          %v1773 = vld [vmem:[%s355 + $0xd] sm:$0xff]
          %s1774 = sld [smem:[#allocation6 + $0x54]]
          %v1775 = vstv %s1774
          %v1776 = vmul.f32 %v1775, %v1772
          %v1777 = vmul.f32 %v1775, %v1773
          %v1778 = vadd.f32 %v1770, %v1776
          %v1779 = vadd.f32 %v1771, %v1777
          %s1780 = sld [smem:[#allocation6 + $0x55]]
          %v1781 = vstv %s1780
          %v1782 = vmul.f32 %v1781, %v1772
          %v1783 = vmul.f32 %v1781, %v1773
          %1786 = vrot.lane.b32.xlu0 %v1782, 127
          %v1787 = vpop.permute.xlu0 %1786
          %1788 = vrot.lane.b32.xlu0 %v1783, 127
          %v1789 = vpop.permute.xlu0 %1788
          %v1792 = vadd.f32 %v1778, %v1787
          %v1793 = vadd.f32 %v1779, %v1789
          %s1794 = sld [smem:[#allocation6 + $0x56]]
          %v1795 = vstv %s1794
          %v1796 = vmul.f32 %v1795, %v1772
          %v1797 = vmul.f32 %v1795, %v1773
          %1800 = vrot.lane.b32.xlu0 %v1796, 126
          %v1801 = vpop.permute.xlu0 %1800
          %1802 = vrot.lane.b32.xlu0 %v1797, 126
          %v1803 = vpop.permute.xlu0 %1802
          %v1806 = vadd.f32 %v1792, %v1801
          %v1807 = vadd.f32 %v1793, %v1803
          %s1808 = sld [smem:[#allocation6 + $0x57]]
          %v1809 = vstv %s1808
          %v1810 = vmul.f32 %v1809, %v1772
          %v1811 = vmul.f32 %v1809, %v1773
          %1814 = vrot.lane.b32.xlu0 %v1810, 125
          %v1815 = vpop.permute.xlu0 %1814
          %1816 = vrot.lane.b32.xlu0 %v1811, 125
          %v1817 = vpop.permute.xlu0 %1816
          %v1820 = vadd.f32 %v1806, %v1815
          %v1821 = vadd.f32 %v1807, %v1817
          %s1822 = sld [smem:[#allocation6 + $0x58]]
          %v1823 = vstv %s1822
          %v1824 = vmul.f32 %v1823, %v1772
          %v1825 = vmul.f32 %v1823, %v1773
          %1828 = vrot.lane.b32.xlu0 %v1824, 124
          %v1829 = vpop.permute.xlu0 %1828
          %1830 = vrot.lane.b32.xlu0 %v1825, 124
          %v1831 = vpop.permute.xlu0 %1830
          %v1834 = vadd.f32 %v1820, %v1829
          %v1835 = vadd.f32 %v1821, %v1831
          %s1836 = sld [smem:[#allocation6 + $0x59]]
          %v1837 = vstv %s1836
          %v1838 = vmul.f32 %v1837, %v1772
          %v1839 = vmul.f32 %v1837, %v1773
          %1842 = vrot.lane.b32.xlu0 %v1838, 123
          %v1843 = vpop.permute.xlu0 %1842
          %1844 = vrot.lane.b32.xlu0 %v1839, 123
          %v1845 = vpop.permute.xlu0 %1844
          %v1848 = vadd.f32 %v1834, %v1843
          %v1849 = vadd.f32 %v1835, %v1845
          %s1850 = sld [smem:[#allocation6 + $0x5a]]
          %v1851 = vstv %s1850
          %v1852 = vmul.f32 %v1851, %v1772
          %v1853 = vmul.f32 %v1851, %v1773
          %1856 = vrot.lane.b32.xlu0 %v1852, 122
          %v1857 = vpop.permute.xlu0 %1856
          %1858 = vrot.lane.b32.xlu0 %v1853, 122
          %v1859 = vpop.permute.xlu0 %1858
          %v1862 = vadd.f32 %v1848, %v1857
          %v1863 = vadd.f32 %v1849, %v1859
          %v1864 = vld [vmem:[%s355 + $0x6] sm:$0xff]
          %v1865 = vld [vmem:[%s355 + $0xe] sm:$0xff]
          %s1866 = sld [smem:[#allocation6 + $0x5b]]
          %v1867 = vstv %s1866
          %v1868 = vmul.f32 %v1867, %v1864
          %v1869 = vmul.f32 %v1867, %v1865
          %v1870 = vadd.f32 %v1862, %v1868
          %v1871 = vadd.f32 %v1863, %v1869
          %s1872 = sld [smem:[#allocation6 + $0x5c]]
          %v1873 = vstv %s1872
          %v1874 = vmul.f32 %v1873, %v1864
          %v1875 = vmul.f32 %v1873, %v1865
          %1878 = vrot.lane.b32.xlu0 %v1874, 127
          %v1879 = vpop.permute.xlu0 %1878
          %1880 = vrot.lane.b32.xlu0 %v1875, 127
          %v1881 = vpop.permute.xlu0 %1880
          %v1884 = vadd.f32 %v1870, %v1879
          %v1885 = vadd.f32 %v1871, %v1881
          %s1886 = sld [smem:[#allocation6 + $0x5d]]
          %v1887 = vstv %s1886
          %v1888 = vmul.f32 %v1887, %v1864
          %v1889 = vmul.f32 %v1887, %v1865
          %1892 = vrot.lane.b32.xlu0 %v1888, 126
          %v1893 = vpop.permute.xlu0 %1892
          %1894 = vrot.lane.b32.xlu0 %v1889, 126
          %v1895 = vpop.permute.xlu0 %1894
          %v1898 = vadd.f32 %v1884, %v1893
          %v1899 = vadd.f32 %v1885, %v1895
          %s1900 = sld [smem:[#allocation6 + $0x5e]]
          %v1901 = vstv %s1900
          %v1902 = vmul.f32 %v1901, %v1864
          %v1903 = vmul.f32 %v1901, %v1865
          %1906 = vrot.lane.b32.xlu0 %v1902, 125
          %v1907 = vpop.permute.xlu0 %1906
          %1908 = vrot.lane.b32.xlu0 %v1903, 125
          %v1909 = vpop.permute.xlu0 %1908
          %v1912 = vadd.f32 %v1898, %v1907
          %v1913 = vadd.f32 %v1899, %v1909
          %s1914 = sld [smem:[#allocation6 + $0x5f]]
          %v1915 = vstv %s1914
          %v1916 = vmul.f32 %v1915, %v1864
          %v1917 = vmul.f32 %v1915, %v1865
          %1920 = vrot.lane.b32.xlu0 %v1916, 124
          %v1921 = vpop.permute.xlu0 %1920
          %1922 = vrot.lane.b32.xlu0 %v1917, 124
          %v1923 = vpop.permute.xlu0 %1922
          %v1926 = vadd.f32 %v1912, %v1921
          %v1927 = vadd.f32 %v1913, %v1923
          %s1928 = sld [smem:[#allocation6 + $0x60]]
          %v1929 = vstv %s1928
          %v1930 = vmul.f32 %v1929, %v1864
          %v1931 = vmul.f32 %v1929, %v1865
          %1934 = vrot.lane.b32.xlu0 %v1930, 123
          %v1935 = vpop.permute.xlu0 %1934
          %1936 = vrot.lane.b32.xlu0 %v1931, 123
          %v1937 = vpop.permute.xlu0 %1936
          %v1940 = vadd.f32 %v1926, %v1935
          %v1941 = vadd.f32 %v1927, %v1937
          %s1942 = sld [smem:[#allocation6 + $0x61]]
          %v1943 = vstv %s1942
          %v1944 = vmul.f32 %v1943, %v1864
          %v1945 = vmul.f32 %v1943, %v1865
          %1948 = vrot.lane.b32.xlu0 %v1944, 122
          %v1949 = vpop.permute.xlu0 %1948
          %1950 = vrot.lane.b32.xlu0 %v1945, 122
          %v1951 = vpop.permute.xlu0 %1950
          %v1954 = vadd.f32 %v1940, %v1949
          %v1955 = vadd.f32 %v1941, %v1951
          %v1956 = vadd.f32 %v1312, %v1954
          %v1957 = vadd.f32 %v1313, %v1955
          %s1958 = sld [smem:[#allocation5]]
          %v1959 = vstv %s1958
          %v1960 = vadd.f32 %v1956, %v1959
          %v1961 = vadd.f32 %v1957, %v1959
          %v1962 = vxor.u32 %v1960, 2147483648
          %v1963 = vxor.u32 %v1961, 2147483648
          %v1964 = vmul.f32 %v1962, 1.442695
          %v1965 = vpow.pop %v1964
          %v1966 = vmul.f32 %v1963, 1.442695
          %v1967 = vpow.pop %v1966
          %v1968 = vadd.f32 %v1965, 1.0
          %v1969 = vadd.f32 %v1967, 1.0
          %v1970 = vrcp.pop %v1968
          %v1971 = vmul.f32 1.0, %v1970
          %v1972 = vrcp.pop %v1969
          %v1973 = vmul.f32 1.0, %v1972
          %vm1974 = vcmp.lt.s32.totalorder %v270, 16
          %vm1975 = vmand %vm271, %vm1974
          %1976 = vst.msk [vmem:[%s217] sm:$0x1] %vm1975, %v1971
          %v1979 = vunpack.c.l.s4 1966171168
          %v1980 = vunpack.c.0.s8 %v1979
          %v1981 = vlaneseq
          %v1982 = vshrl.u32 %v1981, 7
          %v1983 = vsub.s32 %v1980, %v1982
          %v1984 = vrot.slane %v1971, %v1983
          %v1985 = vcombine.high %v1984, %v1984
          %v1987 = vunpack.c.l.s4 1966171168
          %v1988 = vunpack.c.0.s8 %v1987
          %v1989 = vlaneseq
          %v1990 = vshrl.u32 %v1989, 7
          %v1991 = vsub.s32 %v1988, %v1990
          %v1992 = vrot.slane %v1984, %v1991
          %v1994 = vunpack.c.l.s4 1966171168
          %v1995 = vunpack.c.0.s8 %v1994
          %v1996 = vlaneseq
          %v1997 = vshrl.u32 %v1996, 7
          %v1998 = vsub.s32 %v1995, %v1997
          %v1999 = vrot.slane %v1985, %v1998
          %2000 = vrot.lane.b32.xlu0 %v1999, 16
          %v2001 = vpop.permute.xlu0 %2000
          %vm2003 = vcmp.ge.s32.totalorder %v270, 16
          %vm2004 = vcmp.lt.s32.totalorder %v270, 32
          %vm2005 = vmand %vm2003, %vm2004
          %2006 = vst.msk [vmem:[%s217] sm:$0x1] %vm2005, %v2001
          %v2007 = vcombine.high %v1992, %v1992
          %2008 = vrot.lane.b32.xlu0 %v2007, 32
          %v2009 = vpop.permute.xlu0 %2008
          %vm2011 = vcmp.ge.s32.totalorder %v270, 32
          %vm2012 = vcmp.lt.s32.totalorder %v270, 48
          %vm2013 = vmand %vm2011, %vm2012
          %2014 = vst.msk [vmem:[%s217] sm:$0x1] %vm2013, %v2009
          %v2015 = vcombine.high %v1999, %v1999
          %2016 = vrot.lane.b32.xlu0 %v2015, 48
          %v2017 = vpop.permute.xlu0 %2016
          %vm2019 = vcmp.ge.s32.totalorder %v270, 48
          %vm2020 = vcmp.lt.s32.totalorder %v270, 64
          %vm2021 = vmand %vm2019, %vm2020
          %2022 = vst.msk [vmem:[%s217] sm:$0x1] %vm2021, %v2017
          %v2023 = vcombine.high %v1971, %v1971
          %v2025 = vunpack.c.l.s4 1966171168
          %v2026 = vunpack.c.0.s8 %v2025
          %v2027 = vlaneseq
          %v2028 = vshrl.u32 %v2027, 7
          %v2029 = vsub.s32 %v2026, %v2028
          %v2030 = vrot.slane %v2023, %v2029
          %v2032 = vunpack.c.l.s4 1966171168
          %v2033 = vunpack.c.0.s8 %v2032
          %v2034 = vlaneseq
          %v2035 = vshrl.u32 %v2034, 7
          %v2036 = vsub.s32 %v2033, %v2035
          %v2037 = vrot.slane %v2030, %v2036
          %2038 = vrot.lane.b32.xlu0 %v2037, 64
          %v2039 = vpop.permute.xlu0 %2038
          %vm2041 = vcmp.ge.s32.totalorder %v270, 64
          %vm2042 = vcmp.lt.s32.totalorder %v270, 80
          %vm2043 = vmand %vm2041, %vm2042
          %2044 = vst.msk [vmem:[%s217] sm:$0x1] %vm2043, %v2039
          %v2045 = vcombine.high %v2030, %v2030
          %v2047 = vunpack.c.l.s4 1966171168
          %v2048 = vunpack.c.0.s8 %v2047
          %v2049 = vlaneseq
          %v2050 = vshrl.u32 %v2049, 7
          %v2051 = vsub.s32 %v2048, %v2050
          %v2052 = vrot.slane %v2045, %v2051
          %2053 = vrot.lane.b32.xlu0 %v2052, 80
          %v2054 = vpop.permute.xlu0 %2053
          %vm2056 = vcmp.ge.s32.totalorder %v270, 80
          %vm2057 = vcmp.lt.s32.totalorder %v270, 96
          %vm2058 = vmand %vm2056, %vm2057
          %2059 = vst.msk [vmem:[%s217] sm:$0x1] %vm2058, %v2054
          %v2060 = vcombine.high %v2037, %v2037
          %2061 = vrot.lane.b32.xlu0 %v2060, 96
          %v2062 = vpop.permute.xlu0 %2061
          %vm2064 = vcmp.ge.s32.totalorder %v270, 96
          %vm2065 = vcmp.lt.s32.totalorder %v270, 112
          %vm2066 = vmand %vm2064, %vm2065
          %2067 = vst.msk [vmem:[%s217] sm:$0x1] %vm2066, %v2062
          %v2068 = vcombine.high %v2052, %v2052
          %2069 = vrot.lane.b32.xlu0 %v2068, 112
          %v2070 = vpop.permute.xlu0 %2069
          %vm2072 = vcmp.ge.s32.totalorder %v270, 112
          %vm2073 = vcmp.lt.s32.totalorder %v270, 128
          %vm2074 = vmand %vm2072, %vm2073
          %2075 = vst.msk [vmem:[%s217] sm:$0x1] %vm2074, %v2070
          %2076 = vst.msk [vmem:[%s217 + $0x1] sm:$0x1] %vm1975, %v1973
          %v2079 = vunpack.c.l.s4 1966171168
          %v2080 = vunpack.c.0.s8 %v2079
          %v2081 = vlaneseq
          %v2082 = vshrl.u32 %v2081, 7
          %v2083 = vsub.s32 %v2080, %v2082
          %v2084 = vrot.slane %v1973, %v2083
          %v2085 = vcombine.high %v2084, %v2084
          %v2087 = vunpack.c.l.s4 1966171168
          %v2088 = vunpack.c.0.s8 %v2087
          %v2089 = vlaneseq
          %v2090 = vshrl.u32 %v2089, 7
          %v2091 = vsub.s32 %v2088, %v2090
          %v2092 = vrot.slane %v2084, %v2091
          %v2094 = vunpack.c.l.s4 1966171168
          %v2095 = vunpack.c.0.s8 %v2094
          %v2096 = vlaneseq
          %v2097 = vshrl.u32 %v2096, 7
          %v2098 = vsub.s32 %v2095, %v2097
          %v2099 = vrot.slane %v2085, %v2098
          %2100 = vrot.lane.b32.xlu0 %v2099, 16
          %v2101 = vpop.permute.xlu0 %2100
          %2103 = vst.msk [vmem:[%s217 + $0x1] sm:$0x1] %vm2005, %v2101
          %v2104 = vcombine.high %v2092, %v2092
          %2105 = vrot.lane.b32.xlu0 %v2104, 32
          %v2106 = vpop.permute.xlu0 %2105
          %2108 = vst.msk [vmem:[%s217 + $0x1] sm:$0x1] %vm2013, %v2106
          %v2109 = vcombine.high %v2099, %v2099
          %2110 = vrot.lane.b32.xlu0 %v2109, 48
          %v2111 = vpop.permute.xlu0 %2110
          %2113 = vst.msk [vmem:[%s217 + $0x1] sm:$0x1] %vm2021, %v2111
          %v2114 = vcombine.high %v1973, %v1973
          %v2116 = vunpack.c.l.s4 1966171168
          %v2117 = vunpack.c.0.s8 %v2116
          %v2118 = vlaneseq
          %v2119 = vshrl.u32 %v2118, 7
          %v2120 = vsub.s32 %v2117, %v2119
          %v2121 = vrot.slane %v2114, %v2120
          %v2123 = vunpack.c.l.s4 1966171168
          %v2124 = vunpack.c.0.s8 %v2123
          %v2125 = vlaneseq
          %v2126 = vshrl.u32 %v2125, 7
          %v2127 = vsub.s32 %v2124, %v2126
          %v2128 = vrot.slane %v2121, %v2127
          %2129 = vrot.lane.b32.xlu0 %v2128, 64
          %v2130 = vpop.permute.xlu0 %2129
          %2132 = vst.msk [vmem:[%s217 + $0x1] sm:$0x1] %vm2043, %v2130
          %v2133 = vcombine.high %v2121, %v2121
          %v2135 = vunpack.c.l.s4 1966171168
          %v2136 = vunpack.c.0.s8 %v2135
          %v2137 = vlaneseq
          %v2138 = vshrl.u32 %v2137, 7
          %v2139 = vsub.s32 %v2136, %v2138
          %v2140 = vrot.slane %v2133, %v2139
          %2141 = vrot.lane.b32.xlu0 %v2140, 80
          %v2142 = vpop.permute.xlu0 %2141
          %2144 = vst.msk [vmem:[%s217 + $0x1] sm:$0x1] %vm2058, %v2142
          %v2145 = vcombine.high %v2128, %v2128
          %2146 = vrot.lane.b32.xlu0 %v2145, 96
          %v2147 = vpop.permute.xlu0 %2146
          %2149 = vst.msk [vmem:[%s217 + $0x1] sm:$0x1] %vm2066, %v2147
          %v2150 = vcombine.high %v2140, %v2140
          %2151 = vrot.lane.b32.xlu0 %v2150, 112
          %v2152 = vpop.permute.xlu0 %2151
          %2154 = vst.msk [vmem:[%s217 + $0x1] sm:$0x1] %vm2074, %v2152
        $region48: #{tpu_custom_call.1} parent=31 // pred_fallthru
          _
        %s2155 = sand.u32 %s112, 1
        %s2156 = scalar_lea.sflag [#allocation8], %s2155
        %s2157 = sand.u32 %s112, 1
        %s2158 = smul.addr %s2157, 2
        %s2159 = scalar_lea.vmem [#allocation11], %s2158
        // Predicated region
        $region49: #{tpu_custom_call.1} parent=31 // pred_check
          %p2160 = pneg %p122
        $region50: #{tpu_custom_call.1} parent=31 // pred_check_branch
          %2162 = sbr.rel (%p2160) target = $region52
        $region51: #{tpu_custom_call.1} parent=31 // pred_region
          %s2164 = ssub.s32 32, 32
          %2165 = vsyncadd %s2156, %s2164
          %s2166 = smul.addr %s26, 2
          %s2167 = smul.addr %s2166, 16
          %s2168 = scalar_lea.hbm %s3, %s2167
          %s2170 = sshll.u32 %s2159, 4
          %s2171 = int_to_ptr.vmem [resolvable:$true] %s2170
          %2173 = dma.vmem_to_hbm [thread:$0]  %s2171, 32, %s2168, %s2156
        $region52: #{tpu_custom_call.1} parent=31 // pred_fallthru
          _
      $region32: #{tpu_custom_call.1} parent=5 // pred_fallthru
        _
      %p2174 = scmp.le.s32.totalorder 2, %s17
      // Predicated region
      $region53: #{tpu_custom_call.1} parent=5 // pred_check
        %p2175 = pneg %p2174
      $region54: #{tpu_custom_call.1} parent=5 // pred_check_branch
        %2177 = sbr.rel (%p2175) target = $region56
      $region55: #{tpu_custom_call.1} parent=5 // pred_region
        %s2178 = ssub.s32 %s17, 2
        // Predicated region
        $region57: #{tpu_custom_call.1} parent=55 // pred_check
          %p2179 = pneg %p128
        $region58: #{tpu_custom_call.1} parent=55 // pred_check_branch
          %2181 = sbr.rel (%p2179) target = $region60
        $region59: #{tpu_custom_call.1} parent=55 // pred_region
          %s2182 = sand.u32 %s113, 1
          %s2183 = scalar_lea.sflag [#allocation8], %s2182
          %s2184 = sand.u32 %s113, 1
          %s2185 = smul.addr %s2184, 2
          %s2186 = scalar_lea.vmem [#allocation11], %s2185
          %2187 = dma.done %s2183, 32
        $region60: #{tpu_custom_call.1} parent=55 // pred_fallthru
          _
      $region56: #{tpu_custom_call.1} parent=5 // pred_fallthru
        _
    $region6: #{tpu_custom_call.1} parent=1 // loop_footer
      %s21 = sadd.s32 1, %s17
    $region7: #{tpu_custom_call.1} parent=1 // loop_footer_branch
      %16 = sbr.rel target = $region3
    $region8: #{tpu_custom_call.1} parent=1 // loop_exit
      _
    %2188 = vsyncpa [#allocation7], 1
    %s2189 = scalar_lea.sflag [#allocation7], 1
    %2190 = vsyncpa %s2189, 1
    %2191 = vsyncpa [#allocation8], 1
    %s2192 = scalar_lea.sflag [#allocation8], 1
    %2193 = vsyncpa %s2192, 1
    %2194 = vsyncpa [#allocation9], 1
    %s2195 = scalar_lea.sflag [#allocation9], 1
    %2196 = vsyncpa %s2195, 1

</llo_original>
